<compile_context>
chip_gen: v6e
topology: v6e:2x2x1
jax: 0.10.0
libtpu: 0.0.40
codegen_flags: <defaults>
</compile_context>

<pallas_src>
import math
import numpy as np
import jax
import jax.numpy as jnp
from jax import lax
from jax.experimental import pallas as pl
from jax.experimental.pallas import tpu as pltpu

# ---------------- config (small, consistent with the module) ----------------
PATCH_SIZE = 16
IN_CHANNEL = 1          # EEG signal fed as [B, T, 1]
EMBED_DIM = 32
NUM_HEADS = 4
MLP_RATIO = 4
NUM_TOKEN = 8           # patches per clip
CLIP_NUM = 2
LENGTH = 2
MASK_RATIO = 0.5
ENCODER_DEPTH = 2
BATCH = 2
FF_DIM = EMBED_DIM * MLP_RATIO
HEAD_DIM = EMBED_DIM // NUM_HEADS
EPS = 1e-5
T_TOTAL = CLIP_NUM * LENGTH * NUM_TOKEN * PATCH_SIZE  # 512
SQRT_D = math.sqrt(EMBED_DIM)
ATTN_SCALE = 1.0 / math.sqrt(HEAD_DIM)
NEG_INF = -1e30


# ---------------- in-kernel helpers ----------------
def _ln(x, g, b):
    mean = jnp.mean(x, axis=-1, keepdims=True)
    var = jnp.mean(jnp.square(x - mean), axis=-1, keepdims=True)
    return (x - mean) * lax.rsqrt(var + EPS) * g + b


# ---------------- single fused Pallas kernel ----------------
def _sleep_mae_fused_kernel(
        hist_ref, umask_ref, tokadd_ref, bias_ref, kmask_ref, dsel_ref,
        wpe_ref, bpe_ref,
        wq_ref, bq_ref, wk_ref, bk_ref, wv_ref, bv_ref, wo_ref, bo_ref,
        ln1g_ref, ln1b_ref, wff1_ref, bff1_ref, wff2_ref, bff2_ref,
        ln2g_ref, ln2b_ref, encg_ref, encb_ref,
        dw1_ref, db1_ref, dw2_ref, db2_ref,
        hid_ref, rec_ref):
    f32 = jnp.float32

    # ---- patch embedding: Conv2d((ps,1),(ps,1)) == per-patch matmul ----
    # sqrt(D) encoder-input scale is folded into wpe/bpe/tokadd host-side.
    # Mask-token slots drop the patch embedding (umask=0) and pick up
    # (mask_token + pos) from tokadd instead; unmasked slots were pre-gathered.
    emb = jnp.dot(hist_ref[...], wpe_ref[...], preferred_element_type=f32) + bpe_ref[...]
    x = emb * umask_ref[...] + tokadd_ref[...]                          # (M, D)

    bias = bias_ref[...]      # (M, H*M)  head-tiled block-diagonal attention mask (0 / -1e30)
    kmask = kmask_ref[...]    # (H*M, D)  0/1 head-block selector (also the denom selector)

    # ---- transformer encoder (post-norm, ReLU FFN); weights stay VMEM-resident ----
    for l in range(ENCODER_DEPTH):
        # heads packed along the lane axis (no per-head loop, no 8-lane slices).
        q = jnp.dot(x, wq_ref[l], preferred_element_type=f32) + bq_ref[l]   # 1/sqrt(hd) folded in
        k = jnp.dot(x, wk_ref[l], preferred_element_type=f32) + bk_ref[l]
        v = jnp.dot(x, wv_ref[l], preferred_element_type=f32) + bv_ref[l]

        k_bd = jnp.concatenate([k] * NUM_HEADS, axis=0) * kmask            # (H*M, D)
        v_bd = jnp.concatenate([v] * NUM_HEADS, axis=0) * kmask            # (H*M, D)

        # s[:, h*M:(h+1)*M] == q_h @ k_h^T  (block-diagonal K makes one matmul do all heads)
        s = lax.dot_general(q, k_bd, (((1,), (1,)), ((), ())),
                            preferred_element_type=f32)                    # (M, H*M)
        s = s + bias
        # shared per-row shift across heads: softmax is invariant to it per head block
        s = s - jnp.max(s, axis=-1, keepdims=True)
        p = jnp.exp(s)
        num = jnp.dot(p, v_bd, preferred_element_type=f32)                 # (M, D) concat head outs
        den = jnp.dot(p, kmask, preferred_element_type=f32)                # (M, D) per-head denom
        o = num * pl.reciprocal(den, approx=True)
        attn = jnp.dot(o, wo_ref[l], preferred_element_type=f32) + bo_ref[l]

        x = _ln(x + attn, ln1g_ref[l], ln1b_ref[l])
        ff = jnp.maximum(jnp.dot(x, wff1_ref[l], preferred_element_type=f32) + bff1_ref[l], 0.0)
        ff = jnp.dot(ff, wff2_ref[l], preferred_element_type=f32) + bff2_ref[l]
        x = _ln(x + ff, ln2g_ref[l], ln2b_ref[l])

    # ---- final encoder LayerNorm ----
    h_all = _ln(x, encg_ref[...], encb_ref[...])                            # (M, D)
    hid_ref[...] = h_all.astype(hid_ref.dtype)

    # ---- decoder MLP on masked-token rows (constant row-selection matmul) ----
    hm = jnp.dot(dsel_ref[...], h_all, preferred_element_type=f32)          # (BN*n_m, D)
    dh = jnp.maximum(jnp.dot(hm, dw1_ref[...], preferred_element_type=f32) + db1_ref[...], 0.0)
    rec = jnp.dot(dh, dw2_ref[...], preferred_element_type=f32) + db2_ref[...]   # (BN*n_m, ps)
    rec_ref[...] = rec.astype(rec_ref.dtype)


# ---------------- host-side constant operands (static index lists only) ----------------
def build_static_operands(n_clips, n_masked):
    P, D, H, hd = NUM_TOKEN, EMBED_DIM, NUM_HEADS, HEAD_DIM
    M = n_clips * P
    Pu = P - n_masked

    base = np.full((M, M), NEG_INF, np.float32)       # block-diagonal per clip
    for b in range(n_clips):
        base[b * P:(b + 1) * P, b * P:(b + 1) * P] = 0.0
    bias_all = np.tile(base, (1, H))                  # (M, H*M) head-tiled

    kmask = np.zeros((H * M, D), np.float32)          # head-block 0/1 selector
    for h in range(H):
        kmask[h * M:(h + 1) * M, h * hd:(h + 1) * hd] = 1.0

    dsel = np.zeros((n_clips * n_masked, M), np.float32)   # masked-row selector for decoder
    for b in range(n_clips):
        for i in range(n_masked):
            dsel[b * n_masked + i, b * P + Pu + i] = 1.0

    return jnp.asarray(bias_all), jnp.asarray(kmask), jnp.asarray(dsel)


# ---------------- parameter init (deterministic, synthetic) ----------------
def init_params(key):
    ks = iter(jax.random.split(key, 40))
    f32 = jnp.float32

    def w(shape, scale=0.02):
        return (jax.random.normal(next(ks), shape) * scale).astype(f32)

    L, D, FF = ENCODER_DEPTH, EMBED_DIM, FF_DIM
    return {
        # patch embedding conv -> matmul weight [patch_size*in_channel, D]
        'w_pe': w((IN_CHANNEL * PATCH_SIZE, D)),
        'b_pe': jnp.zeros((1, D), f32),
        # positional encoding: uniform(-0.02, 0.02)
        'pos_emb': jax.random.uniform(next(ks), (NUM_TOKEN, D),
                                      minval=-0.02, maxval=0.02).astype(f32),
        # mask token: trunc_normal_(std=0.02) approximated with normal*0.02
        'mask_token': w((1, D)),
        'enc_norm_g': jnp.ones((1, D), f32),
        'enc_norm_b': jnp.zeros((1, D), f32),
        # decoder MLP: Linear(D, D//2) -> ReLU -> Linear(D//2, patch_size)
        'dec_w1': w((D, D // 2)),
        'dec_b1': jnp.zeros((1, D // 2), f32),
        'dec_w2': w((D // 2, PATCH_SIZE)),
        'dec_b2': jnp.zeros((1, PATCH_SIZE), f32),
        # encoder layers stacked along a leading depth axis (indexed in-kernel)
        'w_q': w((L, D, D)), 'b_q': jnp.zeros((L, 1, D), f32),
        'w_k': w((L, D, D)), 'b_k': jnp.zeros((L, 1, D), f32),
        'w_v': w((L, D, D)), 'b_v': jnp.zeros((L, 1, D), f32),
        'w_out': w((L, D, D)), 'b_out': jnp.zeros((L, 1, D), f32),
        'ln1_g': jnp.ones((L, 1, D), f32), 'ln1_b': jnp.zeros((L, 1, D), f32),
        'w_ff1': w((L, D, FF)), 'b_ff1': jnp.zeros((L, 1, FF), f32),
        'w_ff2': w((L, FF, D)), 'b_ff2': jnp.zeros((L, 1, D), f32),
        'ln2_g': jnp.ones((L, 1, D), f32), 'ln2_b': jnp.zeros((L, 1, D), f32),
    }


# ---------------- forward (pre-train mode) ----------------
def sleep_mae_forward(history_data, params, unmasked_idx, masked_idx):
    """history_data: [B, T, 1] with T = clip_num * length * num_token * patch_size."""
    B = history_data.shape[0]
    BN = B * CLIP_NUM * LENGTH
    P, D, PS = NUM_TOKEN, EMBED_DIM, PATCH_SIZE
    M = BN * P
    Pu, n_m = len(unmasked_idx), len(masked_idx)
    order = list(unmasked_idx) + list(masked_idx)

    # unsqueeze/permute/view + non-overlapping unfold -> [BN, P, patch_size]
    hist = history_data.reshape(BN, P, PS).astype(jnp.float32)
    # fold the unmasked-token gather into the input:  gat @ (hist @ Wpe) == (gat @ hist) @ Wpe
    hist_perm = hist[:, jnp.asarray(order), :].reshape(M, PS)

    # precomputed additive token tensor (pos[order] + mask_token on masked slots), sqrt(D) folded
    mflag = (jnp.arange(P) >= Pu).astype(jnp.float32)[:, None]                 # (P, 1)
    tok_add = (params['pos_emb'][jnp.asarray(order)]
               + mflag * params['mask_token']) * SQRT_D                        # (P, D)
    tok_add = jnp.tile(tok_add, (BN, 1))                                       # (M, D)
    umask = jnp.tile(1.0 - mflag, (BN, 1))                                     # (M, 1)

    bias_all, kmask, dsel = build_static_operands(BN, n_m)

    out_shape = (
        jax.ShapeDtypeStruct((M, D), jnp.float32),          # hidden states (permuted slot order)
        jax.ShapeDtypeStruct((BN * n_m, PS), jnp.float32),  # reconstructed masked patches
    )
    vmem = pl.BlockSpec(memory_space=pltpu.MemorySpace.VMEM)

    hid, rec = pl.pallas_call(
        _sleep_mae_fused_kernel,
        out_shape=out_shape,
        in_specs=[vmem] * 30,          # whole arrays VMEM-resident, single invocation (no grid)
        out_specs=(vmem, vmem),
    )(hist_perm, umask, tok_add, bias_all, kmask, dsel,
      params['w_pe'] * SQRT_D, params['b_pe'] * SQRT_D,
      params['w_q'] * ATTN_SCALE, params['b_q'] * ATTN_SCALE,
      params['w_k'], params['b_k'], params['w_v'], params['b_v'],
      params['w_out'], params['b_out'], params['ln1_g'], params['ln1_b'],
      params['w_ff1'], params['b_ff1'], params['w_ff2'], params['b_ff2'],
      params['ln2_g'], params['ln2_b'],
      params['enc_norm_g'], params['enc_norm_b'],
      params['dec_w1'], params['dec_b1'], params['dec_w2'], params['dec_b2'])

    hidden_states = hid.reshape(BN, 1, P, D)                # [B*, N=1, P, D] (unmasked-then-masked order, as in the PyTorch encoder_input)
    rec_tokens = rec.reshape(BN, n_m * PS, 1)               # [B*, Pm*ps, N=1]

    # ground-truth masked tokens (pure static gather from the input; stays in JAX)
    label_tokens = hist[:, jnp.asarray(masked_idx), :].reshape(BN, n_m * PS, 1)
    return rec_tokens, label_tokens, hidden_states


# ---------------- pure-JAX reference (for correctness check) ----------------
def sleep_mae_reference(history_data, params, unmasked_idx, masked_idx):
    B = history_data.shape[0]
    BN = B * CLIP_NUM * LENGTH
    P, D, PS = NUM_TOKEN, EMBED_DIM, PATCH_SIZE
    Pu, n_m = len(unmasked_idx), len(masked_idx)

    hist = history_data.reshape(BN, P, PS).astype(jnp.float32)
    emb = jnp.einsum('bps,sd->bpd', hist, params['w_pe']) + params['b_pe']
    tok_u = emb[:, jnp.asarray(unmasked_idx), :] + params['pos_emb'][jnp.asarray(unmasked_idx)]
    tok_m = jnp.broadcast_to(params['mask_token'] + params['pos_emb'][jnp.asarray(masked_idx)],
                             (BN, n_m, D))
    x = jnp.concatenate([tok_u, tok_m], axis=1) * SQRT_D

    def ln(y, g, b):
        mu = y.mean(-1, keepdims=True)
        var = ((y - mu) ** 2).mean(-1, keepdims=True)
        return (y - mu) / jnp.sqrt(var + EPS) * g + b

    for l in range(ENCODER_DEPTH):
        q = x @ params['w_q'][l] + params['b_q'][l]
        k = x @ params['w_k'][l] + params['b_k'][l]
        v = x @ params['w_v'][l] + params['b_v'][l]
        qh = q.reshape(BN, P, NUM_HEADS, HEAD_DIM)
        kh = k.reshape(BN, P, NUM_HEADS, HEAD_DIM)
        vh = v.reshape(BN, P, NUM_HEADS, HEAD_DIM)
        s = jnp.einsum('bqhd,bkhd->bhqk', qh, kh) * ATTN_SCALE
        pattn = jax.nn.softmax(s, axis=-1)
        oh = jnp.einsum('bhqk,bkhd->bqhd', pattn, vh).reshape(BN, P, D)
        attn = oh @ params['w_out'][l] + params['b_out'][l]
        x = ln(x + attn, params['ln1_g'][l], params['ln1_b'][l])
        ff = jax.nn.relu(x @ params['w_ff1'][l] + params['b_ff1'][l]) @ params['w_ff2'][l] \
            + params['b_ff2'][l]
        x = ln(x + ff, params['ln2_g'][l], params['ln2_b'][l])

    h = ln(x, params['enc_norm_g'], params['enc_norm_b'])
    rec = jax.nn.relu(h[:, Pu:, :] @ params['dec_w1'] + params['dec_b1']) @ params['dec_w2'] \
        + params['dec_b2']
    rec_tokens = rec.reshape(BN, n_m * PS, 1)
    label_tokens = hist[:, jnp.asarray(masked_idx), :].reshape(BN, n_m * PS, 1)
    hidden_states = h.reshape(BN, 1, P, D)
    return rec_tokens, label_tokens, hidden_states


if __name__ == "__main__":
    root = jax.random.PRNGKey(0)
    k_in, k_par, k_mask = jax.random.split(root, 3)

    params = init_params(k_par)

    # deterministic MaskGenerator equivalent (sorted masked / unmasked index lists)
    perm = jax.random.permutation(k_mask, NUM_TOKEN)
    mask_len = int(NUM_TOKEN * MASK_RATIO)
    masked_idx = sorted(int(i) for i in perm[:mask_len])
    unmasked_idx = sorted(int(i) for i in perm[mask_len:])

    history_data = jax.random.normal(k_in, (BATCH, T_TOTAL, 1), dtype=jnp.float32)

    fwd = jax.jit(lambda h: sleep_mae_forward(h, params, unmasked_idx, masked_idx))
    rec_tokens, label_tokens, hidden_states = fwd(history_data)
    jax.block_until_ready((rec_tokens, label_tokens, hidden_states))

    BN = BATCH * CLIP_NUM * LENGTH
    assert rec_tokens.shape == (BN, mask_len * PATCH_SIZE, 1)
    assert label_tokens.shape == (BN, mask_len * PATCH_SIZE, 1)
    assert hidden_states.shape == (BN, 1, NUM_TOKEN, EMBED_DIM)
    assert bool(jnp.all(jnp.isfinite(rec_tokens))) and bool(jnp.all(jnp.isfinite(hidden_states)))

    # correctness vs. pure-JAX reference (tolerance covers pl.reciprocal(approx=True))
    rec_r, lab_r, hid_r = sleep_mae_reference(history_data, params, unmasked_idx, masked_idx)
    np.testing.assert_allclose(np.asarray(label_tokens), np.asarray(lab_r), rtol=1e-6, atol=1e-6)
    np.testing.assert_allclose(np.asarray(hidden_states), np.asarray(hid_r), rtol=5e-3, atol=5e-3)
    np.testing.assert_allclose(np.asarray(rec_tokens), np.asarray(rec_r), rtol=5e-3, atol=5e-3)

    print("KERNEL_OK")
</pallas_src>

<mosaic_0001>
module attributes {stable_mosaic.version = 11 : i64} {
  func.func @_sleep_mae_fused_kernel(%arg0: memref<64x16xf32, #tpu.memory_space<vmem>>, %arg1: memref<64x1xf32, #tpu.memory_space<vmem>>, %arg2: memref<64x32xf32, #tpu.memory_space<vmem>>, %arg3: memref<64x256xf32, #tpu.memory_space<vmem>>, %arg4: memref<256x32xf32, #tpu.memory_space<vmem>>, %arg5: memref<32x64xf32, #tpu.memory_space<vmem>>, %arg6: memref<16x32xf32, #tpu.memory_space<vmem>>, %arg7: memref<1x32xf32, #tpu.memory_space<vmem>>, %arg8: memref<2x32x32xf32, #tpu.memory_space<vmem>>, %arg9: memref<2x1x32xf32, #tpu.memory_space<vmem>>, %arg10: memref<2x32x32xf32, #tpu.memory_space<vmem>>, %arg11: memref<2x1x32xf32, #tpu.memory_space<vmem>>, %arg12: memref<2x32x32xf32, #tpu.memory_space<vmem>>, %arg13: memref<2x1x32xf32, #tpu.memory_space<vmem>>, %arg14: memref<2x32x32xf32, #tpu.memory_space<vmem>>, %arg15: memref<2x1x32xf32, #tpu.memory_space<vmem>>, %arg16: memref<2x1x32xf32, #tpu.memory_space<vmem>>, %arg17: memref<2x1x32xf32, #tpu.memory_space<vmem>>, %arg18: memref<2x32x128xf32, #tpu.memory_space<vmem>>, %arg19: memref<2x1x128xf32, #tpu.memory_space<vmem>>, %arg20: memref<2x128x32xf32, #tpu.memory_space<vmem>>, %arg21: memref<2x1x32xf32, #tpu.memory_space<vmem>>, %arg22: memref<2x1x32xf32, #tpu.memory_space<vmem>>, %arg23: memref<2x1x32xf32, #tpu.memory_space<vmem>>, %arg24: memref<1x32xf32, #tpu.memory_space<vmem>>, %arg25: memref<1x32xf32, #tpu.memory_space<vmem>>, %arg26: memref<32x16xf32, #tpu.memory_space<vmem>>, %arg27: memref<1x16xf32, #tpu.memory_space<vmem>>, %arg28: memref<16x16xf32, #tpu.memory_space<vmem>>, %arg29: memref<1x16xf32, #tpu.memory_space<vmem>>, %arg30: memref<64x32xf32, #tpu.memory_space<vmem>>, %arg31: memref<32x16xf32, #tpu.memory_space<vmem>>) attributes {dimension_semantics = [], scalar_prefetch = 0 : i64, scratch_operands = 0 : i64, tpu.core_type = #tpu.core_type<tc>} {
    %c0 = arith.constant 0 : index
    %c0_0 = arith.constant 0 : index
    %0 = vector.load %arg0[%c0, %c0_0] : memref<64x16xf32, #tpu.memory_space<vmem>>, vector<64x16xf32>
    %c0_1 = arith.constant 0 : index
    %c0_2 = arith.constant 0 : index
    %1 = vector.load %arg6[%c0_1, %c0_2] : memref<16x32xf32, #tpu.memory_space<vmem>>, vector<16x32xf32>
    %cst = arith.constant dense<0.000000e+00> : vector<64x32xf32>
    %2 = tpu.matmul %0, %1, %cst {dimension_numbers = #tpu.dot_dimension_numbers<[1], [0], [0], [1], [0, 0, 1, 1], [], []>} : vector<64x16xf32>, vector<16x32xf32>, vector<64x32xf32> -> vector<64x32xf32>
    %c0_3 = arith.constant 0 : index
    %c0_4 = arith.constant 0 : index
    %3 = vector.load %arg7[%c0_3, %c0_4] : memref<1x32xf32, #tpu.memory_space<vmem>>, vector<1x32xf32>
    %4 = vector.broadcast %3 : vector<1x32xf32> to vector<64x32xf32>
    %5 = arith.addf %2, %4 : vector<64x32xf32>
    %c0_5 = arith.constant 0 : index
    %c0_6 = arith.constant 0 : index
    %6 = vector.load %arg1[%c0_5, %c0_6] : memref<64x1xf32, #tpu.memory_space<vmem>>, vector<64x1xf32>
    %7 = vector.broadcast %6 : vector<64x1xf32> to vector<64x32xf32>
    %8 = arith.mulf %5, %7 : vector<64x32xf32>
    %c0_7 = arith.constant 0 : index
    %c0_8 = arith.constant 0 : index
    %9 = vector.load %arg2[%c0_7, %c0_8] : memref<64x32xf32, #tpu.memory_space<vmem>>, vector<64x32xf32>
    %10 = arith.addf %8, %9 : vector<64x32xf32>
    %c0_9 = arith.constant 0 : index
    %c0_10 = arith.constant 0 : index
    %11 = vector.load %arg3[%c0_9, %c0_10] : memref<64x256xf32, #tpu.memory_space<vmem>>, vector<64x256xf32>
    %c0_11 = arith.constant 0 : index
    %c0_12 = arith.constant 0 : index
    %12 = vector.load %arg4[%c0_11, %c0_12] : memref<256x32xf32, #tpu.memory_space<vmem>>, vector<256x32xf32>
    %c0_13 = arith.constant 0 : index
    %c0_14 = arith.constant 0 : index
    %c0_15 = arith.constant 0 : index
    %13 = vector.load %arg8[%c0_13, %c0_14, %c0_15] : memref<2x32x32xf32, #tpu.memory_space<vmem>>, vector<1x32x32xf32>
    %14 = vector.shape_cast %13 : vector<1x32x32xf32> to vector<32x32xf32>
    %cst_16 = arith.constant dense<0.000000e+00> : vector<64x32xf32>
    %15 = tpu.matmul %10, %14, %cst_16 {dimension_numbers = #tpu.dot_dimension_numbers<[1], [0], [0], [1], [0, 0, 1, 1], [], []>} : vector<64x32xf32>, vector<32x32xf32>, vector<64x32xf32> -> vector<64x32xf32>
    %c0_17 = arith.constant 0 : index
    %c0_18 = arith.constant 0 : index
    %c0_19 = arith.constant 0 : index
    %16 = vector.load %arg9[%c0_17, %c0_18, %c0_19] : memref<2x1x32xf32, #tpu.memory_space<vmem>>, vector<1x1x32xf32>
    %17 = vector.shape_cast %16 : vector<1x1x32xf32> to vector<1x32xf32>
    %18 = vector.broadcast %17 : vector<1x32xf32> to vector<64x32xf32>
    %19 = arith.addf %15, %18 : vector<64x32xf32>
    %c0_20 = arith.constant 0 : index
    %c0_21 = arith.constant 0 : index
    %c0_22 = arith.constant 0 : index
    %20 = vector.load %arg10[%c0_20, %c0_21, %c0_22] : memref<2x32x32xf32, #tpu.memory_space<vmem>>, vector<1x32x32xf32>
    %21 = vector.shape_cast %20 : vector<1x32x32xf32> to vector<32x32xf32>
    %cst_23 = arith.constant dense<0.000000e+00> : vector<64x32xf32>
    %22 = tpu.matmul %10, %21, %cst_23 {dimension_numbers = #tpu.dot_dimension_numbers<[1], [0], [0], [1], [0, 0, 1, 1], [], []>} : vector<64x32xf32>, vector<32x32xf32>, vector<64x32xf32> -> vector<64x32xf32>
    %c0_24 = arith.constant 0 : index
    %c0_25 = arith.constant 0 : index
    %c0_26 = arith.constant 0 : index
    %23 = vector.load %arg11[%c0_24, %c0_25, %c0_26] : memref<2x1x32xf32, #tpu.memory_space<vmem>>, vector<1x1x32xf32>
    %24 = vector.shape_cast %23 : vector<1x1x32xf32> to vector<1x32xf32>
    %25 = vector.broadcast %24 : vector<1x32xf32> to vector<64x32xf32>
    %26 = arith.addf %22, %25 : vector<64x32xf32>
    %c0_27 = arith.constant 0 : index
    %c0_28 = arith.constant 0 : index
    %c0_29 = arith.constant 0 : index
    %27 = vector.load %arg12[%c0_27, %c0_28, %c0_29] : memref<2x32x32xf32, #tpu.memory_space<vmem>>, vector<1x32x32xf32>
    %28 = vector.shape_cast %27 : vector<1x32x32xf32> to vector<32x32xf32>
    %cst_30 = arith.constant dense<0.000000e+00> : vector<64x32xf32>
    %29 = tpu.matmul %10, %28, %cst_30 {dimension_numbers = #tpu.dot_dimension_numbers<[1], [0], [0], [1], [0, 0, 1, 1], [], []>} : vector<64x32xf32>, vector<32x32xf32>, vector<64x32xf32> -> vector<64x32xf32>
    %c0_31 = arith.constant 0 : index
    %c0_32 = arith.constant 0 : index
    %c0_33 = arith.constant 0 : index
    %30 = vector.load %arg13[%c0_31, %c0_32, %c0_33] : memref<2x1x32xf32, #tpu.memory_space<vmem>>, vector<1x1x32xf32>
    %31 = vector.shape_cast %30 : vector<1x1x32xf32> to vector<1x32xf32>
    %32 = vector.broadcast %31 : vector<1x32xf32> to vector<64x32xf32>
    %33 = arith.addf %29, %32 : vector<64x32xf32>
    %34 = tpu.concatenate %26, %26, %26, %26 in 0 : vector<64x32xf32>, vector<64x32xf32>, vector<64x32xf32>, vector<64x32xf32> -> vector<256x32xf32>
    %35 = arith.mulf %34, %12 : vector<256x32xf32>
    %36 = tpu.concatenate %33, %33, %33, %33 in 0 : vector<64x32xf32>, vector<64x32xf32>, vector<64x32xf32>, vector<64x32xf32> -> vector<256x32xf32>
    %37 = arith.mulf %36, %12 : vector<256x32xf32>
    %cst_34 = arith.constant dense<0.000000e+00> : vector<64x256xf32>
    %38 = tpu.matmul %19, %35, %cst_34 {dimension_numbers = #tpu.dot_dimension_numbers<[1], [1], [0], [0], [0, 0, 1, 0], [], []>} : vector<64x32xf32>, vector<256x32xf32>, vector<64x256xf32> -> vector<64x256xf32>
    %39 = arith.addf %38, %11 : vector<64x256xf32>
    %cst_35 = arith.constant dense<0xFF800000> : vector<64xf32>
    %40 = vector.multi_reduction <maximumf>, %39, %cst_35 [1] : vector<64x256xf32> to vector<64xf32>
    %41 = vector.shape_cast %40 : vector<64xf32> to vector<64x1xf32>
    %42 = vector.broadcast %41 : vector<64x1xf32> to vector<64x256xf32>
    %43 = arith.subf %39, %42 : vector<64x256xf32>
    %44 = math.exp %43 : vector<64x256xf32>
    %cst_36 = arith.constant dense<0.000000e+00> : vector<64x32xf32>
    %45 = tpu.matmul %44, %37, %cst_36 {dimension_numbers = #tpu.dot_dimension_numbers<[1], [0], [0], [1], [0, 0, 1, 1], [], []>} : vector<64x256xf32>, vector<256x32xf32>, vector<64x32xf32> -> vector<64x32xf32>
    %cst_37 = arith.constant dense<0.000000e+00> : vector<64x32xf32>
    %46 = tpu.matmul %44, %12, %cst_37 {dimension_numbers = #tpu.dot_dimension_numbers<[1], [0], [0], [1], [0, 0, 1, 1], [], []>} : vector<64x256xf32>, vector<256x32xf32>, vector<64x32xf32> -> vector<64x32xf32>
    %47 = tpu.reciprocal %46 {approx = true} : vector<64x32xf32> -> vector<64x32xf32>
    %48 = arith.mulf %45, %47 : vector<64x32xf32>
    %c0_38 = arith.constant 0 : index
    %c0_39 = arith.constant 0 : index
    %c0_40 = arith.constant 0 : index
    %49 = vector.load %arg14[%c0_38, %c0_39, %c0_40] : memref<2x32x32xf32, #tpu.memory_space<vmem>>, vector<1x32x32xf32>
    %50 = vector.shape_cast %49 : vector<1x32x32xf32> to vector<32x32xf32>
    %cst_41 = arith.constant dense<0.000000e+00> : vector<64x32xf32>
    %51 = tpu.matmul %48, %50, %cst_41 {dimension_numbers = #tpu.dot_dimension_numbers<[1], [0], [0], [1], [0, 0, 1, 1], [], []>} : vector<64x32xf32>, vector<32x32xf32>, vector<64x32xf32> -> vector<64x32xf32>
    %c0_42 = arith.constant 0 : index
    %c0_43 = arith.constant 0 : index
    %c0_44 = arith.constant 0 : index
    %52 = vector.load %arg15[%c0_42, %c0_43, %c0_44] : memref<2x1x32xf32, #tpu.memory_space<vmem>>, vector<1x1x32xf32>
    %53 = vector.shape_cast %52 : vector<1x1x32xf32> to vector<1x32xf32>
    %54 = vector.broadcast %53 : vector<1x32xf32> to vector<64x32xf32>
    %55 = arith.addf %51, %54 : vector<64x32xf32>
    %56 = arith.addf %10, %55 : vector<64x32xf32>
    %c0_45 = arith.constant 0 : index
    %c0_46 = arith.constant 0 : index
    %c0_47 = arith.constant 0 : index
    %57 = vector.load %arg16[%c0_45, %c0_46, %c0_47] : memref<2x1x32xf32, #tpu.memory_space<vmem>>, vector<1x1x32xf32>
    %58 = vector.shape_cast %57 : vector<1x1x32xf32> to vector<1x32xf32>
    %c0_48 = arith.constant 0 : index
    %c0_49 = arith.constant 0 : index
    %c0_50 = arith.constant 0 : index
    %59 = vector.load %arg17[%c0_48, %c0_49, %c0_50] : memref<2x1x32xf32, #tpu.memory_space<vmem>>, vector<1x1x32xf32>
    %60 = vector.shape_cast %59 : vector<1x1x32xf32> to vector<1x32xf32>
    %cst_51 = arith.constant dense<0.000000e+00> : vector<64xf32>
    %61 = vector.multi_reduction <add>, %56, %cst_51 [1] : vector<64x32xf32> to vector<64xf32>
    %62 = vector.shape_cast %61 : vector<64xf32> to vector<64x1xf32>
    %cst_52 = arith.constant 3.200000e+01 : f32
    %63 = vector.broadcast %cst_52 : f32 to vector<64x1xf32>
    %64 = arith.divf %62, %63 : vector<64x1xf32>
    %65 = vector.broadcast %64 : vector<64x1xf32> to vector<64x32xf32>
    %66 = arith.subf %56, %65 : vector<64x32xf32>
    %67 = arith.mulf %66, %66 : vector<64x32xf32>
    %cst_53 = arith.constant dense<0.000000e+00> : vector<64xf32>
    %68 = vector.multi_reduction <add>, %67, %cst_53 [1] : vector<64x32xf32> to vector<64xf32>
    %69 = vector.shape_cast %68 : vector<64xf32> to vector<64x1xf32>
    %cst_54 = arith.constant 3.200000e+01 : f32
    %70 = vector.broadcast %cst_54 : f32 to vector<64x1xf32>
    %71 = arith.divf %69, %70 : vector<64x1xf32>
    %72 = vector.broadcast %64 : vector<64x1xf32> to vector<64x32xf32>
    %73 = arith.subf %56, %72 : vector<64x32xf32>
    %cst_55 = arith.constant 9.99999974E-6 : f32
    %74 = vector.broadcast %cst_55 : f32 to vector<64x1xf32>
    %75 = arith.addf %71, %74 : vector<64x1xf32>
    %76 = math.rsqrt %75 : vector<64x1xf32>
    %77 = vector.broadcast %76 : vector<64x1xf32> to vector<64x32xf32>
    %78 = arith.mulf %73, %77 : vector<64x32xf32>
    %79 = vector.broadcast %58 : vector<1x32xf32> to vector<64x32xf32>
    %80 = arith.mulf %78, %79 : vector<64x32xf32>
    %81 = vector.broadcast %60 : vector<1x32xf32> to vector<64x32xf32>
    %82 = arith.addf %80, %81 : vector<64x32xf32>
    %c0_56 = arith.constant 0 : index
    %c0_57 = arith.constant 0 : index
    %c0_58 = arith.constant 0 : index
    %83 = vector.load %arg18[%c0_56, %c0_57, %c0_58] : memref<2x32x128xf32, #tpu.memory_space<vmem>>, vector<1x32x128xf32>
    %84 = vector.shape_cast %83 : vector<1x32x128xf32> to vector<32x128xf32>
    %cst_59 = arith.constant dense<0.000000e+00> : vector<64x128xf32>
    %85 = tpu.matmul %82, %84, %cst_59 {dimension_numbers = #tpu.dot_dimension_numbers<[1], [0], [0], [1], [0, 0, 1, 1], [], []>} : vector<64x32xf32>, vector<32x128xf32>, vector<64x128xf32> -> vector<64x128xf32>
    %c0_60 = arith.constant 0 : index
    %c0_61 = arith.constant 0 : index
    %c0_62 = arith.constant 0 : index
    %86 = vector.load %arg19[%c0_60, %c0_61, %c0_62] : memref<2x1x128xf32, #tpu.memory_space<vmem>>, vector<1x1x128xf32>
    %87 = vector.shape_cast %86 : vector<1x1x128xf32> to vector<1x128xf32>
    %88 = vector.broadcast %87 : vector<1x128xf32> to vector<64x128xf32>
    %89 = arith.addf %85, %88 : vector<64x128xf32>
    %cst_63 = arith.constant 0.000000e+00 : f32
    %90 = vector.broadcast %cst_63 : f32 to vector<64x128xf32>
    %91 = arith.maximumf %89, %90 : vector<64x128xf32>
    %c0_64 = arith.constant 0 : index
    %c0_65 = arith.constant 0 : index
    %c0_66 = arith.constant 0 : index
    %92 = vector.load %arg20[%c0_64, %c0_65, %c0_66] : memref<2x128x32xf32, #tpu.memory_space<vmem>>, vector<1x128x32xf32>
    %93 = vector.shape_cast %92 : vector<1x128x32xf32> to vector<128x32xf32>
    %cst_67 = arith.constant dense<0.000000e+00> : vector<64x32xf32>
    %94 = tpu.matmul %91, %93, %cst_67 {dimension_numbers = #tpu.dot_dimension_numbers<[1], [0], [0], [1], [0, 0, 1, 1], [], []>} : vector<64x128xf32>, vector<128x32xf32>, vector<64x32xf32> -> vector<64x32xf32>
    %c0_68 = arith.constant 0 : index
    %c0_69 = arith.constant 0 : index
    %c0_70 = arith.constant 0 : index
    %95 = vector.load %arg21[%c0_68, %c0_69, %c0_70] : memref<2x1x32xf32, #tpu.memory_space<vmem>>, vector<1x1x32xf32>
    %96 = vector.shape_cast %95 : vector<1x1x32xf32> to vector<1x32xf32>
    %97 = vector.broadcast %96 : vector<1x32xf32> to vector<64x32xf32>
    %98 = arith.addf %94, %97 : vector<64x32xf32>
    %99 = arith.addf %82, %98 : vector<64x32xf32>
    %c0_71 = arith.constant 0 : index
    %c0_72 = arith.constant 0 : index
    %c0_73 = arith.constant 0 : index
    %100 = vector.load %arg22[%c0_71, %c0_72, %c0_73] : memref<2x1x32xf32, #tpu.memory_space<vmem>>, vector<1x1x32xf32>
    %101 = vector.shape_cast %100 : vector<1x1x32xf32> to vector<1x32xf32>
    %c0_74 = arith.constant 0 : index
    %c0_75 = arith.constant 0 : index
    %c0_76 = arith.constant 0 : index
    %102 = vector.load %arg23[%c0_74, %c0_75, %c0_76] : memref<2x1x32xf32, #tpu.memory_space<vmem>>, vector<1x1x32xf32>
    %103 = vector.shape_cast %102 : vector<1x1x32xf32> to vector<1x32xf32>
    %cst_77 = arith.constant dense<0.000000e+00> : vector<64xf32>
    %104 = vector.multi_reduction <add>, %99, %cst_77 [1] : vector<64x32xf32> to vector<64xf32>
    %105 = vector.shape_cast %104 : vector<64xf32> to vector<64x1xf32>
    %cst_78 = arith.constant 3.200000e+01 : f32
    %106 = vector.broadcast %cst_78 : f32 to vector<64x1xf32>
    %107 = arith.divf %105, %106 : vector<64x1xf32>
    %108 = vector.broadcast %107 : vector<64x1xf32> to vector<64x32xf32>
    %109 = arith.subf %99, %108 : vector<64x32xf32>
    %110 = arith.mulf %109, %109 : vector<64x32xf32>
    %cst_79 = arith.constant dense<0.000000e+00> : vector<64xf32>
    %111 = vector.multi_reduction <add>, %110, %cst_79 [1] : vector<64x32xf32> to vector<64xf32>
    %112 = vector.shape_cast %111 : vector<64xf32> to vector<64x1xf32>
    %cst_80 = arith.constant 3.200000e+01 : f32
    %113 = vector.broadcast %cst_80 : f32 to vector<64x1xf32>
    %114 = arith.divf %112, %113 : vector<64x1xf32>
    %115 = vector.broadcast %107 : vector<64x1xf32> to vector<64x32xf32>
    %116 = arith.subf %99, %115 : vector<64x32xf32>
    %cst_81 = arith.constant 9.99999974E-6 : f32
    %117 = vector.broadcast %cst_81 : f32 to vector<64x1xf32>
    %118 = arith.addf %114, %117 : vector<64x1xf32>
    %119 = math.rsqrt %118 : vector<64x1xf32>
    %120 = vector.broadcast %119 : vector<64x1xf32> to vector<64x32xf32>
    %121 = arith.mulf %116, %120 : vector<64x32xf32>
    %122 = vector.broadcast %101 : vector<1x32xf32> to vector<64x32xf32>
    %123 = arith.mulf %121, %122 : vector<64x32xf32>
    %124 = vector.broadcast %103 : vector<1x32xf32> to vector<64x32xf32>
    %125 = arith.addf %123, %124 : vector<64x32xf32>
    %c1 = arith.constant 1 : index
    %c0_82 = arith.constant 0 : index
    %c0_83 = arith.constant 0 : index
    %126 = vector.load %arg8[%c1, %c0_82, %c0_83] : memref<2x32x32xf32, #tpu.memory_space<vmem>>, vector<1x32x32xf32>
    %127 = vector.shape_cast %126 : vector<1x32x32xf32> to vector<32x32xf32>
    %cst_84 = arith.constant dense<0.000000e+00> : vector<64x32xf32>
    %128 = tpu.matmul %125, %127, %cst_84 {dimension_numbers = #tpu.dot_dimension_numbers<[1], [0], [0], [1], [0, 0, 1, 1], [], []>} : vector<64x32xf32>, vector<32x32xf32>, vector<64x32xf32> -> vector<64x32xf32>
    %c1_85 = arith.constant 1 : index
    %c0_86 = arith.constant 0 : index
    %c0_87 = arith.constant 0 : index
    %129 = vector.load %arg9[%c1_85, %c0_86, %c0_87] : memref<2x1x32xf32, #tpu.memory_space<vmem>>, vector<1x1x32xf32>
    %130 = vector.shape_cast %129 : vector<1x1x32xf32> to vector<1x32xf32>
    %131 = vector.broadcast %130 : vector<1x32xf32> to vector<64x32xf32>
    %132 = arith.addf %128, %131 : vector<64x32xf32>
    %c1_88 = arith.constant 1 : index
    %c0_89 = arith.constant 0 : index
    %c0_90 = arith.constant 0 : index
    %133 = vector.load %arg10[%c1_88, %c0_89, %c0_90] : memref<2x32x32xf32, #tpu.memory_space<vmem>>, vector<1x32x32xf32>
    %134 = vector.shape_cast %133 : vector<1x32x32xf32> to vector<32x32xf32>
    %cst_91 = arith.constant dense<0.000000e+00> : vector<64x32xf32>
    %135 = tpu.matmul %125, %134, %cst_91 {dimension_numbers = #tpu.dot_dimension_numbers<[1], [0], [0], [1], [0, 0, 1, 1], [], []>} : vector<64x32xf32>, vector<32x32xf32>, vector<64x32xf32> -> vector<64x32xf32>
    %c1_92 = arith.constant 1 : index
    %c0_93 = arith.constant 0 : index
    %c0_94 = arith.constant 0 : index
    %136 = vector.load %arg11[%c1_92, %c0_93, %c0_94] : memref<2x1x32xf32, #tpu.memory_space<vmem>>, vector<1x1x32xf32>
    %137 = vector.shape_cast %136 : vector<1x1x32xf32> to vector<1x32xf32>
    %138 = vector.broadcast %137 : vector<1x32xf32> to vector<64x32xf32>
    %139 = arith.addf %135, %138 : vector<64x32xf32>
    %c1_95 = arith.constant 1 : index
    %c0_96 = arith.constant 0 : index
    %c0_97 = arith.constant 0 : index
    %140 = vector.load %arg12[%c1_95, %c0_96, %c0_97] : memref<2x32x32xf32, #tpu.memory_space<vmem>>, vector<1x32x32xf32>
    %141 = vector.shape_cast %140 : vector<1x32x32xf32> to vector<32x32xf32>
    %cst_98 = arith.constant dense<0.000000e+00> : vector<64x32xf32>
    %142 = tpu.matmul %125, %141, %cst_98 {dimension_numbers = #tpu.dot_dimension_numbers<[1], [0], [0], [1], [0, 0, 1, 1], [], []>} : vector<64x32xf32>, vector<32x32xf32>, vector<64x32xf32> -> vector<64x32xf32>
    %c1_99 = arith.constant 1 : index
    %c0_100 = arith.constant 0 : index
    %c0_101 = arith.constant 0 : index
    %143 = vector.load %arg13[%c1_99, %c0_100, %c0_101] : memref<2x1x32xf32, #tpu.memory_space<vmem>>, vector<1x1x32xf32>
    %144 = vector.shape_cast %143 : vector<1x1x32xf32> to vector<1x32xf32>
    %145 = vector.broadcast %144 : vector<1x32xf32> to vector<64x32xf32>
    %146 = arith.addf %142, %145 : vector<64x32xf32>
    %147 = tpu.concatenate %139, %139, %139, %139 in 0 : vector<64x32xf32>, vector<64x32xf32>, vector<64x32xf32>, vector<64x32xf32> -> vector<256x32xf32>
    %148 = arith.mulf %147, %12 : vector<256x32xf32>
    %149 = tpu.concatenate %146, %146, %146, %146 in 0 : vector<64x32xf32>, vector<64x32xf32>, vector<64x32xf32>, vector<64x32xf32> -> vector<256x32xf32>
    %150 = arith.mulf %149, %12 : vector<256x32xf32>
    %cst_102 = arith.constant dense<0.000000e+00> : vector<64x256xf32>
    %151 = tpu.matmul %132, %148, %cst_102 {dimension_numbers = #tpu.dot_dimension_numbers<[1], [1], [0], [0], [0, 0, 1, 0], [], []>} : vector<64x32xf32>, vector<256x32xf32>, vector<64x256xf32> -> vector<64x256xf32>
    %152 = arith.addf %151, %11 : vector<64x256xf32>
    %cst_103 = arith.constant dense<0xFF800000> : vector<64xf32>
    %153 = vector.multi_reduction <maximumf>, %152, %cst_103 [1] : vector<64x256xf32> to vector<64xf32>
    %154 = vector.shape_cast %153 : vector<64xf32> to vector<64x1xf32>
    %155 = vector.broadcast %154 : vector<64x1xf32> to vector<64x256xf32>
    %156 = arith.subf %152, %155 : vector<64x256xf32>
    %157 = math.exp %156 : vector<64x256xf32>
    %cst_104 = arith.constant dense<0.000000e+00> : vector<64x32xf32>
    %158 = tpu.matmul %157, %150, %cst_104 {dimension_numbers = #tpu.dot_dimension_numbers<[1], [0], [0], [1], [0, 0, 1, 1], [], []>} : vector<64x256xf32>, vector<256x32xf32>, vector<64x32xf32> -> vector<64x32xf32>
    %cst_105 = arith.constant dense<0.000000e+00> : vector<64x32xf32>
    %159 = tpu.matmul %157, %12, %cst_105 {dimension_numbers = #tpu.dot_dimension_numbers<[1], [0], [0], [1], [0, 0, 1, 1], [], []>} : vector<64x256xf32>, vector<256x32xf32>, vector<64x32xf32> -> vector<64x32xf32>
    %160 = tpu.reciprocal %159 {approx = true} : vector<64x32xf32> -> vector<64x32xf32>
    %161 = arith.mulf %158, %160 : vector<64x32xf32>
    %c1_106 = arith.constant 1 : index
    %c0_107 = arith.constant 0 : index
    %c0_108 = arith.constant 0 : index
    %162 = vector.load %arg14[%c1_106, %c0_107, %c0_108] : memref<2x32x32xf32, #tpu.memory_space<vmem>>, vector<1x32x32xf32>
    %163 = vector.shape_cast %162 : vector<1x32x32xf32> to vector<32x32xf32>
    %cst_109 = arith.constant dense<0.000000e+00> : vector<64x32xf32>
    %164 = tpu.matmul %161, %163, %cst_109 {dimension_numbers = #tpu.dot_dimension_numbers<[1], [0], [0], [1], [0, 0, 1, 1], [], []>} : vector<64x32xf32>, vector<32x32xf32>, vector<64x32xf32> -> vector<64x32xf32>
    %c1_110 = arith.constant 1 : index
    %c0_111 = arith.constant 0 : index
    %c0_112 = arith.constant 0 : index
    %165 = vector.load %arg15[%c1_110, %c0_111, %c0_112] : memref<2x1x32xf32, #tpu.memory_space<vmem>>, vector<1x1x32xf32>
    %166 = vector.shape_cast %165 : vector<1x1x32xf32> to vector<1x32xf32>
    %167 = vector.broadcast %166 : vector<1x32xf32> to vector<64x32xf32>
    %168 = arith.addf %164, %167 : vector<64x32xf32>
    %169 = arith.addf %125, %168 : vector<64x32xf32>
    %c1_113 = arith.constant 1 : index
    %c0_114 = arith.constant 0 : index
    %c0_115 = arith.constant 0 : index
    %170 = vector.load %arg16[%c1_113, %c0_114, %c0_115] : memref<2x1x32xf32, #tpu.memory_space<vmem>>, vector<1x1x32xf32>
    %171 = vector.shape_cast %170 : vector<1x1x32xf32> to vector<1x32xf32>
    %c1_116 = arith.constant 1 : index
    %c0_117 = arith.constant 0 : index
    %c0_118 = arith.constant 0 : index
    %172 = vector.load %arg17[%c1_116, %c0_117, %c0_118] : memref<2x1x32xf32, #tpu.memory_space<vmem>>, vector<1x1x32xf32>
    %173 = vector.shape_cast %172 : vector<1x1x32xf32> to vector<1x32xf32>
    %cst_119 = arith.constant dense<0.000000e+00> : vector<64xf32>
    %174 = vector.multi_reduction <add>, %169, %cst_119 [1] : vector<64x32xf32> to vector<64xf32>
    %175 = vector.shape_cast %174 : vector<64xf32> to vector<64x1xf32>
    %cst_120 = arith.constant 3.200000e+01 : f32
    %176 = vector.broadcast %cst_120 : f32 to vector<64x1xf32>
    %177 = arith.divf %175, %176 : vector<64x1xf32>
    %178 = vector.broadcast %177 : vector<64x1xf32> to vector<64x32xf32>
    %179 = arith.subf %169, %178 : vector<64x32xf32>
    %180 = arith.mulf %179, %179 : vector<64x32xf32>
    %cst_121 = arith.constant dense<0.000000e+00> : vector<64xf32>
    %181 = vector.multi_reduction <add>, %180, %cst_121 [1] : vector<64x32xf32> to vector<64xf32>
    %182 = vector.shape_cast %181 : vector<64xf32> to vector<64x1xf32>
    %cst_122 = arith.constant 3.200000e+01 : f32
    %183 = vector.broadcast %cst_122 : f32 to vector<64x1xf32>
    %184 = arith.divf %182, %183 : vector<64x1xf32>
    %185 = vector.broadcast %177 : vector<64x1xf32> to vector<64x32xf32>
    %186 = arith.subf %169, %185 : vector<64x32xf32>
    %cst_123 = arith.constant 9.99999974E-6 : f32
    %187 = vector.broadcast %cst_123 : f32 to vector<64x1xf32>
    %188 = arith.addf %184, %187 : vector<64x1xf32>
    %189 = math.rsqrt %188 : vector<64x1xf32>
    %190 = vector.broadcast %189 : vector<64x1xf32> to vector<64x32xf32>
    %191 = arith.mulf %186, %190 : vector<64x32xf32>
    %192 = vector.broadcast %171 : vector<1x32xf32> to vector<64x32xf32>
    %193 = arith.mulf %191, %192 : vector<64x32xf32>
    %194 = vector.broadcast %173 : vector<1x32xf32> to vector<64x32xf32>
    %195 = arith.addf %193, %194 : vector<64x32xf32>
    %c1_124 = arith.constant 1 : index
    %c0_125 = arith.constant 0 : index
    %c0_126 = arith.constant 0 : index
    %196 = vector.load %arg18[%c1_124, %c0_125, %c0_126] : memref<2x32x128xf32, #tpu.memory_space<vmem>>, vector<1x32x128xf32>
    %197 = vector.shape_cast %196 : vector<1x32x128xf32> to vector<32x128xf32>
    %cst_127 = arith.constant dense<0.000000e+00> : vector<64x128xf32>
    %198 = tpu.matmul %195, %197, %cst_127 {dimension_numbers = #tpu.dot_dimension_numbers<[1], [0], [0], [1], [0, 0, 1, 1], [], []>} : vector<64x32xf32>, vector<32x128xf32>, vector<64x128xf32> -> vector<64x128xf32>
    %c1_128 = arith.constant 1 : index
    %c0_129 = arith.constant 0 : index
    %c0_130 = arith.constant 0 : index
    %199 = vector.load %arg19[%c1_128, %c0_129, %c0_130] : memref<2x1x128xf32, #tpu.memory_space<vmem>>, vector<1x1x128xf32>
    %200 = vector.shape_cast %199 : vector<1x1x128xf32> to vector<1x128xf32>
    %201 = vector.broadcast %200 : vector<1x128xf32> to vector<64x128xf32>
    %202 = arith.addf %198, %201 : vector<64x128xf32>
    %cst_131 = arith.constant 0.000000e+00 : f32
    %203 = vector.broadcast %cst_131 : f32 to vector<64x128xf32>
    %204 = arith.maximumf %202, %203 : vector<64x128xf32>
    %c1_132 = arith.constant 1 : index
    %c0_133 = arith.constant 0 : index
    %c0_134 = arith.constant 0 : index
    %205 = vector.load %arg20[%c1_132, %c0_133, %c0_134] : memref<2x128x32xf32, #tpu.memory_space<vmem>>, vector<1x128x32xf32>
    %206 = vector.shape_cast %205 : vector<1x128x32xf32> to vector<128x32xf32>
    %cst_135 = arith.constant dense<0.000000e+00> : vector<64x32xf32>
    %207 = tpu.matmul %204, %206, %cst_135 {dimension_numbers = #tpu.dot_dimension_numbers<[1], [0], [0], [1], [0, 0, 1, 1], [], []>} : vector<64x128xf32>, vector<128x32xf32>, vector<64x32xf32> -> vector<64x32xf32>
    %c1_136 = arith.constant 1 : index
    %c0_137 = arith.constant 0 : index
    %c0_138 = arith.constant 0 : index
    %208 = vector.load %arg21[%c1_136, %c0_137, %c0_138] : memref<2x1x32xf32, #tpu.memory_space<vmem>>, vector<1x1x32xf32>
    %209 = vector.shape_cast %208 : vector<1x1x32xf32> to vector<1x32xf32>
    %210 = vector.broadcast %209 : vector<1x32xf32> to vector<64x32xf32>
    %211 = arith.addf %207, %210 : vector<64x32xf32>
    %212 = arith.addf %195, %211 : vector<64x32xf32>
    %c1_139 = arith.constant 1 : index
    %c0_140 = arith.constant 0 : index
    %c0_141 = arith.constant 0 : index
    %213 = vector.load %arg22[%c1_139, %c0_140, %c0_141] : memref<2x1x32xf32, #tpu.memory_space<vmem>>, vector<1x1x32xf32>
    %214 = vector.shape_cast %213 : vector<1x1x32xf32> to vector<1x32xf32>
    %c1_142 = arith.constant 1 : index
    %c0_143 = arith.constant 0 : index
    %c0_144 = arith.constant 0 : index
    %215 = vector.load %arg23[%c1_142, %c0_143, %c0_144] : memref<2x1x32xf32, #tpu.memory_space<vmem>>, vector<1x1x32xf32>
    %216 = vector.shape_cast %215 : vector<1x1x32xf32> to vector<1x32xf32>
    %cst_145 = arith.constant dense<0.000000e+00> : vector<64xf32>
    %217 = vector.multi_reduction <add>, %212, %cst_145 [1] : vector<64x32xf32> to vector<64xf32>
    %218 = vector.shape_cast %217 : vector<64xf32> to vector<64x1xf32>
    %cst_146 = arith.constant 3.200000e+01 : f32
    %219 = vector.broadcast %cst_146 : f32 to vector<64x1xf32>
    %220 = arith.divf %218, %219 : vector<64x1xf32>
    %221 = vector.broadcast %220 : vector<64x1xf32> to vector<64x32xf32>
    %222 = arith.subf %212, %221 : vector<64x32xf32>
    %223 = arith.mulf %222, %222 : vector<64x32xf32>
    %cst_147 = arith.constant dense<0.000000e+00> : vector<64xf32>
    %224 = vector.multi_reduction <add>, %223, %cst_147 [1] : vector<64x32xf32> to vector<64xf32>
    %225 = vector.shape_cast %224 : vector<64xf32> to vector<64x1xf32>
    %cst_148 = arith.constant 3.200000e+01 : f32
    %226 = vector.broadcast %cst_148 : f32 to vector<64x1xf32>
    %227 = arith.divf %225, %226 : vector<64x1xf32>
    %228 = vector.broadcast %220 : vector<64x1xf32> to vector<64x32xf32>
    %229 = arith.subf %212, %228 : vector<64x32xf32>
    %cst_149 = arith.constant 9.99999974E-6 : f32
    %230 = vector.broadcast %cst_149 : f32 to vector<64x1xf32>
    %231 = arith.addf %227, %230 : vector<64x1xf32>
    %232 = math.rsqrt %231 : vector<64x1xf32>
    %233 = vector.broadcast %232 : vector<64x1xf32> to vector<64x32xf32>
    %234 = arith.mulf %229, %233 : vector<64x32xf32>
    %235 = vector.broadcast %214 : vector<1x32xf32> to vector<64x32xf32>
    %236 = arith.mulf %234, %235 : vector<64x32xf32>
    %237 = vector.broadcast %216 : vector<1x32xf32> to vector<64x32xf32>
    %238 = arith.addf %236, %237 : vector<64x32xf32>
    %c0_150 = arith.constant 0 : index
    %c0_151 = arith.constant 0 : index
    %239 = vector.load %arg24[%c0_150, %c0_151] : memref<1x32xf32, #tpu.memory_space<vmem>>, vector<1x32xf32>
    %c0_152 = arith.constant 0 : index
    %c0_153 = arith.constant 0 : index
    %240 = vector.load %arg25[%c0_152, %c0_153] : memref<1x32xf32, #tpu.memory_space<vmem>>, vector<1x32xf32>
    %cst_154 = arith.constant dense<0.000000e+00> : vector<64xf32>
    %241 = vector.multi_reduction <add>, %238, %cst_154 [1] : vector<64x32xf32> to vector<64xf32>
    %242 = vector.shape_cast %241 : vector<64xf32> to vector<64x1xf32>
    %cst_155 = arith.constant 3.200000e+01 : f32
    %243 = vector.broadcast %cst_155 : f32 to vector<64x1xf32>
    %244 = arith.divf %242, %243 : vector<64x1xf32>
    %245 = vector.broadcast %244 : vector<64x1xf32> to vector<64x32xf32>
    %246 = arith.subf %238, %245 : vector<64x32xf32>
    %247 = arith.mulf %246, %246 : vector<64x32xf32>
    %cst_156 = arith.constant dense<0.000000e+00> : vector<64xf32>
    %248 = vector.multi_reduction <add>, %247, %cst_156 [1] : vector<64x32xf32> to vector<64xf32>
    %249 = vector.shape_cast %248 : vector<64xf32> to vector<64x1xf32>
    %cst_157 = arith.constant 3.200000e+01 : f32
    %250 = vector.broadcast %cst_157 : f32 to vector<64x1xf32>
    %251 = arith.divf %249, %250 : vector<64x1xf32>
    %252 = vector.broadcast %244 : vector<64x1xf32> to vector<64x32xf32>
    %253 = arith.subf %238, %252 : vector<64x32xf32>
    %cst_158 = arith.constant 9.99999974E-6 : f32
    %254 = vector.broadcast %cst_158 : f32 to vector<64x1xf32>
    %255 = arith.addf %251, %254 : vector<64x1xf32>
    %256 = math.rsqrt %255 : vector<64x1xf32>
    %257 = vector.broadcast %256 : vector<64x1xf32> to vector<64x32xf32>
    %258 = arith.mulf %253, %257 : vector<64x32xf32>
    %259 = vector.broadcast %239 : vector<1x32xf32> to vector<64x32xf32>
    %260 = arith.mulf %258, %259 : vector<64x32xf32>
    %261 = vector.broadcast %240 : vector<1x32xf32> to vector<64x32xf32>
    %262 = arith.addf %260, %261 : vector<64x32xf32>
    %c0_159 = arith.constant 0 : index
    %c0_160 = arith.constant 0 : index
    %263 = vector.load %arg30[%c0_159, %c0_160] : memref<64x32xf32, #tpu.memory_space<vmem>>, vector<64x32xf32>
    tpu.vector_store %arg30[%c0_159, %c0_160], %262 {strides = array<i32>} : memref<64x32xf32, #tpu.memory_space<vmem>>, vector<64x32xf32>,
    %c0_161 = arith.constant 0 : index
    %c0_162 = arith.constant 0 : index
    %264 = vector.load %arg5[%c0_161, %c0_162] : memref<32x64xf32, #tpu.memory_space<vmem>>, vector<32x64xf32>
    %cst_163 = arith.constant dense<0.000000e+00> : vector<32x32xf32>
    %265 = tpu.matmul %264, %262, %cst_163 {dimension_numbers = #tpu.dot_dimension_numbers<[1], [0], [0], [1], [0, 0, 1, 1], [], []>} : vector<32x64xf32>, vector<64x32xf32>, vector<32x32xf32> -> vector<32x32xf32>
    %c0_164 = arith.constant 0 : index
    %c0_165 = arith.constant 0 : index
    %266 = vector.load %arg26[%c0_164, %c0_165] : memref<32x16xf32, #tpu.memory_space<vmem>>, vector<32x16xf32>
    %cst_166 = arith.constant dense<0.000000e+00> : vector<32x16xf32>
    %267 = tpu.matmul %265, %266, %cst_166 {dimension_numbers = #tpu.dot_dimension_numbers<[1], [0], [0], [1], [0, 0, 1, 1], [], []>} : vector<32x32xf32>, vector<32x16xf32>, vector<32x16xf32> -> vector<32x16xf32>
    %c0_167 = arith.constant 0 : index
    %c0_168 = arith.constant 0 : index
    %268 = vector.load %arg27[%c0_167, %c0_168] : memref<1x16xf32, #tpu.memory_space<vmem>>, vector<1x16xf32>
    %269 = vector.broadcast %268 : vector<1x16xf32> to vector<32x16xf32>
    %270 = arith.addf %267, %269 : vector<32x16xf32>
    %cst_169 = arith.constant 0.000000e+00 : f32
    %271 = vector.broadcast %cst_169 : f32 to vector<32x16xf32>
    %272 = arith.maximumf %270, %271 : vector<32x16xf32>
    %c0_170 = arith.constant 0 : index
    %c0_171 = arith.constant 0 : index
    %273 = vector.load %arg28[%c0_170, %c0_171] : memref<16x16xf32, #tpu.memory_space<vmem>>, vector<16x16xf32>
    %cst_172 = arith.constant dense<0.000000e+00> : vector<32x16xf32>
    %274 = tpu.matmul %272, %273, %cst_172 {dimension_numbers = #tpu.dot_dimension_numbers<[1], [0], [0], [1], [0, 0, 1, 1], [], []>} : vector<32x16xf32>, vector<16x16xf32>, vector<32x16xf32> -> vector<32x16xf32>
    %c0_173 = arith.constant 0 : index
    %c0_174 = arith.constant 0 : index
    %275 = vector.load %arg29[%c0_173, %c0_174] : memref<1x16xf32, #tpu.memory_space<vmem>>, vector<1x16xf32>
    %276 = vector.broadcast %275 : vector<1x16xf32> to vector<32x16xf32>
    %277 = arith.addf %274, %276 : vector<32x16xf32>
    %c0_175 = arith.constant 0 : index
    %c0_176 = arith.constant 0 : index
    %278 = vector.load %arg31[%c0_175, %c0_176] : memref<32x16xf32, #tpu.memory_space<vmem>>, vector<32x16xf32>
    tpu.vector_store %arg31[%c0_175, %c0_176], %277 {strides = array<i32>} : memref<32x16xf32, #tpu.memory_space<vmem>>, vector<32x16xf32>,
    return
  }
}

</mosaic_0001>

<llo_original>
// kernel: _lambda_.1
$region0: #{_lambda_.1}
  #allocation0 [shape = 'u32[]', space=smem, size = 0x4, offset = 0x4, fixed_abs, tag = 'smem constant byte address 0x4 - core index']
  #allocation1 [shape = 'u32[144,128]{1,0:T(1,128)}', space=vmem, size = 0x12000, scoped, tag = 'internal scratch']
  %s0 = inlined_call_operand.smem [shape: u32[32], index: -1, kind: input, shape index: {}]
  %s1 = sld [smem:[%s0]]
  %s2 = scalar_lea.smem %s0, 1
  %s3 = sld [smem:[%s2]]
  %s4 = scalar_lea.smem %s0, 2
  %s5 = sld [smem:[%s4]]
  %s6 = scalar_lea.smem %s0, 3
  %s7 = sld [smem:[%s6]]
  %s8 = scalar_lea.smem %s0, 4
  %s9 = sld [smem:[%s8]]
  %s10 = scalar_lea.smem %s0, 5
  %s11 = sld [smem:[%s10]]
  %s12 = scalar_lea.smem %s0, 6
  %s13 = sld [smem:[%s12]]
  %s14 = scalar_lea.smem %s0, 7
  %s15 = sld [smem:[%s14]]
  %s16 = scalar_lea.smem %s0, 8
  %s17 = sld [smem:[%s16]]
  %s18 = scalar_lea.smem %s0, 9
  %s19 = sld [smem:[%s18]]
  %s20 = scalar_lea.smem %s0, 10
  %s21 = sld [smem:[%s20]]
  %s22 = scalar_lea.smem %s0, 11
  %s23 = sld [smem:[%s22]]
  %s24 = scalar_lea.smem %s0, 12
  %s25 = sld [smem:[%s24]]
  %s26 = scalar_lea.smem %s0, 13
  %s27 = sld [smem:[%s26]]
  %s28 = scalar_lea.smem %s0, 14
  %s29 = sld [smem:[%s28]]
  %s30 = scalar_lea.smem %s0, 15
  %s31 = sld [smem:[%s30]]
  %s32 = scalar_lea.smem %s0, 16
  %s33 = sld [smem:[%s32]]
  %s34 = scalar_lea.smem %s0, 17
  %s35 = sld [smem:[%s34]]
  %s36 = scalar_lea.smem %s0, 18
  %s37 = sld [smem:[%s36]]
  %s38 = scalar_lea.smem %s0, 19
  %s39 = sld [smem:[%s38]]
  %s40 = scalar_lea.smem %s0, 20
  %s41 = sld [smem:[%s40]]
  %s42 = scalar_lea.smem %s0, 21
  %s43 = sld [smem:[%s42]]
  %s44 = scalar_lea.smem %s0, 22
  %s45 = sld [smem:[%s44]]
  %s46 = scalar_lea.smem %s0, 23
  %s47 = sld [smem:[%s46]]
  %s48 = scalar_lea.smem %s0, 24
  %s49 = sld [smem:[%s48]]
  %s50 = scalar_lea.smem %s0, 25
  %s51 = sld [smem:[%s50]]
  %s52 = scalar_lea.smem %s0, 26
  %s53 = sld [smem:[%s52]]
  %s54 = scalar_lea.smem %s0, 27
  %s55 = sld [smem:[%s54]]
  %s56 = scalar_lea.smem %s0, 28
  %s57 = sld [smem:[%s56]]
  %s58 = scalar_lea.smem %s0, 29
  %s59 = sld [smem:[%s58]]
  %s60 = scalar_lea.smem %s0, 30
  %s61 = sld [smem:[%s60]]
  %s62 = scalar_lea.smem %s0, 31
  %s63 = sld [smem:[%s62]]
  %64 = xla_tuple %s61, %s63
  %s65 = sld [smem:[#allocation0]]
  $region158: #{_lambda_.1} parent=0
    _
  %s67 = ssub.s32 1, %s65
  %s68 = scalar_select 0, %s67, %s65
  $region1: #{_lambda_.1} parent=0
    #allocation2 [shape = 'u8[16384]{0}', space=vmem, size = 0x4000, scoped, tag = 'input window, operand 5, single buffered']
    #allocation3 [shape = 's32[1]{0}', space=sflag, size = 0x4, scoped, tag = 'scoped memory for _lambda_.1']
    #allocation4 [shape = 's32[1]{0}', space=sflag, size = 0x4, scoped, tag = 'scoped memory for _lambda_.1']
    #allocation5 [shape = 'u8[8192]{0}', space=vmem, size = 0x2000, scoped, tag = 'input window, operand 6, single buffered']
    #allocation6 [shape = 's32[1]{0}', space=sflag, size = 0x4, scoped, tag = 'scoped memory for _lambda_.1']
    #allocation7 [shape = 'u8[32768]{0}', space=vmem, size = 0x8000, scoped, tag = 'input window, operand 8, single buffered']
    #allocation8 [shape = 'u8[32768]{0}', space=vmem, size = 0x8000, scoped, tag = 'input window, operand 10, single buffered']
    #allocation9 [shape = 's32[1]{0}', space=sflag, size = 0x4, scoped, tag = 'scoped memory for _lambda_.1']
    #allocation10 [shape = 'u8[8192]{0}', space=vmem, size = 0x2000, scoped, tag = 'input window, operand 28, single buffered']
    #allocation11 [shape = 'u8[32768]{0}', space=vmem, size = 0x8000, scoped, tag = 'output window, operand 0, single buffered']
    %69 = vsyncpa [#allocation3], 0
    %70 = vsyncpa [#allocation6], 0
    %71 = vsyncpa [#allocation9], 0
    %72 = vsyncpa [#allocation4], 0
    // Predicated region
    $region2: #{_lambda_.1} parent=1 // pred_check
      _
    $region3: #{_lambda_.1} parent=1 // pred_check_branch
      %74 = sbr.rel (0) target = $region5
    $region4: #{_lambda_.1} parent=1 // pred_region
      _
    $region5: #{_lambda_.1} parent=1 // pred_fallthru
      _
    // Predicated region
    $region6: #{_lambda_.1} parent=1 // pred_check
      _
    $region7: #{_lambda_.1} parent=1 // pred_check_branch
      %76 = sbr.rel (0) target = $region9
    $region8: #{_lambda_.1} parent=1 // pred_region
      _
    $region9: #{_lambda_.1} parent=1 // pred_fallthru
      _
    // Predicated region
    $region10: #{_lambda_.1} parent=1 // pred_check
      _
    $region11: #{_lambda_.1} parent=1 // pred_check_branch
      %78 = sbr.rel (0) target = $region13
    $region12: #{_lambda_.1} parent=1 // pred_region
      _
    $region13: #{_lambda_.1} parent=1 // pred_fallthru
      _
    // Predicated region
    $region14: #{_lambda_.1} parent=1 // pred_check
      _
    $region15: #{_lambda_.1} parent=1 // pred_check_branch
      %80 = sbr.rel (0) target = $region17
    $region16: #{_lambda_.1} parent=1 // pred_region
      _
    $region17: #{_lambda_.1} parent=1 // pred_fallthru
      _
    // Predicated region
    $region18: #{_lambda_.1} parent=1 // pred_check
      _
    $region19: #{_lambda_.1} parent=1 // pred_check_branch
      %82 = sbr.rel (0) target = $region21
    $region20: #{_lambda_.1} parent=1 // pred_region
      _
    $region21: #{_lambda_.1} parent=1 // pred_fallthru
      _
    // Predicated region
    $region22: #{_lambda_.1} parent=1 // pred_check
      _
    $region23: #{_lambda_.1} parent=1 // pred_check_branch
      %84 = sbr.rel (0) target = $region25
    $region24: #{_lambda_.1} parent=1 // pred_region
      %s86 = ssub.s32 512, 512
      %87 = vsyncadd [#allocation3], %s86
      %s88 = sshll.u32 [#allocation2], 4
      %s89 = int_to_ptr.vmem [resolvable:$true] %s88
      %94 = dma.hbm_to_vmem [thread:$0]  %s11, 512, %s89, [#allocation3], 128, 128, 8
    $region25: #{_lambda_.1} parent=1 // pred_fallthru
      _
    // Predicated region
    $region26: #{_lambda_.1} parent=1 // pred_check
      _
    $region27: #{_lambda_.1} parent=1 // pred_check_branch
      %96 = sbr.rel (0) target = $region29
    $region28: #{_lambda_.1} parent=1 // pred_region
      %s98 = ssub.s32 256, 256
      %99 = vsyncadd [#allocation6], %s98
      %s100 = sshll.u32 [#allocation5], 4
      %s101 = int_to_ptr.vmem [resolvable:$true] %s100
      %106 = dma.hbm_to_vmem [thread:$0]  %s13, 256, %s101, [#allocation6], 128, 128, 8
    $region29: #{_lambda_.1} parent=1 // pred_fallthru
      _
    // Predicated region
    $region30: #{_lambda_.1} parent=1 // pred_check
      _
    $region31: #{_lambda_.1} parent=1 // pred_check_branch
      %108 = sbr.rel (0) target = $region33
    $region32: #{_lambda_.1} parent=1 // pred_region
      _
    $region33: #{_lambda_.1} parent=1 // pred_fallthru
      _
    // Predicated region
    $region34: #{_lambda_.1} parent=1 // pred_check
      _
    $region35: #{_lambda_.1} parent=1 // pred_check_branch
      %110 = sbr.rel (0) target = $region37
    $region36: #{_lambda_.1} parent=1 // pred_region
      %s112 = ssub.s32 1024, 1024
      %113 = vsyncadd [#allocation6], %s112
      %s114 = sshll.u32 [#allocation7], 4
      %s115 = int_to_ptr.vmem [resolvable:$true] %s114
      %120 = dma.hbm_to_vmem [thread:$0]  %s17, 1024, %s115, [#allocation6], 128, 128, 8
    $region37: #{_lambda_.1} parent=1 // pred_fallthru
      _
    // Predicated region
    $region38: #{_lambda_.1} parent=1 // pred_check
      _
    $region39: #{_lambda_.1} parent=1 // pred_check_branch
      %122 = sbr.rel (0) target = $region41
    $region40: #{_lambda_.1} parent=1 // pred_region
      _
    $region41: #{_lambda_.1} parent=1 // pred_fallthru
      _
    // Predicated region
    $region42: #{_lambda_.1} parent=1 // pred_check
      _
    $region43: #{_lambda_.1} parent=1 // pred_check_branch
      %124 = sbr.rel (0) target = $region45
    $region44: #{_lambda_.1} parent=1 // pred_region
      %s126 = ssub.s32 1024, 1024
      %127 = vsyncadd [#allocation9], %s126
      %s128 = sshll.u32 [#allocation8], 4
      %s129 = int_to_ptr.vmem [resolvable:$true] %s128
      %134 = dma.hbm_to_vmem [thread:$0]  %s21, 1024, %s129, [#allocation9], 128, 128, 8
    $region45: #{_lambda_.1} parent=1 // pred_fallthru
      _
    // Predicated region
    $region46: #{_lambda_.1} parent=1 // pred_check
      _
    $region47: #{_lambda_.1} parent=1 // pred_check_branch
      %136 = sbr.rel (0) target = $region49
    $region48: #{_lambda_.1} parent=1 // pred_region
      _
    $region49: #{_lambda_.1} parent=1 // pred_fallthru
      _
    // Predicated region
    $region50: #{_lambda_.1} parent=1 // pred_check
      _
    $region51: #{_lambda_.1} parent=1 // pred_check_branch
      %138 = sbr.rel (0) target = $region53
    $region52: #{_lambda_.1} parent=1 // pred_region
      _
    $region53: #{_lambda_.1} parent=1 // pred_fallthru
      _
    // Predicated region
    $region54: #{_lambda_.1} parent=1 // pred_check
      _
    $region55: #{_lambda_.1} parent=1 // pred_check_branch
      %140 = sbr.rel (0) target = $region57
    $region56: #{_lambda_.1} parent=1 // pred_region
      _
    $region57: #{_lambda_.1} parent=1 // pred_fallthru
      _
    // Predicated region
    $region58: #{_lambda_.1} parent=1 // pred_check
      _
    $region59: #{_lambda_.1} parent=1 // pred_check_branch
      %142 = sbr.rel (0) target = $region61
    $region60: #{_lambda_.1} parent=1 // pred_region
      _
    $region61: #{_lambda_.1} parent=1 // pred_fallthru
      _
    // Predicated region
    $region62: #{_lambda_.1} parent=1 // pred_check
      _
    $region63: #{_lambda_.1} parent=1 // pred_check_branch
      %144 = sbr.rel (0) target = $region65
    $region64: #{_lambda_.1} parent=1 // pred_region
      _
    $region65: #{_lambda_.1} parent=1 // pred_fallthru
      _
    // Predicated region
    $region66: #{_lambda_.1} parent=1 // pred_check
      _
    $region67: #{_lambda_.1} parent=1 // pred_check_branch
      %146 = sbr.rel (0) target = $region69
    $region68: #{_lambda_.1} parent=1 // pred_region
      _
    $region69: #{_lambda_.1} parent=1 // pred_fallthru
      _
    // Predicated region
    $region70: #{_lambda_.1} parent=1 // pred_check
      _
    $region71: #{_lambda_.1} parent=1 // pred_check_branch
      %148 = sbr.rel (0) target = $region73
    $region72: #{_lambda_.1} parent=1 // pred_region
      _
    $region73: #{_lambda_.1} parent=1 // pred_fallthru
      _
    // Predicated region
    $region74: #{_lambda_.1} parent=1 // pred_check
      _
    $region75: #{_lambda_.1} parent=1 // pred_check_branch
      %150 = sbr.rel (0) target = $region77
    $region76: #{_lambda_.1} parent=1 // pred_region
      _
    $region77: #{_lambda_.1} parent=1 // pred_fallthru
      _
    // Predicated region
    $region78: #{_lambda_.1} parent=1 // pred_check
      _
    $region79: #{_lambda_.1} parent=1 // pred_check_branch
      %152 = sbr.rel (0) target = $region81
    $region80: #{_lambda_.1} parent=1 // pred_region
      _
    $region81: #{_lambda_.1} parent=1 // pred_fallthru
      _
    // Predicated region
    $region82: #{_lambda_.1} parent=1 // pred_check
      _
    $region83: #{_lambda_.1} parent=1 // pred_check_branch
      %154 = sbr.rel (0) target = $region85
    $region84: #{_lambda_.1} parent=1 // pred_region
      _
    $region85: #{_lambda_.1} parent=1 // pred_fallthru
      _
    // Predicated region
    $region86: #{_lambda_.1} parent=1 // pred_check
      _
    $region87: #{_lambda_.1} parent=1 // pred_check_branch
      %156 = sbr.rel (0) target = $region89
    $region88: #{_lambda_.1} parent=1 // pred_region
      _
    $region89: #{_lambda_.1} parent=1 // pred_fallthru
      _
    // Predicated region
    $region90: #{_lambda_.1} parent=1 // pred_check
      _
    $region91: #{_lambda_.1} parent=1 // pred_check_branch
      %158 = sbr.rel (0) target = $region93
    $region92: #{_lambda_.1} parent=1 // pred_region
      _
    $region93: #{_lambda_.1} parent=1 // pred_fallthru
      _
    // Predicated region
    $region94: #{_lambda_.1} parent=1 // pred_check
      _
    $region95: #{_lambda_.1} parent=1 // pred_check_branch
      %160 = sbr.rel (0) target = $region97
    $region96: #{_lambda_.1} parent=1 // pred_region
      _
    $region97: #{_lambda_.1} parent=1 // pred_fallthru
      _
    // Predicated region
    $region98: #{_lambda_.1} parent=1 // pred_check
      _
    $region99: #{_lambda_.1} parent=1 // pred_check_branch
      %162 = sbr.rel (0) target = $region101
    $region100: #{_lambda_.1} parent=1 // pred_region
      _
    $region101: #{_lambda_.1} parent=1 // pred_fallthru
      _
    // Predicated region
    $region102: #{_lambda_.1} parent=1 // pred_check
      _
    $region103: #{_lambda_.1} parent=1 // pred_check_branch
      %164 = sbr.rel (0) target = $region105
    $region104: #{_lambda_.1} parent=1 // pred_region
      _
    $region105: #{_lambda_.1} parent=1 // pred_fallthru
      _
    // Predicated region
    $region106: #{_lambda_.1} parent=1 // pred_check
      _
    $region107: #{_lambda_.1} parent=1 // pred_check_branch
      %166 = sbr.rel (0) target = $region109
    $region108: #{_lambda_.1} parent=1 // pred_region
      _
    $region109: #{_lambda_.1} parent=1 // pred_fallthru
      _
    // Predicated region
    $region110: #{_lambda_.1} parent=1 // pred_check
      _
    $region111: #{_lambda_.1} parent=1 // pred_check_branch
      %168 = sbr.rel (0) target = $region113
    $region112: #{_lambda_.1} parent=1 // pred_region
      _
    $region113: #{_lambda_.1} parent=1 // pred_fallthru
      _
    // Predicated region
    $region114: #{_lambda_.1} parent=1 // pred_check
      _
    $region115: #{_lambda_.1} parent=1 // pred_check_branch
      %170 = sbr.rel (0) target = $region117
    $region116: #{_lambda_.1} parent=1 // pred_region
      %s172 = ssub.s32 256, 256
      %173 = vsyncadd [#allocation9], %s172
      %s174 = sshll.u32 [#allocation10], 4
      %s175 = int_to_ptr.vmem [resolvable:$true] %s174
      %180 = dma.hbm_to_vmem [thread:$0]  %s57, 256, %s175, [#allocation9], 128, 128, 8
    $region117: #{_lambda_.1} parent=1 // pred_fallthru
      _
    // Predicated region
    $region118: #{_lambda_.1} parent=1 // pred_check
      _
    $region119: #{_lambda_.1} parent=1 // pred_check_branch
      %182 = sbr.rel (0) target = $region121
    $region120: #{_lambda_.1} parent=1 // pred_region
      _
    $region121: #{_lambda_.1} parent=1 // pred_fallthru
      _
    // Predicated region
    $region122: #{_lambda_.1} parent=1 // pred_check
      _
    $region123: #{_lambda_.1} parent=1 // pred_check_branch
      %184 = sbr.rel (0) target = $region125
    $region124: #{_lambda_.1} parent=1 // pred_region
      %185 = dma.done [#allocation3], 512
    $region125: #{_lambda_.1} parent=1 // pred_fallthru
      _
    // Predicated region
    $region126: #{_lambda_.1} parent=1 // pred_check
      _
    $region127: #{_lambda_.1} parent=1 // pred_check_branch
      %187 = sbr.rel (0) target = $region129
    $region128: #{_lambda_.1} parent=1 // pred_region
      %188 = dma.done [#allocation6], 256
    $region129: #{_lambda_.1} parent=1 // pred_fallthru
      _
    // Predicated region
    $region130: #{_lambda_.1} parent=1 // pred_check
      _
    $region131: #{_lambda_.1} parent=1 // pred_check_branch
      %190 = sbr.rel (0) target = $region133
    $region132: #{_lambda_.1} parent=1 // pred_region
      %191 = dma.done [#allocation6], 1024
    $region133: #{_lambda_.1} parent=1 // pred_fallthru
      _
    // Predicated region
    $region134: #{_lambda_.1} parent=1 // pred_check
      _
    $region135: #{_lambda_.1} parent=1 // pred_check_branch
      %193 = sbr.rel (0) target = $region137
    $region136: #{_lambda_.1} parent=1 // pred_region
      %194 = dma.done [#allocation9], 1024
    $region137: #{_lambda_.1} parent=1 // pred_fallthru
      _
    // Predicated region
    $region138: #{_lambda_.1} parent=1 // pred_check
      _
    $region139: #{_lambda_.1} parent=1 // pred_check_branch
      %196 = sbr.rel (0) target = $region141
    $region140: #{_lambda_.1} parent=1 // pred_region
      %197 = dma.done [#allocation9], 256
    $region141: #{_lambda_.1} parent=1 // pred_fallthru
      _
    %v198 = vld [vmem:[%s1] sm:$0xff]
    %v199 = vld [vmem:[%s1 + $0x8] sm:$0xff]
    %v200 = vld [vmem:[%s1 + $0x10] sm:$0xff]
    %v201 = vld [vmem:[%s1 + $0x18] sm:$0xff]
    %v202 = vld [vmem:[%s1 + $0x20] sm:$0xff]
    %v203 = vld [vmem:[%s1 + $0x28] sm:$0xff]
    %v204 = vld [vmem:[%s1 + $0x30] sm:$0xff]
    %v205 = vld [vmem:[%s1 + $0x38] sm:$0xff]
    %v206 = vld [vmem:[#allocation5] sm:$0xff]
    %v207 = vld [vmem:[#allocation5 + $0x8] sm:$0xff]
    %v208 = vld [vmem:[%s15] sm:$0x1]
    %v210 = vlaneseq
    %v211 = vshrl.u32 %v210, 7
    %v212 = vsub.s32 0, %v211
    %v213 = vrot.slane %v208, %v212
    %vm215 = vcmask 130048
    %v217 = vsel %vm215, %v198, 0
    %v220 = vsel %vm215, %v199, 0
    %v223 = vsel %vm215, %v200, 0
    %v226 = vsel %vm215, %v201, 0
    %v229 = vsel %vm215, %v202, 0
    %v232 = vsel %vm215, %v203, 0
    %v235 = vsel %vm215, %v204, 0
    %v238 = vsel %vm215, %v205, 0
    %240 = vmatprep.subr.mxu0 0.0
    %241 = vmatpush1.msra.mxu0 0.0
    %242 = vmatprep.subr.mxu0 0.0
    %243 = vmatpush1.msra.mxu0 0.0
    %244 = vmatprep.subr.mxu0 0.0
    %245 = vmatpush1.msra.mxu0 0.0
    %246 = vmatprep.subr.mxu0 0.0
    %247 = vmatpush1.msra.mxu0 0.0
    %248 = vmatprep.subr.mxu0 0.0
    %249 = vmatpush1.msra.mxu0 0.0
    %250 = vmatprep.subr.mxu0 0.0
    %251 = vmatpush1.msra.mxu0 0.0
    %252 = vmatprep.subr.mxu0 0.0
    %253 = vmatpush1.msra.mxu0 0.0
    %254 = vmatprep.subr.mxu0 0.0
    %255 = vmatpush1.msra.mxu0 0.0
    %256 = vmatprep.subr.mxu0 0.0
    %257 = vmatpush1.msra.mxu0 0.0
    %258 = vmatprep.subr.mxu0 0.0
    %259 = vmatpush1.msra.mxu0 0.0
    %260 = vmatprep.subr.mxu0 0.0
    %261 = vmatpush1.msra.mxu0 0.0
    %262 = vmatprep.subr.mxu0 0.0
    %263 = vmatpush1.msra.mxu0 0.0
    %264 = vmatprep.subr.mxu0 0.0
    %265 = vmatpush1.msra.mxu0 0.0
    %266 = vmatprep.subr.mxu0 0.0
    %267 = vmatpush1.msra.mxu0 0.0
    %268 = vmatprep.subr.mxu0 0.0
    %269 = vmatpush1.msra.mxu0 %v207
    %270 = vmatprep.subr.mxu0 0.0
    %271 = vmatpush1.msra.mxu0 %v206
    %272 = vmatprep.subr.mxu0 0.0
    %273 = vmatpush2.msra.mxu0 0.0
    %274 = vmatprep.subr.mxu0 0.0
    %275 = vmatpush2.msra.mxu0 0.0
    %276 = vmatprep.subr.mxu0 0.0
    %277 = vmatpush2.msra.mxu0 0.0
    %278 = vmatprep.subr.mxu0 0.0
    %279 = vmatpush2.msra.mxu0 0.0
    %280 = vmatprep.subr.mxu0 0.0
    %281 = vmatpush2.msra.mxu0 0.0
    %282 = vmatprep.subr.mxu0 0.0
    %283 = vmatpush2.msra.mxu0 0.0
    %284 = vmatprep.subr.mxu0 0.0
    %285 = vmatpush2.msra.mxu0 0.0
    %286 = vmatprep.subr.mxu0 0.0
    %287 = vmatpush2.msra.mxu0 0.0
    %288 = vmatprep.subr.mxu0 0.0
    %289 = vmatpush2.msra.mxu0 0.0
    %290 = vmatprep.subr.mxu0 0.0
    %291 = vmatpush2.msra.mxu0 0.0
    %292 = vmatprep.subr.mxu0 0.0
    %293 = vmatpush2.msra.mxu0 0.0
    %294 = vmatprep.subr.mxu0 0.0
    %295 = vmatpush2.msra.mxu0 0.0
    %296 = vmatprep.subr.mxu0 0.0
    %297 = vmatpush2.msra.mxu0 0.0
    %298 = vmatprep.subr.mxu0 0.0
    %299 = vmatpush2.msra.mxu0 0.0
    %300 = vmatprep.subr.mxu0 0.0
    %301 = vmatpush2.msra.mxu0 0.0
    %302 = vmatprep.subr.mxu0 0.0
    %303 = vmatpush2.msra.mxu0 0.0
    %304 = vmatprep.mubr.f32.mxu0 0.0
    %305 = vmatmul.mubr.f32.gmra.mxu0 %v217
    %v306 = vpop.f32.mrf.mxu0
    %v307 = vadd.f32 %v213, %v306
    %v308 = vpop.f32.mrf.mxu0
    %309 = vmatprep.mubr.f32.mxu0 0.0
    %310 = vmatmul.mubr.f32.gmra.mxu0 %v220
    %v311 = vpop.f32.mrf.mxu0
    %v312 = vadd.f32 %v213, %v311
    %v313 = vpop.f32.mrf.mxu0
    %314 = vmatprep.mubr.f32.mxu0 0.0
    %315 = vmatmul.mubr.f32.gmra.mxu0 %v223
    %v316 = vpop.f32.mrf.mxu0
    %v317 = vadd.f32 %v213, %v316
    %v318 = vpop.f32.mrf.mxu0
    %319 = vmatprep.mubr.f32.mxu0 0.0
    %320 = vmatmul.mubr.f32.gmra.mxu0 %v226
    %v321 = vpop.f32.mrf.mxu0
    %v322 = vadd.f32 %v213, %v321
    %v323 = vpop.f32.mrf.mxu0
    %324 = vmatprep.mubr.f32.mxu0 0.0
    %325 = vmatmul.mubr.f32.gmra.mxu0 %v229
    %v326 = vpop.f32.mrf.mxu0
    %v327 = vadd.f32 %v213, %v326
    %v328 = vpop.f32.mrf.mxu0
    %329 = vmatprep.mubr.f32.mxu0 0.0
    %330 = vmatmul.mubr.f32.gmra.mxu0 %v232
    %v331 = vpop.f32.mrf.mxu0
    %v332 = vadd.f32 %v213, %v331
    %v333 = vpop.f32.mrf.mxu0
    %334 = vmatprep.mubr.f32.mxu0 0.0
    %335 = vmatmul.mubr.f32.gmra.mxu0 %v235
    %v336 = vpop.f32.mrf.mxu0
    %v337 = vadd.f32 %v213, %v336
    %v338 = vpop.f32.mrf.mxu0
    %339 = vmatprep.mubr.f32.mxu0 0.0
    %340 = vmatmul.mubr.f32.gmra.mxu0 %v238
    %v341 = vpop.f32.mrf.mxu0
    %v342 = vadd.f32 %v213, %v341
    %v343 = vpop.f32.mrf.mxu0
    %344 = vdwg.mxu0
    %v345 = vld [vmem:[%s3] sm:$0xff]
    %v346 = vld [vmem:[%s3 + $0x8] sm:$0xff]
    %v347 = vld [vmem:[%s3 + $0x10] sm:$0xff]
    %v348 = vld [vmem:[%s3 + $0x18] sm:$0xff]
    %v349 = vld [vmem:[%s3 + $0x20] sm:$0xff]
    %v350 = vld [vmem:[%s3 + $0x28] sm:$0xff]
    %v351 = vld [vmem:[%s3 + $0x30] sm:$0xff]
    %v352 = vld [vmem:[%s3 + $0x38] sm:$0xff]
    %354 = vset.pattern.permute.xlu0 0
    %355 = vperm.xlu0 %354, %v345
    %v356 = vpop.permute.xlu0 %355
    %359 = vset.pattern.permute.xlu0 0
    %360 = vperm.xlu0 %359, %v346
    %v361 = vpop.permute.xlu0 %360
    %364 = vset.pattern.permute.xlu0 0
    %365 = vperm.xlu0 %364, %v347
    %v366 = vpop.permute.xlu0 %365
    %369 = vset.pattern.permute.xlu0 0
    %370 = vperm.xlu0 %369, %v348
    %v371 = vpop.permute.xlu0 %370
    %374 = vset.pattern.permute.xlu0 0
    %375 = vperm.xlu0 %374, %v349
    %v376 = vpop.permute.xlu0 %375
    %379 = vset.pattern.permute.xlu0 0
    %380 = vperm.xlu0 %379, %v350
    %v381 = vpop.permute.xlu0 %380
    %384 = vset.pattern.permute.xlu0 0
    %385 = vperm.xlu0 %384, %v351
    %v386 = vpop.permute.xlu0 %385
    %389 = vset.pattern.permute.xlu0 0
    %390 = vperm.xlu0 %389, %v352
    %v391 = vpop.permute.xlu0 %390
    %v393 = vmul.f32 %v307, %v356
    %v394 = vmul.f32 %v312, %v361
    %v395 = vmul.f32 %v317, %v366
    %v396 = vmul.f32 %v322, %v371
    %v397 = vmul.f32 %v327, %v376
    %v398 = vmul.f32 %v332, %v381
    %v399 = vmul.f32 %v337, %v386
    %v400 = vmul.f32 %v342, %v391
    %v401 = vld [vmem:[%s5] sm:$0xff]
    %v402 = vld [vmem:[%s5 + $0x8] sm:$0xff]
    %v403 = vld [vmem:[%s5 + $0x10] sm:$0xff]
    %v404 = vld [vmem:[%s5 + $0x18] sm:$0xff]
    %v405 = vld [vmem:[%s5 + $0x20] sm:$0xff]
    %v406 = vld [vmem:[%s5 + $0x28] sm:$0xff]
    %v407 = vld [vmem:[%s5 + $0x30] sm:$0xff]
    %v408 = vld [vmem:[%s5 + $0x38] sm:$0xff]
    %v409 = vadd.f32 %v393, %v401
    %v410 = vadd.f32 %v394, %v402
    %v411 = vadd.f32 %v395, %v403
    %v412 = vadd.f32 %v396, %v404
    %v413 = vadd.f32 %v397, %v405
    %v414 = vadd.f32 %v398, %v406
    %v415 = vadd.f32 %v399, %v407
    %v416 = vadd.f32 %v400, %v408
    %v417 = vld [vmem:[%s7] sm:$0xff]
    %v418 = vld [vmem:[%s7 + $0x8] sm:$0xff]
    %v419 = vld [vmem:[%s7 + $0x10] sm:$0xff]
    %v420 = vld [vmem:[%s7 + $0x18] sm:$0xff]
    %v421 = vld [vmem:[%s7 + $0x20] sm:$0xff]
    %v422 = vld [vmem:[%s7 + $0x28] sm:$0xff]
    %v423 = vld [vmem:[%s7 + $0x30] sm:$0xff]
    %v424 = vld [vmem:[%s7 + $0x38] sm:$0xff]
    %v425 = vld [vmem:[%s7 + $0x40] sm:$0xff]
    %v426 = vld [vmem:[%s7 + $0x48] sm:$0xff]
    %v427 = vld [vmem:[%s7 + $0x50] sm:$0xff]
    %v428 = vld [vmem:[%s7 + $0x58] sm:$0xff]
    %v429 = vld [vmem:[%s7 + $0x60] sm:$0xff]
    %v430 = vld [vmem:[%s7 + $0x68] sm:$0xff]
    %v431 = vld [vmem:[%s7 + $0x70] sm:$0xff]
    %v432 = vld [vmem:[%s7 + $0x78] sm:$0xff]
    %v433 = vld [vmem:[%s9] sm:$0xff]
    %v434 = vld [vmem:[%s9 + $0x8] sm:$0xff]
    %v435 = vld [vmem:[%s9 + $0x10] sm:$0xff]
    %v436 = vld [vmem:[%s9 + $0x18] sm:$0xff]
    %v437 = vld [vmem:[%s9 + $0x20] sm:$0xff]
    %v438 = vld [vmem:[%s9 + $0x28] sm:$0xff]
    %v439 = vld [vmem:[%s9 + $0x30] sm:$0xff]
    %v440 = vld [vmem:[%s9 + $0x38] sm:$0xff]
    %v441 = vld [vmem:[%s9 + $0x40] sm:$0xff]
    %v442 = vld [vmem:[%s9 + $0x48] sm:$0xff]
    %v443 = vld [vmem:[%s9 + $0x50] sm:$0xff]
    %v444 = vld [vmem:[%s9 + $0x58] sm:$0xff]
    %v445 = vld [vmem:[%s9 + $0x60] sm:$0xff]
    %v446 = vld [vmem:[%s9 + $0x68] sm:$0xff]
    %v447 = vld [vmem:[%s9 + $0x70] sm:$0xff]
    %v448 = vld [vmem:[%s9 + $0x78] sm:$0xff]
    %v449 = vld [vmem:[%s9 + $0x80] sm:$0xff]
    %v450 = vld [vmem:[%s9 + $0x88] sm:$0xff]
    %v451 = vld [vmem:[%s9 + $0x90] sm:$0xff]
    %v452 = vld [vmem:[%s9 + $0x98] sm:$0xff]
    %v453 = vld [vmem:[%s9 + $0xa0] sm:$0xff]
    %v454 = vld [vmem:[%s9 + $0xa8] sm:$0xff]
    %v455 = vld [vmem:[%s9 + $0xb0] sm:$0xff]
    %v456 = vld [vmem:[%s9 + $0xb8] sm:$0xff]
    %v457 = vld [vmem:[%s9 + $0xc0] sm:$0xff]
    %v458 = vld [vmem:[%s9 + $0xc8] sm:$0xff]
    %v459 = vld [vmem:[%s9 + $0xd0] sm:$0xff]
    %v460 = vld [vmem:[%s9 + $0xd8] sm:$0xff]
    %v461 = vld [vmem:[%s9 + $0xe0] sm:$0xff]
    %v462 = vld [vmem:[%s9 + $0xe8] sm:$0xff]
    %v463 = vld [vmem:[%s9 + $0xf0] sm:$0xff]
    %v464 = vld [vmem:[%s9 + $0xf8] sm:$0xff]
    %v465 = vld [vmem:[#allocation7] sm:$0xff]
    %v466 = vld [vmem:[#allocation7 + $0x8] sm:$0xff]
    %v467 = vld [vmem:[#allocation7 + $0x10] sm:$0xff]
    %v468 = vld [vmem:[#allocation7 + $0x18] sm:$0xff]
    %v469 = vld [vmem:[%s19] sm:$0x1]
    %v471 = vlaneseq
    %v472 = vshrl.u32 %v471, 7
    %v473 = vsub.s32 0, %v472
    %v474 = vrot.slane %v469, %v473
    %vm476 = vcmask 261120
    %v478 = vsel %vm476, %v409, 0
    %v481 = vsel %vm476, %v410, 0
    %v484 = vsel %vm476, %v411, 0
    %v487 = vsel %vm476, %v412, 0
    %v490 = vsel %vm476, %v413, 0
    %v493 = vsel %vm476, %v414, 0
    %v496 = vsel %vm476, %v415, 0
    %v499 = vsel %vm476, %v416, 0
    %501 = vmatprep.subr.mxu0 0.0
    %502 = vmatpush1.msra.mxu0 0.0
    %503 = vmatprep.subr.mxu0 0.0
    %504 = vmatpush1.msra.mxu0 0.0
    %505 = vmatprep.subr.mxu0 0.0
    %506 = vmatpush1.msra.mxu0 0.0
    %507 = vmatprep.subr.mxu0 0.0
    %508 = vmatpush1.msra.mxu0 0.0
    %509 = vmatprep.subr.mxu0 0.0
    %510 = vmatpush1.msra.mxu0 0.0
    %511 = vmatprep.subr.mxu0 0.0
    %512 = vmatpush1.msra.mxu0 0.0
    %513 = vmatprep.subr.mxu0 0.0
    %514 = vmatpush1.msra.mxu0 0.0
    %515 = vmatprep.subr.mxu0 0.0
    %516 = vmatpush1.msra.mxu0 0.0
    %517 = vmatprep.subr.mxu0 0.0
    %518 = vmatpush1.msra.mxu0 0.0
    %519 = vmatprep.subr.mxu0 0.0
    %520 = vmatpush1.msra.mxu0 0.0
    %521 = vmatprep.subr.mxu0 0.0
    %522 = vmatpush1.msra.mxu0 0.0
    %523 = vmatprep.subr.mxu0 0.0
    %524 = vmatpush1.msra.mxu0 0.0
    %525 = vmatprep.subr.mxu0 0.0
    %526 = vmatpush1.msra.mxu0 %v468
    %527 = vmatprep.subr.mxu0 0.0
    %528 = vmatpush1.msra.mxu0 %v467
    %529 = vmatprep.subr.mxu0 0.0
    %530 = vmatpush1.msra.mxu0 %v466
    %531 = vmatprep.subr.mxu0 0.0
    %532 = vmatpush1.msra.mxu0 %v465
    %533 = vmatprep.subr.mxu0 0.0
    %534 = vmatpush2.msra.mxu0 0.0
    %535 = vmatprep.subr.mxu0 0.0
    %536 = vmatpush2.msra.mxu0 0.0
    %537 = vmatprep.subr.mxu0 0.0
    %538 = vmatpush2.msra.mxu0 0.0
    %539 = vmatprep.subr.mxu0 0.0
    %540 = vmatpush2.msra.mxu0 0.0
    %541 = vmatprep.subr.mxu0 0.0
    %542 = vmatpush2.msra.mxu0 0.0
    %543 = vmatprep.subr.mxu0 0.0
    %544 = vmatpush2.msra.mxu0 0.0
    %545 = vmatprep.subr.mxu0 0.0
    %546 = vmatpush2.msra.mxu0 0.0
    %547 = vmatprep.subr.mxu0 0.0
    %548 = vmatpush2.msra.mxu0 0.0
    %549 = vmatprep.subr.mxu0 0.0
    %550 = vmatpush2.msra.mxu0 0.0
    %551 = vmatprep.subr.mxu0 0.0
    %552 = vmatpush2.msra.mxu0 0.0
    %553 = vmatprep.subr.mxu0 0.0
    %554 = vmatpush2.msra.mxu0 0.0
    %555 = vmatprep.subr.mxu0 0.0
    %556 = vmatpush2.msra.mxu0 0.0
    %557 = vmatprep.subr.mxu0 0.0
    %558 = vmatpush2.msra.mxu0 0.0
    %559 = vmatprep.subr.mxu0 0.0
    %560 = vmatpush2.msra.mxu0 0.0
    %561 = vmatprep.subr.mxu0 0.0
    %562 = vmatpush2.msra.mxu0 0.0
    %563 = vmatprep.subr.mxu0 0.0
    %564 = vmatpush2.msra.mxu0 0.0
    %565 = vmatprep.mubr.f32.mxu0 0.0
    %566 = vmatmul.mubr.f32.gmra.mxu0 %v478
    %v567 = vpop.f32.mrf.mxu0
    %v568 = vadd.f32 %v474, %v567
    %v569 = vpop.f32.mrf.mxu0
    %570 = vmatprep.mubr.f32.mxu0 0.0
    %571 = vmatmul.mubr.f32.gmra.mxu0 %v481
    %v572 = vpop.f32.mrf.mxu0
    %v573 = vadd.f32 %v474, %v572
    %v574 = vpop.f32.mrf.mxu0
    %575 = vmatprep.mubr.f32.mxu0 0.0
    %576 = vmatmul.mubr.f32.gmra.mxu0 %v484
    %v577 = vpop.f32.mrf.mxu0
    %v578 = vadd.f32 %v474, %v577
    %v579 = vpop.f32.mrf.mxu0
    %580 = vmatprep.mubr.f32.mxu0 0.0
    %581 = vmatmul.mubr.f32.gmra.mxu0 %v487
    %v582 = vpop.f32.mrf.mxu0
    %v583 = vadd.f32 %v474, %v582
    %v584 = vpop.f32.mrf.mxu0
    %585 = vmatprep.mubr.f32.mxu0 0.0
    %586 = vmatmul.mubr.f32.gmra.mxu0 %v490
    %v587 = vpop.f32.mrf.mxu0
    %v588 = vadd.f32 %v474, %v587
    %v589 = vpop.f32.mrf.mxu0
    %590 = vmatprep.mubr.f32.mxu0 0.0
    %591 = vmatmul.mubr.f32.gmra.mxu0 %v493
    %v592 = vpop.f32.mrf.mxu0
    %v593 = vadd.f32 %v474, %v592
    %v594 = vpop.f32.mrf.mxu0
    %595 = vmatprep.mubr.f32.mxu0 0.0
    %596 = vmatmul.mubr.f32.gmra.mxu0 %v496
    %v597 = vpop.f32.mrf.mxu0
    %v598 = vadd.f32 %v474, %v597
    %v599 = vpop.f32.mrf.mxu0
    %600 = vmatprep.mubr.f32.mxu0 0.0
    %601 = vmatmul.mubr.f32.gmra.mxu0 %v499
    %v602 = vpop.f32.mrf.mxu0
    %v603 = vadd.f32 %v474, %v602
    %v604 = vpop.f32.mrf.mxu0
    %605 = vdwg.mxu0
    %v606 = vld [vmem:[#allocation8] sm:$0xff]
    %v607 = vld [vmem:[#allocation8 + $0x8] sm:$0xff]
    %v608 = vld [vmem:[#allocation8 + $0x10] sm:$0xff]
    %v609 = vld [vmem:[#allocation8 + $0x18] sm:$0xff]
    %v610 = vld [vmem:[%s23] sm:$0x1]
    %v612 = vlaneseq
    %v613 = vshrl.u32 %v612, 7
    %v614 = vsub.s32 0, %v613
    %v615 = vrot.slane %v610, %v614
    %617 = vmatprep.subr.mxu0 0.0
    %618 = vmatpush1.msra.mxu0 0.0
    %619 = vmatprep.subr.mxu0 0.0
    %620 = vmatpush1.msra.mxu0 0.0
    %621 = vmatprep.subr.mxu0 0.0
    %622 = vmatpush1.msra.mxu0 0.0
    %623 = vmatprep.subr.mxu0 0.0
    %624 = vmatpush1.msra.mxu0 0.0
    %625 = vmatprep.subr.mxu0 0.0
    %626 = vmatpush1.msra.mxu0 0.0
    %627 = vmatprep.subr.mxu0 0.0
    %628 = vmatpush1.msra.mxu0 0.0
    %629 = vmatprep.subr.mxu0 0.0
    %630 = vmatpush1.msra.mxu0 0.0
    %631 = vmatprep.subr.mxu0 0.0
    %632 = vmatpush1.msra.mxu0 0.0
    %633 = vmatprep.subr.mxu0 0.0
    %634 = vmatpush1.msra.mxu0 0.0
    %635 = vmatprep.subr.mxu0 0.0
    %636 = vmatpush1.msra.mxu0 0.0
    %637 = vmatprep.subr.mxu0 0.0
    %638 = vmatpush1.msra.mxu0 0.0
    %639 = vmatprep.subr.mxu0 0.0
    %640 = vmatpush1.msra.mxu0 0.0
    %641 = vmatprep.subr.mxu0 0.0
    %642 = vmatpush1.msra.mxu0 %v609
    %643 = vmatprep.subr.mxu0 0.0
    %644 = vmatpush1.msra.mxu0 %v608
    %645 = vmatprep.subr.mxu0 0.0
    %646 = vmatpush1.msra.mxu0 %v607
    %647 = vmatprep.subr.mxu0 0.0
    %648 = vmatpush1.msra.mxu0 %v606
    %649 = vmatprep.subr.mxu0 0.0
    %650 = vmatpush2.msra.mxu0 0.0
    %651 = vmatprep.subr.mxu0 0.0
    %652 = vmatpush2.msra.mxu0 0.0
    %653 = vmatprep.subr.mxu0 0.0
    %654 = vmatpush2.msra.mxu0 0.0
    %655 = vmatprep.subr.mxu0 0.0
    %656 = vmatpush2.msra.mxu0 0.0
    %657 = vmatprep.subr.mxu0 0.0
    %658 = vmatpush2.msra.mxu0 0.0
    %659 = vmatprep.subr.mxu0 0.0
    %660 = vmatpush2.msra.mxu0 0.0
    %661 = vmatprep.subr.mxu0 0.0
    %662 = vmatpush2.msra.mxu0 0.0
    %663 = vmatprep.subr.mxu0 0.0
    %664 = vmatpush2.msra.mxu0 0.0
    %665 = vmatprep.subr.mxu0 0.0
    %666 = vmatpush2.msra.mxu0 0.0
    %667 = vmatprep.subr.mxu0 0.0
    %668 = vmatpush2.msra.mxu0 0.0
    %669 = vmatprep.subr.mxu0 0.0
    %670 = vmatpush2.msra.mxu0 0.0
    %671 = vmatprep.subr.mxu0 0.0
    %672 = vmatpush2.msra.mxu0 0.0
    %673 = vmatprep.subr.mxu0 0.0
    %674 = vmatpush2.msra.mxu0 0.0
    %675 = vmatprep.subr.mxu0 0.0
    %676 = vmatpush2.msra.mxu0 0.0
    %677 = vmatprep.subr.mxu0 0.0
    %678 = vmatpush2.msra.mxu0 0.0
    %679 = vmatprep.subr.mxu0 0.0
    %680 = vmatpush2.msra.mxu0 0.0
    %681 = vmatprep.mubr.f32.mxu0 0.0
    %682 = vmatmul.mubr.f32.gmra.mxu0 %v478
    %v683 = vpop.f32.mrf.mxu0
    %v684 = vadd.f32 %v615, %v683
    %v685 = vpop.f32.mrf.mxu0
    %686 = vmatprep.mubr.f32.mxu0 0.0
    %687 = vmatmul.mubr.f32.gmra.mxu0 %v481
    %v688 = vpop.f32.mrf.mxu0
    %v689 = vadd.f32 %v615, %v688
    %v690 = vpop.f32.mrf.mxu0
    %691 = vmatprep.mubr.f32.mxu0 0.0
    %692 = vmatmul.mubr.f32.gmra.mxu0 %v484
    %v693 = vpop.f32.mrf.mxu0
    %v694 = vadd.f32 %v615, %v693
    %v695 = vpop.f32.mrf.mxu0
    %696 = vmatprep.mubr.f32.mxu0 0.0
    %697 = vmatmul.mubr.f32.gmra.mxu0 %v487
    %v698 = vpop.f32.mrf.mxu0
    %v699 = vadd.f32 %v615, %v698
    %v700 = vpop.f32.mrf.mxu0
    %701 = vmatprep.mubr.f32.mxu0 0.0
    %702 = vmatmul.mubr.f32.gmra.mxu0 %v490
    %v703 = vpop.f32.mrf.mxu0
    %v704 = vadd.f32 %v615, %v703
    %v705 = vpop.f32.mrf.mxu0
    %706 = vmatprep.mubr.f32.mxu0 0.0
    %707 = vmatmul.mubr.f32.gmra.mxu0 %v493
    %v708 = vpop.f32.mrf.mxu0
    %v709 = vadd.f32 %v615, %v708
    %v710 = vpop.f32.mrf.mxu0
    %711 = vmatprep.mubr.f32.mxu0 0.0
    %712 = vmatmul.mubr.f32.gmra.mxu0 %v496
    %v713 = vpop.f32.mrf.mxu0
    %v714 = vadd.f32 %v615, %v713
    %v715 = vpop.f32.mrf.mxu0
    %716 = vmatprep.mubr.f32.mxu0 0.0
    %717 = vmatmul.mubr.f32.gmra.mxu0 %v499
    %v718 = vpop.f32.mrf.mxu0
    %v719 = vadd.f32 %v615, %v718
    %v720 = vpop.f32.mrf.mxu0
    %721 = vdwg.mxu0
    %v722 = vld [vmem:[%s25] sm:$0xff]
    %v723 = vld [vmem:[%s25 + $0x8] sm:$0xff]
    %v724 = vld [vmem:[%s25 + $0x10] sm:$0xff]
    %v725 = vld [vmem:[%s25 + $0x18] sm:$0xff]
    %v726 = vld [vmem:[%s27] sm:$0x1]
    %v728 = vlaneseq
    %v729 = vshrl.u32 %v728, 7
    %v730 = vsub.s32 0, %v729
    %v731 = vrot.slane %v726, %v730
    %733 = vmatprep.subr.mxu0 0.0
    %734 = vmatpush1.msra.mxu0 0.0
    %735 = vmatprep.subr.mxu0 0.0
    %736 = vmatpush1.msra.mxu0 0.0
    %737 = vmatprep.subr.mxu0 0.0
    %738 = vmatpush1.msra.mxu0 0.0
    %739 = vmatprep.subr.mxu0 0.0
    %740 = vmatpush1.msra.mxu0 0.0
    %741 = vmatprep.subr.mxu0 0.0
    %742 = vmatpush1.msra.mxu0 0.0
    %743 = vmatprep.subr.mxu0 0.0
    %744 = vmatpush1.msra.mxu0 0.0
    %745 = vmatprep.subr.mxu0 0.0
    %746 = vmatpush1.msra.mxu0 0.0
    %747 = vmatprep.subr.mxu0 0.0
    %748 = vmatpush1.msra.mxu0 0.0
    %749 = vmatprep.subr.mxu0 0.0
    %750 = vmatpush1.msra.mxu0 0.0
    %751 = vmatprep.subr.mxu0 0.0
    %752 = vmatpush1.msra.mxu0 0.0
    %753 = vmatprep.subr.mxu0 0.0
    %754 = vmatpush1.msra.mxu0 0.0
    %755 = vmatprep.subr.mxu0 0.0
    %756 = vmatpush1.msra.mxu0 0.0
    %757 = vmatprep.subr.mxu0 0.0
    %758 = vmatpush1.msra.mxu0 %v725
    %759 = vmatprep.subr.mxu0 0.0
    %760 = vmatpush1.msra.mxu0 %v724
    %761 = vmatprep.subr.mxu0 0.0
    %762 = vmatpush1.msra.mxu0 %v723
    %763 = vmatprep.subr.mxu0 0.0
    %764 = vmatpush1.msra.mxu0 %v722
    %765 = vmatprep.subr.mxu0 0.0
    %766 = vmatpush2.msra.mxu0 0.0
    %767 = vmatprep.subr.mxu0 0.0
    %768 = vmatpush2.msra.mxu0 0.0
    %769 = vmatprep.subr.mxu0 0.0
    %770 = vmatpush2.msra.mxu0 0.0
    %771 = vmatprep.subr.mxu0 0.0
    %772 = vmatpush2.msra.mxu0 0.0
    %773 = vmatprep.subr.mxu0 0.0
    %774 = vmatpush2.msra.mxu0 0.0
    %775 = vmatprep.subr.mxu0 0.0
    %776 = vmatpush2.msra.mxu0 0.0
    %777 = vmatprep.subr.mxu0 0.0
    %778 = vmatpush2.msra.mxu0 0.0
    %779 = vmatprep.subr.mxu0 0.0
    %780 = vmatpush2.msra.mxu0 0.0
    %781 = vmatprep.subr.mxu0 0.0
    %782 = vmatpush2.msra.mxu0 0.0
    %783 = vmatprep.subr.mxu0 0.0
    %784 = vmatpush2.msra.mxu0 0.0
    %785 = vmatprep.subr.mxu0 0.0
    %786 = vmatpush2.msra.mxu0 0.0
    %787 = vmatprep.subr.mxu0 0.0
    %788 = vmatpush2.msra.mxu0 0.0
    %789 = vmatprep.subr.mxu0 0.0
    %790 = vmatpush2.msra.mxu0 0.0
    %791 = vmatprep.subr.mxu0 0.0
    %792 = vmatpush2.msra.mxu0 0.0
    %793 = vmatprep.subr.mxu0 0.0
    %794 = vmatpush2.msra.mxu0 0.0
    %795 = vmatprep.subr.mxu0 0.0
    %796 = vmatpush2.msra.mxu0 0.0
    %797 = vmatprep.mubr.f32.mxu0 0.0
    %798 = vmatmul.mubr.f32.gmra.mxu0 %v478
    %v799 = vpop.f32.mrf.mxu0
    %v800 = vadd.f32 %v731, %v799
    %v801 = vpop.f32.mrf.mxu0
    %802 = vmatprep.mubr.f32.mxu0 0.0
    %803 = vmatmul.mubr.f32.gmra.mxu0 %v481
    %v804 = vpop.f32.mrf.mxu0
    %v805 = vadd.f32 %v731, %v804
    %v806 = vpop.f32.mrf.mxu0
    %807 = vmatprep.mubr.f32.mxu0 0.0
    %808 = vmatmul.mubr.f32.gmra.mxu0 %v484
    %v809 = vpop.f32.mrf.mxu0
    %v810 = vadd.f32 %v731, %v809
    %v811 = vpop.f32.mrf.mxu0
    %812 = vmatprep.mubr.f32.mxu0 0.0
    %813 = vmatmul.mubr.f32.gmra.mxu0 %v487
    %v814 = vpop.f32.mrf.mxu0
    %v815 = vadd.f32 %v731, %v814
    %v816 = vpop.f32.mrf.mxu0
    %817 = vmatprep.mubr.f32.mxu0 0.0
    %818 = vmatmul.mubr.f32.gmra.mxu0 %v490
    %v819 = vpop.f32.mrf.mxu0
    %v820 = vadd.f32 %v731, %v819
    %v821 = vpop.f32.mrf.mxu0
    %822 = vmatprep.mubr.f32.mxu0 0.0
    %823 = vmatmul.mubr.f32.gmra.mxu0 %v493
    %v824 = vpop.f32.mrf.mxu0
    %v825 = vadd.f32 %v731, %v824
    %v826 = vpop.f32.mrf.mxu0
    %827 = vmatprep.mubr.f32.mxu0 0.0
    %828 = vmatmul.mubr.f32.gmra.mxu0 %v496
    %v829 = vpop.f32.mrf.mxu0
    %v830 = vadd.f32 %v731, %v829
    %v831 = vpop.f32.mrf.mxu0
    %832 = vmatprep.mubr.f32.mxu0 0.0
    %833 = vmatmul.mubr.f32.gmra.mxu0 %v499
    %v834 = vpop.f32.mrf.mxu0
    %v835 = vadd.f32 %v731, %v834
    %v836 = vpop.f32.mrf.mxu0
    %837 = vdwg.mxu0
    %v838 = vmul.f32 %v684, %v433
    %v839 = vmul.f32 %v689, %v434
    %v840 = vmul.f32 %v694, %v435
    %v841 = vmul.f32 %v699, %v436
    %v842 = vmul.f32 %v704, %v437
    %v843 = vmul.f32 %v709, %v438
    %v844 = vmul.f32 %v714, %v439
    %v845 = vmul.f32 %v719, %v440
    %v846 = vmul.f32 %v684, %v441
    %v847 = vmul.f32 %v689, %v442
    %v848 = vmul.f32 %v694, %v443
    %v849 = vmul.f32 %v699, %v444
    %v850 = vmul.f32 %v704, %v445
    %v851 = vmul.f32 %v709, %v446
    %v852 = vmul.f32 %v714, %v447
    %v853 = vmul.f32 %v719, %v448
    %v854 = vmul.f32 %v684, %v449
    %v855 = vmul.f32 %v689, %v450
    %v856 = vmul.f32 %v694, %v451
    %v857 = vmul.f32 %v699, %v452
    %v858 = vmul.f32 %v704, %v453
    %v859 = vmul.f32 %v709, %v454
    %v860 = vmul.f32 %v714, %v455
    %v861 = vmul.f32 %v719, %v456
    %v862 = vmul.f32 %v684, %v457
    %v863 = vmul.f32 %v689, %v458
    %v864 = vmul.f32 %v694, %v459
    %v865 = vmul.f32 %v699, %v460
    %v866 = vmul.f32 %v704, %v461
    %v867 = vmul.f32 %v709, %v462
    %v868 = vmul.f32 %v714, %v463
    %v869 = vmul.f32 %v719, %v464
    %v870 = vmul.f32 %v800, %v433
    %v871 = vmul.f32 %v805, %v434
    %v872 = vmul.f32 %v810, %v435
    %v873 = vmul.f32 %v815, %v436
    %v874 = vmul.f32 %v820, %v437
    %v875 = vmul.f32 %v825, %v438
    %v876 = vmul.f32 %v830, %v439
    %v877 = vmul.f32 %v835, %v440
    %v878 = vmul.f32 %v800, %v441
    %v879 = vmul.f32 %v805, %v442
    %v880 = vmul.f32 %v810, %v443
    %v881 = vmul.f32 %v815, %v444
    %v882 = vmul.f32 %v820, %v445
    %v883 = vmul.f32 %v825, %v446
    %v884 = vmul.f32 %v830, %v447
    %v885 = vmul.f32 %v835, %v448
    %v886 = vmul.f32 %v800, %v449
    %v887 = vmul.f32 %v805, %v450
    %v888 = vmul.f32 %v810, %v451
    %v889 = vmul.f32 %v815, %v452
    %v890 = vmul.f32 %v820, %v453
    %v891 = vmul.f32 %v825, %v454
    %v892 = vmul.f32 %v830, %v455
    %v893 = vmul.f32 %v835, %v456
    %v894 = vmul.f32 %v800, %v457
    %v895 = vmul.f32 %v805, %v458
    %v896 = vmul.f32 %v810, %v459
    %v897 = vmul.f32 %v815, %v460
    %v898 = vmul.f32 %v820, %v461
    %v899 = vmul.f32 %v825, %v462
    %v900 = vmul.f32 %v830, %v463
    %v901 = vmul.f32 %v835, %v464
    %v903 = vsel %vm476, %v568, 0
    %v906 = vsel %vm476, %v573, 0
    %v909 = vsel %vm476, %v578, 0
    %v912 = vsel %vm476, %v583, 0
    %v915 = vsel %vm476, %v588, 0
    %v918 = vsel %vm476, %v593, 0
    %v921 = vsel %vm476, %v598, 0
    %v924 = vsel %vm476, %v603, 0
    %v927 = vsel %vm476, %v838, 0
    %v930 = vsel %vm476, %v839, 0
    %v933 = vsel %vm476, %v840, 0
    %v936 = vsel %vm476, %v841, 0
    %v939 = vsel %vm476, %v842, 0
    %v942 = vsel %vm476, %v843, 0
    %v945 = vsel %vm476, %v844, 0
    %v948 = vsel %vm476, %v845, 0
    %v951 = vsel %vm476, %v846, 0
    %v954 = vsel %vm476, %v847, 0
    %v957 = vsel %vm476, %v848, 0
    %v960 = vsel %vm476, %v849, 0
    %v963 = vsel %vm476, %v850, 0
    %v966 = vsel %vm476, %v851, 0
    %v969 = vsel %vm476, %v852, 0
    %v972 = vsel %vm476, %v853, 0
    %v975 = vsel %vm476, %v854, 0
    %v978 = vsel %vm476, %v855, 0
    %v981 = vsel %vm476, %v856, 0
    %v984 = vsel %vm476, %v857, 0
    %v987 = vsel %vm476, %v858, 0
    %v990 = vsel %vm476, %v859, 0
    %v993 = vsel %vm476, %v860, 0
    %v996 = vsel %vm476, %v861, 0
    %v999 = vsel %vm476, %v862, 0
    %v1002 = vsel %vm476, %v863, 0
    %v1005 = vsel %vm476, %v864, 0
    %v1008 = vsel %vm476, %v865, 0
    %v1011 = vsel %vm476, %v866, 0
    %v1014 = vsel %vm476, %v867, 0
    %v1017 = vsel %vm476, %v868, 0
    %v1020 = vsel %vm476, %v869, 0
    %1022 = vmatprep.subr.mxu0 0.0
    %1023 = vmatpush1.xpose.msra.mxu0 %v972
    %1024 = vmatprep.subr.mxu0 0.0
    %1025 = vmatpush1.xpose.msra.mxu0 %v969
    %1026 = vmatprep.subr.mxu0 0.0
    %1027 = vmatpush1.xpose.msra.mxu0 %v966
    %1028 = vmatprep.subr.mxu0 0.0
    %1029 = vmatpush1.xpose.msra.mxu0 %v963
    %1030 = vmatprep.subr.mxu0 0.0
    %1031 = vmatpush1.xpose.msra.mxu0 %v960
    %1032 = vmatprep.subr.mxu0 0.0
    %1033 = vmatpush1.xpose.msra.mxu0 %v957
    %1034 = vmatprep.subr.mxu0 0.0
    %1035 = vmatpush1.xpose.msra.mxu0 %v954
    %1036 = vmatprep.subr.mxu0 0.0
    %1037 = vmatpush1.xpose.msra.mxu0 %v951
    %1038 = vmatprep.subr.mxu0 0.0
    %1039 = vmatpush1.xpose.msra.mxu0 %v948
    %1040 = vmatprep.subr.mxu0 0.0
    %1041 = vmatpush1.xpose.msra.mxu0 %v945
    %1042 = vmatprep.subr.mxu0 0.0
    %1043 = vmatpush1.xpose.msra.mxu0 %v942
    %1044 = vmatprep.subr.mxu0 0.0
    %1045 = vmatpush1.xpose.msra.mxu0 %v939
    %1046 = vmatprep.subr.mxu0 0.0
    %1047 = vmatpush1.xpose.msra.mxu0 %v936
    %1048 = vmatprep.subr.mxu0 0.0
    %1049 = vmatpush1.xpose.msra.mxu0 %v933
    %1050 = vmatprep.subr.mxu0 0.0
    %1051 = vmatpush1.xpose.msra.mxu0 %v930
    %1052 = vmatprep.subr.mxu0 0.0
    %1053 = vmatpush1.xpose.msra.mxu0 %v927
    %1054 = vmatprep.subr.mxu0 0.0
    %1055 = vmatpush2.xpose.msra.mxu0 %v1020
    %1056 = vmatprep.subr.mxu0 0.0
    %1057 = vmatpush2.xpose.msra.mxu0 %v1017
    %1058 = vmatprep.subr.mxu0 0.0
    %1059 = vmatpush2.xpose.msra.mxu0 %v1014
    %1060 = vmatprep.subr.mxu0 0.0
    %1061 = vmatpush2.xpose.msra.mxu0 %v1011
    %1062 = vmatprep.subr.mxu0 0.0
    %1063 = vmatpush2.xpose.msra.mxu0 %v1008
    %1064 = vmatprep.subr.mxu0 0.0
    %1065 = vmatpush2.xpose.msra.mxu0 %v1005
    %1066 = vmatprep.subr.mxu0 0.0
    %1067 = vmatpush2.xpose.msra.mxu0 %v1002
    %1068 = vmatprep.subr.mxu0 0.0
    %1069 = vmatpush2.xpose.msra.mxu0 %v999
    %1070 = vmatprep.subr.mxu0 0.0
    %1071 = vmatpush2.xpose.msra.mxu0 %v996
    %1072 = vmatprep.subr.mxu0 0.0
    %1073 = vmatpush2.xpose.msra.mxu0 %v993
    %1074 = vmatprep.subr.mxu0 0.0
    %1075 = vmatpush2.xpose.msra.mxu0 %v990
    %1076 = vmatprep.subr.mxu0 0.0
    %1077 = vmatpush2.xpose.msra.mxu0 %v987
    %1078 = vmatprep.subr.mxu0 0.0
    %1079 = vmatpush2.xpose.msra.mxu0 %v984
    %1080 = vmatprep.subr.mxu0 0.0
    %1081 = vmatpush2.xpose.msra.mxu0 %v981
    %1082 = vmatprep.subr.mxu0 0.0
    %1083 = vmatpush2.xpose.msra.mxu0 %v978
    %1084 = vmatprep.subr.mxu0 0.0
    %1085 = vmatpush2.xpose.msra.mxu0 %v975
    %1086 = vmatprep.mubr.f32.mxu0 0.0
    %1087 = vmatmul.mubr.f32.gmra.mxu0 %v903
    %v1088 = vpop.f32.mrf.mxu0
    %v1089 = vadd.f32 %v417, %v1088
    %v1090 = vpop.f32.mrf.mxu0
    %v1091 = vadd.f32 %v418, %v1090
    %1092 = vmatprep.mubr.f32.mxu0 0.0
    %1093 = vmatmul.mubr.f32.gmra.mxu0 %v906
    %v1094 = vpop.f32.mrf.mxu0
    %v1095 = vadd.f32 %v419, %v1094
    %v1096 = vpop.f32.mrf.mxu0
    %v1097 = vadd.f32 %v420, %v1096
    %1098 = vmatprep.mubr.f32.mxu0 0.0
    %1099 = vmatmul.mubr.f32.gmra.mxu0 %v909
    %v1100 = vpop.f32.mrf.mxu0
    %v1101 = vadd.f32 %v421, %v1100
    %v1102 = vpop.f32.mrf.mxu0
    %v1103 = vadd.f32 %v422, %v1102
    %1104 = vmatprep.mubr.f32.mxu0 0.0
    %1105 = vmatmul.mubr.f32.gmra.mxu0 %v912
    %v1106 = vpop.f32.mrf.mxu0
    %v1107 = vadd.f32 %v423, %v1106
    %v1108 = vpop.f32.mrf.mxu0
    %v1109 = vadd.f32 %v424, %v1108
    %1110 = vmatprep.mubr.f32.mxu0 0.0
    %1111 = vmatmul.mubr.f32.gmra.mxu0 %v915
    %v1112 = vpop.f32.mrf.mxu0
    %v1113 = vadd.f32 %v425, %v1112
    %v1114 = vpop.f32.mrf.mxu0
    %v1115 = vadd.f32 %v426, %v1114
    %1116 = vmatprep.mubr.f32.mxu0 0.0
    %1117 = vmatmul.mubr.f32.gmra.mxu0 %v918
    %v1118 = vpop.f32.mrf.mxu0
    %v1119 = vadd.f32 %v427, %v1118
    %v1120 = vpop.f32.mrf.mxu0
    %v1121 = vadd.f32 %v428, %v1120
    %1122 = vmatprep.mubr.f32.mxu0 0.0
    %1123 = vmatmul.mubr.f32.gmra.mxu0 %v921
    %v1124 = vpop.f32.mrf.mxu0
    %v1125 = vadd.f32 %v429, %v1124
    %v1126 = vpop.f32.mrf.mxu0
    %v1127 = vadd.f32 %v430, %v1126
    %1128 = vmatprep.mubr.f32.mxu0 0.0
    %1129 = vmatmul.mubr.f32.gmra.mxu0 %v924
    %v1130 = vpop.f32.mrf.mxu0
    %v1131 = vadd.f32 %v431, %v1130
    %v1132 = vpop.f32.mrf.mxu0
    %v1133 = vadd.f32 %v432, %v1132
    %1134 = vdwg.mxu0
    %v1135 = vmax.f32 %v1089, %v1091
    %1136 = vmax.xlane.f32.xlu0 %v1135
    %v1137 = vpop.xlane.xlu0 %1136
    %v1138 = vmax.f32 %v1095, %v1097
    %1139 = vmax.xlane.f32.xlu0 %v1138
    %v1140 = vpop.xlane.xlu0 %1139
    %v1141 = vmax.f32 %v1101, %v1103
    %1142 = vmax.xlane.f32.xlu0 %v1141
    %v1143 = vpop.xlane.xlu0 %1142
    %v1144 = vmax.f32 %v1107, %v1109
    %1145 = vmax.xlane.f32.xlu0 %v1144
    %v1146 = vpop.xlane.xlu0 %1145
    %v1147 = vmax.f32 %v1113, %v1115
    %1148 = vmax.xlane.f32.xlu0 %v1147
    %v1149 = vpop.xlane.xlu0 %1148
    %v1150 = vmax.f32 %v1119, %v1121
    %1151 = vmax.xlane.f32.xlu0 %v1150
    %v1152 = vpop.xlane.xlu0 %1151
    %v1153 = vmax.f32 %v1125, %v1127
    %1154 = vmax.xlane.f32.xlu0 %v1153
    %v1155 = vpop.xlane.xlu0 %1154
    %v1156 = vmax.f32 %v1131, %v1133
    %1157 = vmax.xlane.f32.xlu0 %v1156
    %v1158 = vpop.xlane.xlu0 %1157
    %v1159 = vsub.f32 %v1089, %v1137
    %v1160 = vsub.f32 %v1091, %v1137
    %v1161 = vsub.f32 %v1095, %v1140
    %v1162 = vsub.f32 %v1097, %v1140
    %v1163 = vsub.f32 %v1101, %v1143
    %v1164 = vsub.f32 %v1103, %v1143
    %v1165 = vsub.f32 %v1107, %v1146
    %v1166 = vsub.f32 %v1109, %v1146
    %v1167 = vsub.f32 %v1113, %v1149
    %v1168 = vsub.f32 %v1115, %v1149
    %v1169 = vsub.f32 %v1119, %v1152
    %v1170 = vsub.f32 %v1121, %v1152
    %v1171 = vsub.f32 %v1125, %v1155
    %v1172 = vsub.f32 %v1127, %v1155
    %v1173 = vsub.f32 %v1131, %v1158
    %v1174 = vsub.f32 %v1133, %v1158
    %v1175 = vmul.f32 %v1159, 1.442695
    %v1176 = vpow.pop %v1175
    %v1177 = vmul.f32 %v1160, 1.442695
    %v1178 = vpow.pop %v1177
    %v1179 = vmul.f32 %v1161, 1.442695
    %v1180 = vpow.pop %v1179
    %v1181 = vmul.f32 %v1162, 1.442695
    %v1182 = vpow.pop %v1181
    %v1183 = vmul.f32 %v1163, 1.442695
    %v1184 = vpow.pop %v1183
    %v1185 = vmul.f32 %v1164, 1.442695
    %v1186 = vpow.pop %v1185
    %v1187 = vmul.f32 %v1165, 1.442695
    %v1188 = vpow.pop %v1187
    %v1189 = vmul.f32 %v1166, 1.442695
    %v1190 = vpow.pop %v1189
    %v1191 = vmul.f32 %v1167, 1.442695
    %v1192 = vpow.pop %v1191
    %v1193 = vmul.f32 %v1168, 1.442695
    %v1194 = vpow.pop %v1193
    %v1195 = vmul.f32 %v1169, 1.442695
    %v1196 = vpow.pop %v1195
    %v1197 = vmul.f32 %v1170, 1.442695
    %v1198 = vpow.pop %v1197
    %v1199 = vmul.f32 %v1171, 1.442695
    %v1200 = vpow.pop %v1199
    %v1201 = vmul.f32 %v1172, 1.442695
    %v1202 = vpow.pop %v1201
    %v1203 = vmul.f32 %v1173, 1.442695
    %v1204 = vpow.pop %v1203
    %v1205 = vmul.f32 %v1174, 1.442695
    %v1206 = vpow.pop %v1205
    %1207 = vmatprep.subr.mxu0 0.0
    %1208 = vmatpush1.msra.mxu0 %v885
    %1209 = vmatprep.subr.mxu0 0.0
    %1210 = vmatpush1.msra.mxu0 %v884
    %1211 = vmatprep.subr.mxu0 0.0
    %1212 = vmatpush1.msra.mxu0 %v883
    %1213 = vmatprep.subr.mxu0 0.0
    %1214 = vmatpush1.msra.mxu0 %v882
    %1215 = vmatprep.subr.mxu0 0.0
    %1216 = vmatpush1.msra.mxu0 %v881
    %1217 = vmatprep.subr.mxu0 0.0
    %1218 = vmatpush1.msra.mxu0 %v880
    %1219 = vmatprep.subr.mxu0 0.0
    %1220 = vmatpush1.msra.mxu0 %v879
    %1221 = vmatprep.subr.mxu0 0.0
    %1222 = vmatpush1.msra.mxu0 %v878
    %1223 = vmatprep.subr.mxu0 0.0
    %1224 = vmatpush1.msra.mxu0 %v877
    %1225 = vmatprep.subr.mxu0 0.0
    %1226 = vmatpush1.msra.mxu0 %v876
    %1227 = vmatprep.subr.mxu0 0.0
    %1228 = vmatpush1.msra.mxu0 %v875
    %1229 = vmatprep.subr.mxu0 0.0
    %1230 = vmatpush1.msra.mxu0 %v874
    %1231 = vmatprep.subr.mxu0 0.0
    %1232 = vmatpush1.msra.mxu0 %v873
    %1233 = vmatprep.subr.mxu0 0.0
    %1234 = vmatpush1.msra.mxu0 %v872
    %1235 = vmatprep.subr.mxu0 0.0
    %1236 = vmatpush1.msra.mxu0 %v871
    %1237 = vmatprep.subr.mxu0 0.0
    %1238 = vmatpush1.msra.mxu0 %v870
    %1239 = vmatprep.subr.mxu0 0.0
    %1240 = vmatpush2.msra.mxu0 %v901
    %1241 = vmatprep.subr.mxu0 0.0
    %1242 = vmatpush2.msra.mxu0 %v900
    %1243 = vmatprep.subr.mxu0 0.0
    %1244 = vmatpush2.msra.mxu0 %v899
    %1245 = vmatprep.subr.mxu0 0.0
    %1246 = vmatpush2.msra.mxu0 %v898
    %1247 = vmatprep.subr.mxu0 0.0
    %1248 = vmatpush2.msra.mxu0 %v897
    %1249 = vmatprep.subr.mxu0 0.0
    %1250 = vmatpush2.msra.mxu0 %v896
    %1251 = vmatprep.subr.mxu0 0.0
    %1252 = vmatpush2.msra.mxu0 %v895
    %1253 = vmatprep.subr.mxu0 0.0
    %1254 = vmatpush2.msra.mxu0 %v894
    %1255 = vmatprep.subr.mxu0 0.0
    %1256 = vmatpush2.msra.mxu0 %v893
    %1257 = vmatprep.subr.mxu0 0.0
    %1258 = vmatpush2.msra.mxu0 %v892
    %1259 = vmatprep.subr.mxu0 0.0
    %1260 = vmatpush2.msra.mxu0 %v891
    %1261 = vmatprep.subr.mxu0 0.0
    %1262 = vmatpush2.msra.mxu0 %v890
    %1263 = vmatprep.subr.mxu0 0.0
    %1264 = vmatpush2.msra.mxu0 %v889
    %1265 = vmatprep.subr.mxu0 0.0
    %1266 = vmatpush2.msra.mxu0 %v888
    %1267 = vmatprep.subr.mxu0 0.0
    %1268 = vmatpush2.msra.mxu0 %v887
    %1269 = vmatprep.subr.mxu0 0.0
    %1270 = vmatpush2.msra.mxu0 %v886
    %1271 = vmatprep.mubr.f32.mxu0 %v1178
    %1272 = vmatmul.mubr.f32.gmra.mxu0 %v1176
    %v1273 = vpop.f32.mrf.mxu0
    %v1274 = vadd.f32 0.0, %v1273
    %v1275 = vpop.f32.mrf.mxu0
    %1276 = vmatprep.mubr.f32.mxu0 %v1182
    %1277 = vmatmul.mubr.f32.gmra.mxu0 %v1180
    %v1278 = vpop.f32.mrf.mxu0
    %v1279 = vadd.f32 0.0, %v1278
    %v1280 = vpop.f32.mrf.mxu0
    %1281 = vmatprep.mubr.f32.mxu0 %v1186
    %1282 = vmatmul.mubr.f32.gmra.mxu0 %v1184
    %v1283 = vpop.f32.mrf.mxu0
    %v1284 = vadd.f32 0.0, %v1283
    %v1285 = vpop.f32.mrf.mxu0
    %1286 = vmatprep.mubr.f32.mxu0 %v1190
    %1287 = vmatmul.mubr.f32.gmra.mxu0 %v1188
    %v1288 = vpop.f32.mrf.mxu0
    %v1289 = vadd.f32 0.0, %v1288
    %v1290 = vpop.f32.mrf.mxu0
    %1291 = vmatprep.mubr.f32.mxu0 %v1194
    %1292 = vmatmul.mubr.f32.gmra.mxu0 %v1192
    %v1293 = vpop.f32.mrf.mxu0
    %v1294 = vadd.f32 0.0, %v1293
    %v1295 = vpop.f32.mrf.mxu0
    %1296 = vmatprep.mubr.f32.mxu0 %v1198
    %1297 = vmatmul.mubr.f32.gmra.mxu0 %v1196
    %v1298 = vpop.f32.mrf.mxu0
    %v1299 = vadd.f32 0.0, %v1298
    %v1300 = vpop.f32.mrf.mxu0
    %1301 = vmatprep.mubr.f32.mxu0 %v1202
    %1302 = vmatmul.mubr.f32.gmra.mxu0 %v1200
    %v1303 = vpop.f32.mrf.mxu0
    %v1304 = vadd.f32 0.0, %v1303
    %v1305 = vpop.f32.mrf.mxu0
    %1306 = vmatprep.mubr.f32.mxu0 %v1206
    %1307 = vmatmul.mubr.f32.gmra.mxu0 %v1204
    %v1308 = vpop.f32.mrf.mxu0
    %v1309 = vadd.f32 0.0, %v1308
    %v1310 = vpop.f32.mrf.mxu0
    %1311 = vdwg.mxu0
    %1312 = vmatprep.subr.mxu0 0.0
    %1313 = vmatpush1.msra.mxu0 %v448
    %1314 = vmatprep.subr.mxu0 0.0
    %1315 = vmatpush1.msra.mxu0 %v447
    %1316 = vmatprep.subr.mxu0 0.0
    %1317 = vmatpush1.msra.mxu0 %v446
    %1318 = vmatprep.subr.mxu0 0.0
    %1319 = vmatpush1.msra.mxu0 %v445
    %1320 = vmatprep.subr.mxu0 0.0
    %1321 = vmatpush1.msra.mxu0 %v444
    %1322 = vmatprep.subr.mxu0 0.0
    %1323 = vmatpush1.msra.mxu0 %v443
    %1324 = vmatprep.subr.mxu0 0.0
    %1325 = vmatpush1.msra.mxu0 %v442
    %1326 = vmatprep.subr.mxu0 0.0
    %1327 = vmatpush1.msra.mxu0 %v441
    %1328 = vmatprep.subr.mxu0 0.0
    %1329 = vmatpush1.msra.mxu0 %v440
    %1330 = vmatprep.subr.mxu0 0.0
    %1331 = vmatpush1.msra.mxu0 %v439
    %1332 = vmatprep.subr.mxu0 0.0
    %1333 = vmatpush1.msra.mxu0 %v438
    %1334 = vmatprep.subr.mxu0 0.0
    %1335 = vmatpush1.msra.mxu0 %v437
    %1336 = vmatprep.subr.mxu0 0.0
    %1337 = vmatpush1.msra.mxu0 %v436
    %1338 = vmatprep.subr.mxu0 0.0
    %1339 = vmatpush1.msra.mxu0 %v435
    %1340 = vmatprep.subr.mxu0 0.0
    %1341 = vmatpush1.msra.mxu0 %v434
    %1342 = vmatprep.subr.mxu0 0.0
    %1343 = vmatpush1.msra.mxu0 %v433
    %1344 = vmatprep.subr.mxu0 0.0
    %1345 = vmatpush2.msra.mxu0 %v464
    %1346 = vmatprep.subr.mxu0 0.0
    %1347 = vmatpush2.msra.mxu0 %v463
    %1348 = vmatprep.subr.mxu0 0.0
    %1349 = vmatpush2.msra.mxu0 %v462
    %1350 = vmatprep.subr.mxu0 0.0
    %1351 = vmatpush2.msra.mxu0 %v461
    %1352 = vmatprep.subr.mxu0 0.0
    %1353 = vmatpush2.msra.mxu0 %v460
    %1354 = vmatprep.subr.mxu0 0.0
    %1355 = vmatpush2.msra.mxu0 %v459
    %1356 = vmatprep.subr.mxu0 0.0
    %1357 = vmatpush2.msra.mxu0 %v458
    %1358 = vmatprep.subr.mxu0 0.0
    %1359 = vmatpush2.msra.mxu0 %v457
    %1360 = vmatprep.subr.mxu0 0.0
    %1361 = vmatpush2.msra.mxu0 %v456
    %1362 = vmatprep.subr.mxu0 0.0
    %1363 = vmatpush2.msra.mxu0 %v455
    %1364 = vmatprep.subr.mxu0 0.0
    %1365 = vmatpush2.msra.mxu0 %v454
    %1366 = vmatprep.subr.mxu0 0.0
    %1367 = vmatpush2.msra.mxu0 %v453
    %1368 = vmatprep.subr.mxu0 0.0
    %1369 = vmatpush2.msra.mxu0 %v452
    %1370 = vmatprep.subr.mxu0 0.0
    %1371 = vmatpush2.msra.mxu0 %v451
    %1372 = vmatprep.subr.mxu0 0.0
    %1373 = vmatpush2.msra.mxu0 %v450
    %1374 = vmatprep.subr.mxu0 0.0
    %1375 = vmatpush2.msra.mxu0 %v449
    %1376 = vmatprep.mubr.f32.mxu0 %v1178
    %1377 = vmatmul.mubr.f32.gmra.mxu0 %v1176
    %v1378 = vpop.f32.mrf.mxu0
    %v1379 = vadd.f32 0.0, %v1378
    %v1380 = vpop.f32.mrf.mxu0
    %1381 = vmatprep.mubr.f32.mxu0 %v1182
    %1382 = vmatmul.mubr.f32.gmra.mxu0 %v1180
    %v1383 = vpop.f32.mrf.mxu0
    %v1384 = vadd.f32 0.0, %v1383
    %v1385 = vpop.f32.mrf.mxu0
    %1386 = vmatprep.mubr.f32.mxu0 %v1186
    %1387 = vmatmul.mubr.f32.gmra.mxu0 %v1184
    %v1388 = vpop.f32.mrf.mxu0
    %v1389 = vadd.f32 0.0, %v1388
    %v1390 = vpop.f32.mrf.mxu0
    %1391 = vmatprep.mubr.f32.mxu0 %v1190
    %1392 = vmatmul.mubr.f32.gmra.mxu0 %v1188
    %v1393 = vpop.f32.mrf.mxu0
    %v1394 = vadd.f32 0.0, %v1393
    %v1395 = vpop.f32.mrf.mxu0
    %1396 = vmatprep.mubr.f32.mxu0 %v1194
    %1397 = vmatmul.mubr.f32.gmra.mxu0 %v1192
    %v1398 = vpop.f32.mrf.mxu0
    %v1399 = vadd.f32 0.0, %v1398
    %v1400 = vpop.f32.mrf.mxu0
    %1401 = vmatprep.mubr.f32.mxu0 %v1198
    %1402 = vmatmul.mubr.f32.gmra.mxu0 %v1196
    %v1403 = vpop.f32.mrf.mxu0
    %v1404 = vadd.f32 0.0, %v1403
    %v1405 = vpop.f32.mrf.mxu0
    %1406 = vmatprep.mubr.f32.mxu0 %v1202
    %1407 = vmatmul.mubr.f32.gmra.mxu0 %v1200
    %v1408 = vpop.f32.mrf.mxu0
    %v1409 = vadd.f32 0.0, %v1408
    %v1410 = vpop.f32.mrf.mxu0
    %1411 = vmatprep.mubr.f32.mxu0 %v1206
    %1412 = vmatmul.mubr.f32.gmra.mxu0 %v1204
    %v1413 = vpop.f32.mrf.mxu0
    %v1414 = vadd.f32 0.0, %v1413
    %v1415 = vpop.f32.mrf.mxu0
    %1416 = vdwg.mxu0
    %v1417 = vrcp.pop %v1379
    %v1418 = vrcp.pop %v1384
    %v1419 = vrcp.pop %v1389
    %v1420 = vrcp.pop %v1394
    %v1421 = vrcp.pop %v1399
    %v1422 = vrcp.pop %v1404
    %v1423 = vrcp.pop %v1409
    %v1424 = vrcp.pop %v1414
    %v1425 = vmul.f32 %v1274, %v1417
    %v1426 = vmul.f32 %v1279, %v1418
    %v1427 = vmul.f32 %v1284, %v1419
    %v1428 = vmul.f32 %v1289, %v1420
    %v1429 = vmul.f32 %v1294, %v1421
    %v1430 = vmul.f32 %v1299, %v1422
    %v1431 = vmul.f32 %v1304, %v1423
    %v1432 = vmul.f32 %v1309, %v1424
    %v1433 = vld [vmem:[%s29] sm:$0xff]
    %v1434 = vld [vmem:[%s29 + $0x8] sm:$0xff]
    %v1435 = vld [vmem:[%s29 + $0x10] sm:$0xff]
    %v1436 = vld [vmem:[%s29 + $0x18] sm:$0xff]
    %v1437 = vld [vmem:[%s31] sm:$0x1]
    %v1439 = vlaneseq
    %v1440 = vshrl.u32 %v1439, 7
    %v1441 = vsub.s32 0, %v1440
    %v1442 = vrot.slane %v1437, %v1441
    %v1445 = vsel %vm476, %v1425, 0
    %v1448 = vsel %vm476, %v1426, 0
    %v1451 = vsel %vm476, %v1427, 0
    %v1454 = vsel %vm476, %v1428, 0
    %v1457 = vsel %vm476, %v1429, 0
    %v1460 = vsel %vm476, %v1430, 0
    %v1463 = vsel %vm476, %v1431, 0
    %v1466 = vsel %vm476, %v1432, 0
    %1468 = vmatprep.subr.mxu0 0.0
    %1469 = vmatpush1.msra.mxu0 0.0
    %1470 = vmatprep.subr.mxu0 0.0
    %1471 = vmatpush1.msra.mxu0 0.0
    %1472 = vmatprep.subr.mxu0 0.0
    %1473 = vmatpush1.msra.mxu0 0.0
    %1474 = vmatprep.subr.mxu0 0.0
    %1475 = vmatpush1.msra.mxu0 0.0
    %1476 = vmatprep.subr.mxu0 0.0
    %1477 = vmatpush1.msra.mxu0 0.0
    %1478 = vmatprep.subr.mxu0 0.0
    %1479 = vmatpush1.msra.mxu0 0.0
    %1480 = vmatprep.subr.mxu0 0.0
    %1481 = vmatpush1.msra.mxu0 0.0
    %1482 = vmatprep.subr.mxu0 0.0
    %1483 = vmatpush1.msra.mxu0 0.0
    %1484 = vmatprep.subr.mxu0 0.0
    %1485 = vmatpush1.msra.mxu0 0.0
    %1486 = vmatprep.subr.mxu0 0.0
    %1487 = vmatpush1.msra.mxu0 0.0
    %1488 = vmatprep.subr.mxu0 0.0
    %1489 = vmatpush1.msra.mxu0 0.0
    %1490 = vmatprep.subr.mxu0 0.0
    %1491 = vmatpush1.msra.mxu0 0.0
    %1492 = vmatprep.subr.mxu0 0.0
    %1493 = vmatpush1.msra.mxu0 %v1436
    %1494 = vmatprep.subr.mxu0 0.0
    %1495 = vmatpush1.msra.mxu0 %v1435
    %1496 = vmatprep.subr.mxu0 0.0
    %1497 = vmatpush1.msra.mxu0 %v1434
    %1498 = vmatprep.subr.mxu0 0.0
    %1499 = vmatpush1.msra.mxu0 %v1433
    %1500 = vmatprep.subr.mxu0 0.0
    %1501 = vmatpush2.msra.mxu0 0.0
    %1502 = vmatprep.subr.mxu0 0.0
    %1503 = vmatpush2.msra.mxu0 0.0
    %1504 = vmatprep.subr.mxu0 0.0
    %1505 = vmatpush2.msra.mxu0 0.0
    %1506 = vmatprep.subr.mxu0 0.0
    %1507 = vmatpush2.msra.mxu0 0.0
    %1508 = vmatprep.subr.mxu0 0.0
    %1509 = vmatpush2.msra.mxu0 0.0
    %1510 = vmatprep.subr.mxu0 0.0
    %1511 = vmatpush2.msra.mxu0 0.0
    %1512 = vmatprep.subr.mxu0 0.0
    %1513 = vmatpush2.msra.mxu0 0.0
    %1514 = vmatprep.subr.mxu0 0.0
    %1515 = vmatpush2.msra.mxu0 0.0
    %1516 = vmatprep.subr.mxu0 0.0
    %1517 = vmatpush2.msra.mxu0 0.0
    %1518 = vmatprep.subr.mxu0 0.0
    %1519 = vmatpush2.msra.mxu0 0.0
    %1520 = vmatprep.subr.mxu0 0.0
    %1521 = vmatpush2.msra.mxu0 0.0
    %1522 = vmatprep.subr.mxu0 0.0
    %1523 = vmatpush2.msra.mxu0 0.0
    %1524 = vmatprep.subr.mxu0 0.0
    %1525 = vmatpush2.msra.mxu0 0.0
    %1526 = vmatprep.subr.mxu0 0.0
    %1527 = vmatpush2.msra.mxu0 0.0
    %1528 = vmatprep.subr.mxu0 0.0
    %1529 = vmatpush2.msra.mxu0 0.0
    %1530 = vmatprep.subr.mxu0 0.0
    %1531 = vmatpush2.msra.mxu0 0.0
    %1532 = vmatprep.mubr.f32.mxu0 0.0
    %1533 = vmatmul.mubr.f32.gmra.mxu0 %v1445
    %v1534 = vpop.f32.mrf.mxu0
    %v1535 = vadd.f32 %v1442, %v1534
    %v1536 = vpop.f32.mrf.mxu0
    %1537 = vmatprep.mubr.f32.mxu0 0.0
    %1538 = vmatmul.mubr.f32.gmra.mxu0 %v1448
    %v1539 = vpop.f32.mrf.mxu0
    %v1540 = vadd.f32 %v1442, %v1539
    %v1541 = vpop.f32.mrf.mxu0
    %1542 = vmatprep.mubr.f32.mxu0 0.0
    %1543 = vmatmul.mubr.f32.gmra.mxu0 %v1451
    %v1544 = vpop.f32.mrf.mxu0
    %v1545 = vadd.f32 %v1442, %v1544
    %v1546 = vpop.f32.mrf.mxu0
    %1547 = vmatprep.mubr.f32.mxu0 0.0
    %1548 = vmatmul.mubr.f32.gmra.mxu0 %v1454
    %v1549 = vpop.f32.mrf.mxu0
    %v1550 = vadd.f32 %v1442, %v1549
    %v1551 = vpop.f32.mrf.mxu0
    %1552 = vmatprep.mubr.f32.mxu0 0.0
    %1553 = vmatmul.mubr.f32.gmra.mxu0 %v1457
    %v1554 = vpop.f32.mrf.mxu0
    %v1555 = vadd.f32 %v1442, %v1554
    %v1556 = vpop.f32.mrf.mxu0
    %1557 = vmatprep.mubr.f32.mxu0 0.0
    %1558 = vmatmul.mubr.f32.gmra.mxu0 %v1460
    %v1559 = vpop.f32.mrf.mxu0
    %v1560 = vadd.f32 %v1442, %v1559
    %v1561 = vpop.f32.mrf.mxu0
    %1562 = vmatprep.mubr.f32.mxu0 0.0
    %1563 = vmatmul.mubr.f32.gmra.mxu0 %v1463
    %v1564 = vpop.f32.mrf.mxu0
    %v1565 = vadd.f32 %v1442, %v1564
    %v1566 = vpop.f32.mrf.mxu0
    %1567 = vmatprep.mubr.f32.mxu0 0.0
    %1568 = vmatmul.mubr.f32.gmra.mxu0 %v1466
    %v1569 = vpop.f32.mrf.mxu0
    %v1570 = vadd.f32 %v1442, %v1569
    %v1571 = vpop.f32.mrf.mxu0
    %1572 = vdwg.mxu0
    %v1573 = vadd.f32 %v409, %v1535
    %v1574 = vadd.f32 %v410, %v1540
    %v1575 = vadd.f32 %v411, %v1545
    %v1576 = vadd.f32 %v412, %v1550
    %v1577 = vadd.f32 %v413, %v1555
    %v1578 = vadd.f32 %v414, %v1560
    %v1579 = vadd.f32 %v415, %v1565
    %v1580 = vadd.f32 %v416, %v1570
    %v1581 = vld [vmem:[%s33] sm:$0x1]
    %v1582 = vld [vmem:[%s35] sm:$0x1]
    %v1583 = vsel %vm476, %v1573, 0.0
    %1584 = vadd.xlane.f32.xlu0 %v1583
    %v1585 = vpop.xlane.xlu0 %1584
    %v1586 = vsel %vm476, %v1574, 0.0
    %1587 = vadd.xlane.f32.xlu0 %v1586
    %v1588 = vpop.xlane.xlu0 %1587
    %v1589 = vsel %vm476, %v1575, 0.0
    %1590 = vadd.xlane.f32.xlu0 %v1589
    %v1591 = vpop.xlane.xlu0 %1590
    %v1592 = vsel %vm476, %v1576, 0.0
    %1593 = vadd.xlane.f32.xlu0 %v1592
    %v1594 = vpop.xlane.xlu0 %1593
    %v1595 = vsel %vm476, %v1577, 0.0
    %1596 = vadd.xlane.f32.xlu0 %v1595
    %v1597 = vpop.xlane.xlu0 %1596
    %v1598 = vsel %vm476, %v1578, 0.0
    %1599 = vadd.xlane.f32.xlu0 %v1598
    %v1600 = vpop.xlane.xlu0 %1599
    %v1601 = vsel %vm476, %v1579, 0.0
    %1602 = vadd.xlane.f32.xlu0 %v1601
    %v1603 = vpop.xlane.xlu0 %1602
    %v1604 = vsel %vm476, %v1580, 0.0
    %1605 = vadd.xlane.f32.xlu0 %v1604
    %v1606 = vpop.xlane.xlu0 %1605
    %v1607 = vrcp.pop 32.0
    %v1608 = vmul.f32 %v1585, %v1607
    %v1609 = vmul.f32 %v1588, %v1607
    %v1610 = vmul.f32 %v1591, %v1607
    %v1611 = vmul.f32 %v1594, %v1607
    %v1612 = vmul.f32 %v1597, %v1607
    %v1613 = vmul.f32 %v1600, %v1607
    %v1614 = vmul.f32 %v1603, %v1607
    %v1615 = vmul.f32 %v1606, %v1607
    %v1616 = vsub.f32 %v1573, %v1608
    %v1617 = vsub.f32 %v1574, %v1609
    %v1618 = vsub.f32 %v1575, %v1610
    %v1619 = vsub.f32 %v1576, %v1611
    %v1620 = vsub.f32 %v1577, %v1612
    %v1621 = vsub.f32 %v1578, %v1613
    %v1622 = vsub.f32 %v1579, %v1614
    %v1623 = vsub.f32 %v1580, %v1615
    %v1624 = vmul.f32 %v1616, %v1616
    %v1625 = vmul.f32 %v1617, %v1617
    %v1626 = vmul.f32 %v1618, %v1618
    %v1627 = vmul.f32 %v1619, %v1619
    %v1628 = vmul.f32 %v1620, %v1620
    %v1629 = vmul.f32 %v1621, %v1621
    %v1630 = vmul.f32 %v1622, %v1622
    %v1631 = vmul.f32 %v1623, %v1623
    %v1632 = vsel %vm476, %v1624, 0.0
    %1633 = vadd.xlane.f32.xlu0 %v1632
    %v1634 = vpop.xlane.xlu0 %1633
    %v1635 = vsel %vm476, %v1625, 0.0
    %1636 = vadd.xlane.f32.xlu0 %v1635
    %v1637 = vpop.xlane.xlu0 %1636
    %v1638 = vsel %vm476, %v1626, 0.0
    %1639 = vadd.xlane.f32.xlu0 %v1638
    %v1640 = vpop.xlane.xlu0 %1639
    %v1641 = vsel %vm476, %v1627, 0.0
    %1642 = vadd.xlane.f32.xlu0 %v1641
    %v1643 = vpop.xlane.xlu0 %1642
    %v1644 = vsel %vm476, %v1628, 0.0
    %1645 = vadd.xlane.f32.xlu0 %v1644
    %v1646 = vpop.xlane.xlu0 %1645
    %v1647 = vsel %vm476, %v1629, 0.0
    %1648 = vadd.xlane.f32.xlu0 %v1647
    %v1649 = vpop.xlane.xlu0 %1648
    %v1650 = vsel %vm476, %v1630, 0.0
    %1651 = vadd.xlane.f32.xlu0 %v1650
    %v1652 = vpop.xlane.xlu0 %1651
    %v1653 = vsel %vm476, %v1631, 0.0
    %1654 = vadd.xlane.f32.xlu0 %v1653
    %v1655 = vpop.xlane.xlu0 %1654
    %v1656 = vmul.f32 %v1634, %v1607
    %v1657 = vmul.f32 %v1637, %v1607
    %v1658 = vmul.f32 %v1640, %v1607
    %v1659 = vmul.f32 %v1643, %v1607
    %v1660 = vmul.f32 %v1646, %v1607
    %v1661 = vmul.f32 %v1649, %v1607
    %v1662 = vmul.f32 %v1652, %v1607
    %v1663 = vmul.f32 %v1655, %v1607
    %v1664 = vadd.f32 %v1656, 1e-05
    %v1665 = vadd.f32 %v1657, 1e-05
    %v1666 = vadd.f32 %v1658, 1e-05
    %v1667 = vadd.f32 %v1659, 1e-05
    %v1668 = vadd.f32 %v1660, 1e-05
    %v1669 = vadd.f32 %v1661, 1e-05
    %v1670 = vadd.f32 %v1662, 1e-05
    %v1671 = vadd.f32 %v1663, 1e-05
    %v1672 = vrsqrt.pop %v1664
    %v1673 = vrsqrt.pop %v1665
    %v1674 = vrsqrt.pop %v1666
    %v1675 = vrsqrt.pop %v1667
    %v1676 = vrsqrt.pop %v1668
    %v1677 = vrsqrt.pop %v1669
    %v1678 = vrsqrt.pop %v1670
    %v1679 = vrsqrt.pop %v1671
    %v1680 = vmul.f32 %v1616, %v1672
    %v1681 = vmul.f32 %v1617, %v1673
    %v1682 = vmul.f32 %v1618, %v1674
    %v1683 = vmul.f32 %v1619, %v1675
    %v1684 = vmul.f32 %v1620, %v1676
    %v1685 = vmul.f32 %v1621, %v1677
    %v1686 = vmul.f32 %v1622, %v1678
    %v1687 = vmul.f32 %v1623, %v1679
    %v1689 = vlaneseq
    %v1690 = vshrl.u32 %v1689, 7
    %v1691 = vsub.s32 0, %v1690
    %v1692 = vrot.slane %v1581, %v1691
    %v1694 = vmul.f32 %v1680, %v1692
    %v1695 = vmul.f32 %v1681, %v1692
    %v1696 = vmul.f32 %v1682, %v1692
    %v1697 = vmul.f32 %v1683, %v1692
    %v1698 = vmul.f32 %v1684, %v1692
    %v1699 = vmul.f32 %v1685, %v1692
    %v1700 = vmul.f32 %v1686, %v1692
    %v1701 = vmul.f32 %v1687, %v1692
    %v1703 = vlaneseq
    %v1704 = vshrl.u32 %v1703, 7
    %v1705 = vsub.s32 0, %v1704
    %v1706 = vrot.slane %v1582, %v1705
    %v1708 = vadd.f32 %v1694, %v1706
    %v1709 = vadd.f32 %v1695, %v1706
    %v1710 = vadd.f32 %v1696, %v1706
    %v1711 = vadd.f32 %v1697, %v1706
    %v1712 = vadd.f32 %v1698, %v1706
    %v1713 = vadd.f32 %v1699, %v1706
    %v1714 = vadd.f32 %v1700, %v1706
    %v1715 = vadd.f32 %v1701, %v1706
    %v1716 = vld [vmem:[%s37] sm:$0xff]
    %v1717 = vld [vmem:[%s37 + $0x8] sm:$0xff]
    %v1718 = vld [vmem:[%s37 + $0x10] sm:$0xff]
    %v1719 = vld [vmem:[%s37 + $0x18] sm:$0xff]
    %v1720 = vld [vmem:[%s39] sm:$0x1]
    %v1722 = vlaneseq
    %v1723 = vshrl.u32 %v1722, 7
    %v1724 = vsub.s32 0, %v1723
    %v1725 = vrot.slane %v1720, %v1724
    %v1728 = vsel %vm476, %v1708, 0
    %v1731 = vsel %vm476, %v1709, 0
    %v1734 = vsel %vm476, %v1710, 0
    %v1737 = vsel %vm476, %v1711, 0
    %v1740 = vsel %vm476, %v1712, 0
    %v1743 = vsel %vm476, %v1713, 0
    %v1746 = vsel %vm476, %v1714, 0
    %v1749 = vsel %vm476, %v1715, 0
    %1751 = vmatprep.subr.mxu0 0.0
    %1752 = vmatpush1.msra.mxu0 0.0
    %1753 = vmatprep.subr.mxu0 0.0
    %1754 = vmatpush1.msra.mxu0 0.0
    %1755 = vmatprep.subr.mxu0 0.0
    %1756 = vmatpush1.msra.mxu0 0.0
    %1757 = vmatprep.subr.mxu0 0.0
    %1758 = vmatpush1.msra.mxu0 0.0
    %1759 = vmatprep.subr.mxu0 0.0
    %1760 = vmatpush1.msra.mxu0 0.0
    %1761 = vmatprep.subr.mxu0 0.0
    %1762 = vmatpush1.msra.mxu0 0.0
    %1763 = vmatprep.subr.mxu0 0.0
    %1764 = vmatpush1.msra.mxu0 0.0
    %1765 = vmatprep.subr.mxu0 0.0
    %1766 = vmatpush1.msra.mxu0 0.0
    %1767 = vmatprep.subr.mxu0 0.0
    %1768 = vmatpush1.msra.mxu0 0.0
    %1769 = vmatprep.subr.mxu0 0.0
    %1770 = vmatpush1.msra.mxu0 0.0
    %1771 = vmatprep.subr.mxu0 0.0
    %1772 = vmatpush1.msra.mxu0 0.0
    %1773 = vmatprep.subr.mxu0 0.0
    %1774 = vmatpush1.msra.mxu0 0.0
    %1775 = vmatprep.subr.mxu0 0.0
    %1776 = vmatpush1.msra.mxu0 %v1719
    %1777 = vmatprep.subr.mxu0 0.0
    %1778 = vmatpush1.msra.mxu0 %v1718
    %1779 = vmatprep.subr.mxu0 0.0
    %1780 = vmatpush1.msra.mxu0 %v1717
    %1781 = vmatprep.subr.mxu0 0.0
    %1782 = vmatpush1.msra.mxu0 %v1716
    %1783 = vmatprep.subr.mxu0 0.0
    %1784 = vmatpush2.msra.mxu0 0.0
    %1785 = vmatprep.subr.mxu0 0.0
    %1786 = vmatpush2.msra.mxu0 0.0
    %1787 = vmatprep.subr.mxu0 0.0
    %1788 = vmatpush2.msra.mxu0 0.0
    %1789 = vmatprep.subr.mxu0 0.0
    %1790 = vmatpush2.msra.mxu0 0.0
    %1791 = vmatprep.subr.mxu0 0.0
    %1792 = vmatpush2.msra.mxu0 0.0
    %1793 = vmatprep.subr.mxu0 0.0
    %1794 = vmatpush2.msra.mxu0 0.0
    %1795 = vmatprep.subr.mxu0 0.0
    %1796 = vmatpush2.msra.mxu0 0.0
    %1797 = vmatprep.subr.mxu0 0.0
    %1798 = vmatpush2.msra.mxu0 0.0
    %1799 = vmatprep.subr.mxu0 0.0
    %1800 = vmatpush2.msra.mxu0 0.0
    %1801 = vmatprep.subr.mxu0 0.0
    %1802 = vmatpush2.msra.mxu0 0.0
    %1803 = vmatprep.subr.mxu0 0.0
    %1804 = vmatpush2.msra.mxu0 0.0
    %1805 = vmatprep.subr.mxu0 0.0
    %1806 = vmatpush2.msra.mxu0 0.0
    %1807 = vmatprep.subr.mxu0 0.0
    %1808 = vmatpush2.msra.mxu0 0.0
    %1809 = vmatprep.subr.mxu0 0.0
    %1810 = vmatpush2.msra.mxu0 0.0
    %1811 = vmatprep.subr.mxu0 0.0
    %1812 = vmatpush2.msra.mxu0 0.0
    %1813 = vmatprep.subr.mxu0 0.0
    %1814 = vmatpush2.msra.mxu0 0.0
    %1815 = vmatprep.mubr.f32.mxu0 0.0
    %1816 = vmatmul.mubr.f32.gmra.mxu0 %v1728
    %v1817 = vpop.f32.mrf.mxu0
    %v1818 = vadd.f32 %v1725, %v1817
    %v1819 = vpop.f32.mrf.mxu0
    %1820 = vmatprep.mubr.f32.mxu0 0.0
    %1821 = vmatmul.mubr.f32.gmra.mxu0 %v1731
    %v1822 = vpop.f32.mrf.mxu0
    %v1823 = vadd.f32 %v1725, %v1822
    %v1824 = vpop.f32.mrf.mxu0
    %1825 = vmatprep.mubr.f32.mxu0 0.0
    %1826 = vmatmul.mubr.f32.gmra.mxu0 %v1734
    %v1827 = vpop.f32.mrf.mxu0
    %v1828 = vadd.f32 %v1725, %v1827
    %v1829 = vpop.f32.mrf.mxu0
    %1830 = vmatprep.mubr.f32.mxu0 0.0
    %1831 = vmatmul.mubr.f32.gmra.mxu0 %v1737
    %v1832 = vpop.f32.mrf.mxu0
    %v1833 = vadd.f32 %v1725, %v1832
    %v1834 = vpop.f32.mrf.mxu0
    %1835 = vmatprep.mubr.f32.mxu0 0.0
    %1836 = vmatmul.mubr.f32.gmra.mxu0 %v1740
    %v1837 = vpop.f32.mrf.mxu0
    %v1838 = vadd.f32 %v1725, %v1837
    %v1839 = vpop.f32.mrf.mxu0
    %1840 = vmatprep.mubr.f32.mxu0 0.0
    %1841 = vmatmul.mubr.f32.gmra.mxu0 %v1743
    %v1842 = vpop.f32.mrf.mxu0
    %v1843 = vadd.f32 %v1725, %v1842
    %v1844 = vpop.f32.mrf.mxu0
    %1845 = vmatprep.mubr.f32.mxu0 0.0
    %1846 = vmatmul.mubr.f32.gmra.mxu0 %v1746
    %v1847 = vpop.f32.mrf.mxu0
    %v1848 = vadd.f32 %v1725, %v1847
    %v1849 = vpop.f32.mrf.mxu0
    %1850 = vmatprep.mubr.f32.mxu0 0.0
    %1851 = vmatmul.mubr.f32.gmra.mxu0 %v1749
    %v1852 = vpop.f32.mrf.mxu0
    %v1853 = vadd.f32 %v1725, %v1852
    %v1854 = vpop.f32.mrf.mxu0
    %1855 = vdwg.mxu0
    %v1856 = vmax.f32 %v1818, 0.0
    %v1857 = vmax.f32 %v1823, 0.0
    %v1858 = vmax.f32 %v1828, 0.0
    %v1859 = vmax.f32 %v1833, 0.0
    %v1860 = vmax.f32 %v1838, 0.0
    %v1861 = vmax.f32 %v1843, 0.0
    %v1862 = vmax.f32 %v1848, 0.0
    %v1863 = vmax.f32 %v1853, 0.0
    %v1864 = vld [vmem:[%s41] sm:$0xff]
    %v1865 = vld [vmem:[%s41 + $0x8] sm:$0xff]
    %v1866 = vld [vmem:[%s41 + $0x10] sm:$0xff]
    %v1867 = vld [vmem:[%s41 + $0x18] sm:$0xff]
    %v1868 = vld [vmem:[%s41 + $0x20] sm:$0xff]
    %v1869 = vld [vmem:[%s41 + $0x28] sm:$0xff]
    %v1870 = vld [vmem:[%s41 + $0x30] sm:$0xff]
    %v1871 = vld [vmem:[%s41 + $0x38] sm:$0xff]
    %v1872 = vld [vmem:[%s41 + $0x40] sm:$0xff]
    %v1873 = vld [vmem:[%s41 + $0x48] sm:$0xff]
    %v1874 = vld [vmem:[%s41 + $0x50] sm:$0xff]
    %v1875 = vld [vmem:[%s41 + $0x58] sm:$0xff]
    %v1876 = vld [vmem:[%s41 + $0x60] sm:$0xff]
    %v1877 = vld [vmem:[%s41 + $0x68] sm:$0xff]
    %v1878 = vld [vmem:[%s41 + $0x70] sm:$0xff]
    %v1879 = vld [vmem:[%s41 + $0x78] sm:$0xff]
    %v1880 = vld [vmem:[%s43] sm:$0x1]
    %v1882 = vlaneseq
    %v1883 = vshrl.u32 %v1882, 7
    %v1884 = vsub.s32 0, %v1883
    %v1885 = vrot.slane %v1880, %v1884
    %1887 = vmatprep.subr.mxu0 0.0
    %1888 = vmatpush1.msra.mxu0 %v1879
    %1889 = vmatprep.subr.mxu0 0.0
    %1890 = vmatpush1.msra.mxu0 %v1878
    %1891 = vmatprep.subr.mxu0 0.0
    %1892 = vmatpush1.msra.mxu0 %v1877
    %1893 = vmatprep.subr.mxu0 0.0
    %1894 = vmatpush1.msra.mxu0 %v1876
    %1895 = vmatprep.subr.mxu0 0.0
    %1896 = vmatpush1.msra.mxu0 %v1875
    %1897 = vmatprep.subr.mxu0 0.0
    %1898 = vmatpush1.msra.mxu0 %v1874
    %1899 = vmatprep.subr.mxu0 0.0
    %1900 = vmatpush1.msra.mxu0 %v1873
    %1901 = vmatprep.subr.mxu0 0.0
    %1902 = vmatpush1.msra.mxu0 %v1872
    %1903 = vmatprep.subr.mxu0 0.0
    %1904 = vmatpush1.msra.mxu0 %v1871
    %1905 = vmatprep.subr.mxu0 0.0
    %1906 = vmatpush1.msra.mxu0 %v1870
    %1907 = vmatprep.subr.mxu0 0.0
    %1908 = vmatpush1.msra.mxu0 %v1869
    %1909 = vmatprep.subr.mxu0 0.0
    %1910 = vmatpush1.msra.mxu0 %v1868
    %1911 = vmatprep.subr.mxu0 0.0
    %1912 = vmatpush1.msra.mxu0 %v1867
    %1913 = vmatprep.subr.mxu0 0.0
    %1914 = vmatpush1.msra.mxu0 %v1866
    %1915 = vmatprep.subr.mxu0 0.0
    %1916 = vmatpush1.msra.mxu0 %v1865
    %1917 = vmatprep.subr.mxu0 0.0
    %1918 = vmatpush1.msra.mxu0 %v1864
    %1919 = vmatprep.subr.mxu0 0.0
    %1920 = vmatpush2.msra.mxu0 0.0
    %1921 = vmatprep.subr.mxu0 0.0
    %1922 = vmatpush2.msra.mxu0 0.0
    %1923 = vmatprep.subr.mxu0 0.0
    %1924 = vmatpush2.msra.mxu0 0.0
    %1925 = vmatprep.subr.mxu0 0.0
    %1926 = vmatpush2.msra.mxu0 0.0
    %1927 = vmatprep.subr.mxu0 0.0
    %1928 = vmatpush2.msra.mxu0 0.0
    %1929 = vmatprep.subr.mxu0 0.0
    %1930 = vmatpush2.msra.mxu0 0.0
    %1931 = vmatprep.subr.mxu0 0.0
    %1932 = vmatpush2.msra.mxu0 0.0
    %1933 = vmatprep.subr.mxu0 0.0
    %1934 = vmatpush2.msra.mxu0 0.0
    %1935 = vmatprep.subr.mxu0 0.0
    %1936 = vmatpush2.msra.mxu0 0.0
    %1937 = vmatprep.subr.mxu0 0.0
    %1938 = vmatpush2.msra.mxu0 0.0
    %1939 = vmatprep.subr.mxu0 0.0
    %1940 = vmatpush2.msra.mxu0 0.0
    %1941 = vmatprep.subr.mxu0 0.0
    %1942 = vmatpush2.msra.mxu0 0.0
    %1943 = vmatprep.subr.mxu0 0.0
    %1944 = vmatpush2.msra.mxu0 0.0
    %1945 = vmatprep.subr.mxu0 0.0
    %1946 = vmatpush2.msra.mxu0 0.0
    %1947 = vmatprep.subr.mxu0 0.0
    %1948 = vmatpush2.msra.mxu0 0.0
    %1949 = vmatprep.subr.mxu0 0.0
    %1950 = vmatpush2.msra.mxu0 0.0
    %1951 = vmatprep.mubr.f32.mxu0 0.0
    %1952 = vmatmul.mubr.f32.gmra.mxu0 %v1856
    %v1953 = vpop.f32.mrf.mxu0
    %v1954 = vadd.f32 %v1885, %v1953
    %v1955 = vpop.f32.mrf.mxu0
    %1956 = vmatprep.mubr.f32.mxu0 0.0
    %1957 = vmatmul.mubr.f32.gmra.mxu0 %v1857
    %v1958 = vpop.f32.mrf.mxu0
    %v1959 = vadd.f32 %v1885, %v1958
    %v1960 = vpop.f32.mrf.mxu0
    %1961 = vmatprep.mubr.f32.mxu0 0.0
    %1962 = vmatmul.mubr.f32.gmra.mxu0 %v1858
    %v1963 = vpop.f32.mrf.mxu0
    %v1964 = vadd.f32 %v1885, %v1963
    %v1965 = vpop.f32.mrf.mxu0
    %1966 = vmatprep.mubr.f32.mxu0 0.0
    %1967 = vmatmul.mubr.f32.gmra.mxu0 %v1859
    %v1968 = vpop.f32.mrf.mxu0
    %v1969 = vadd.f32 %v1885, %v1968
    %v1970 = vpop.f32.mrf.mxu0
    %1971 = vmatprep.mubr.f32.mxu0 0.0
    %1972 = vmatmul.mubr.f32.gmra.mxu0 %v1860
    %v1973 = vpop.f32.mrf.mxu0
    %v1974 = vadd.f32 %v1885, %v1973
    %v1975 = vpop.f32.mrf.mxu0
    %1976 = vmatprep.mubr.f32.mxu0 0.0
    %1977 = vmatmul.mubr.f32.gmra.mxu0 %v1861
    %v1978 = vpop.f32.mrf.mxu0
    %v1979 = vadd.f32 %v1885, %v1978
    %v1980 = vpop.f32.mrf.mxu0
    %1981 = vmatprep.mubr.f32.mxu0 0.0
    %1982 = vmatmul.mubr.f32.gmra.mxu0 %v1862
    %v1983 = vpop.f32.mrf.mxu0
    %v1984 = vadd.f32 %v1885, %v1983
    %v1985 = vpop.f32.mrf.mxu0
    %1986 = vmatprep.mubr.f32.mxu0 0.0
    %1987 = vmatmul.mubr.f32.gmra.mxu0 %v1863
    %v1988 = vpop.f32.mrf.mxu0
    %v1989 = vadd.f32 %v1885, %v1988
    %v1990 = vpop.f32.mrf.mxu0
    %1991 = vdwg.mxu0
    %v1992 = vadd.f32 %v1708, %v1954
    %v1993 = vadd.f32 %v1709, %v1959
    %v1994 = vadd.f32 %v1710, %v1964
    %v1995 = vadd.f32 %v1711, %v1969
    %v1996 = vadd.f32 %v1712, %v1974
    %v1997 = vadd.f32 %v1713, %v1979
    %v1998 = vadd.f32 %v1714, %v1984
    %v1999 = vadd.f32 %v1715, %v1989
    %v2000 = vld [vmem:[%s45] sm:$0x1]
    %v2001 = vld [vmem:[%s47] sm:$0x1]
    %v2002 = vsel %vm476, %v1992, 0.0
    %2003 = vadd.xlane.f32.xlu0 %v2002
    %v2004 = vpop.xlane.xlu0 %2003
    %v2005 = vsel %vm476, %v1993, 0.0
    %2006 = vadd.xlane.f32.xlu0 %v2005
    %v2007 = vpop.xlane.xlu0 %2006
    %v2008 = vsel %vm476, %v1994, 0.0
    %2009 = vadd.xlane.f32.xlu0 %v2008
    %v2010 = vpop.xlane.xlu0 %2009
    %v2011 = vsel %vm476, %v1995, 0.0
    %2012 = vadd.xlane.f32.xlu0 %v2011
    %v2013 = vpop.xlane.xlu0 %2012
    %v2014 = vsel %vm476, %v1996, 0.0
    %2015 = vadd.xlane.f32.xlu0 %v2014
    %v2016 = vpop.xlane.xlu0 %2015
    %v2017 = vsel %vm476, %v1997, 0.0
    %2018 = vadd.xlane.f32.xlu0 %v2017
    %v2019 = vpop.xlane.xlu0 %2018
    %v2020 = vsel %vm476, %v1998, 0.0
    %2021 = vadd.xlane.f32.xlu0 %v2020
    %v2022 = vpop.xlane.xlu0 %2021
    %v2023 = vsel %vm476, %v1999, 0.0
    %2024 = vadd.xlane.f32.xlu0 %v2023
    %v2025 = vpop.xlane.xlu0 %2024
    %v2026 = vmul.f32 %v2004, %v1607
    %v2027 = vmul.f32 %v2007, %v1607
    %v2028 = vmul.f32 %v2010, %v1607
    %v2029 = vmul.f32 %v2013, %v1607
    %v2030 = vmul.f32 %v2016, %v1607
    %v2031 = vmul.f32 %v2019, %v1607
    %v2032 = vmul.f32 %v2022, %v1607
    %v2033 = vmul.f32 %v2025, %v1607
    %v2034 = vsub.f32 %v1992, %v2026
    %v2035 = vsub.f32 %v1993, %v2027
    %v2036 = vsub.f32 %v1994, %v2028
    %v2037 = vsub.f32 %v1995, %v2029
    %v2038 = vsub.f32 %v1996, %v2030
    %v2039 = vsub.f32 %v1997, %v2031
    %v2040 = vsub.f32 %v1998, %v2032
    %v2041 = vsub.f32 %v1999, %v2033
    %v2042 = vmul.f32 %v2034, %v2034
    %v2043 = vmul.f32 %v2035, %v2035
    %v2044 = vmul.f32 %v2036, %v2036
    %v2045 = vmul.f32 %v2037, %v2037
    %v2046 = vmul.f32 %v2038, %v2038
    %v2047 = vmul.f32 %v2039, %v2039
    %v2048 = vmul.f32 %v2040, %v2040
    %v2049 = vmul.f32 %v2041, %v2041
    %v2050 = vsel %vm476, %v2042, 0.0
    %2051 = vadd.xlane.f32.xlu0 %v2050
    %v2052 = vpop.xlane.xlu0 %2051
    %v2053 = vsel %vm476, %v2043, 0.0
    %2054 = vadd.xlane.f32.xlu0 %v2053
    %v2055 = vpop.xlane.xlu0 %2054
    %v2056 = vsel %vm476, %v2044, 0.0
    %2057 = vadd.xlane.f32.xlu0 %v2056
    %v2058 = vpop.xlane.xlu0 %2057
    %v2059 = vsel %vm476, %v2045, 0.0
    %2060 = vadd.xlane.f32.xlu0 %v2059
    %v2061 = vpop.xlane.xlu0 %2060
    %v2062 = vsel %vm476, %v2046, 0.0
    %2063 = vadd.xlane.f32.xlu0 %v2062
    %v2064 = vpop.xlane.xlu0 %2063
    %v2065 = vsel %vm476, %v2047, 0.0
    %2066 = vadd.xlane.f32.xlu0 %v2065
    %v2067 = vpop.xlane.xlu0 %2066
    %v2068 = vsel %vm476, %v2048, 0.0
    %2069 = vadd.xlane.f32.xlu0 %v2068
    %v2070 = vpop.xlane.xlu0 %2069
    %v2071 = vsel %vm476, %v2049, 0.0
    %2072 = vadd.xlane.f32.xlu0 %v2071
    %v2073 = vpop.xlane.xlu0 %2072
    %v2074 = vmul.f32 %v2052, %v1607
    %v2075 = vmul.f32 %v2055, %v1607
    %v2076 = vmul.f32 %v2058, %v1607
    %v2077 = vmul.f32 %v2061, %v1607
    %v2078 = vmul.f32 %v2064, %v1607
    %v2079 = vmul.f32 %v2067, %v1607
    %v2080 = vmul.f32 %v2070, %v1607
    %v2081 = vmul.f32 %v2073, %v1607
    %v2082 = vadd.f32 %v2074, 1e-05
    %v2083 = vadd.f32 %v2075, 1e-05
    %v2084 = vadd.f32 %v2076, 1e-05
    %v2085 = vadd.f32 %v2077, 1e-05
    %v2086 = vadd.f32 %v2078, 1e-05
    %v2087 = vadd.f32 %v2079, 1e-05
    %v2088 = vadd.f32 %v2080, 1e-05
    %v2089 = vadd.f32 %v2081, 1e-05
    %v2090 = vrsqrt.pop %v2082
    %v2091 = vrsqrt.pop %v2083
    %v2092 = vrsqrt.pop %v2084
    %v2093 = vrsqrt.pop %v2085
    %v2094 = vrsqrt.pop %v2086
    %v2095 = vrsqrt.pop %v2087
    %v2096 = vrsqrt.pop %v2088
    %v2097 = vrsqrt.pop %v2089
    %v2098 = vmul.f32 %v2034, %v2090
    %v2099 = vmul.f32 %v2035, %v2091
    %v2100 = vmul.f32 %v2036, %v2092
    %v2101 = vmul.f32 %v2037, %v2093
    %v2102 = vmul.f32 %v2038, %v2094
    %v2103 = vmul.f32 %v2039, %v2095
    %v2104 = vmul.f32 %v2040, %v2096
    %v2105 = vmul.f32 %v2041, %v2097
    %v2107 = vlaneseq
    %v2108 = vshrl.u32 %v2107, 7
    %v2109 = vsub.s32 0, %v2108
    %v2110 = vrot.slane %v2000, %v2109
    %v2112 = vmul.f32 %v2098, %v2110
    %v2113 = vmul.f32 %v2099, %v2110
    %v2114 = vmul.f32 %v2100, %v2110
    %v2115 = vmul.f32 %v2101, %v2110
    %v2116 = vmul.f32 %v2102, %v2110
    %v2117 = vmul.f32 %v2103, %v2110
    %v2118 = vmul.f32 %v2104, %v2110
    %v2119 = vmul.f32 %v2105, %v2110
    %v2121 = vlaneseq
    %v2122 = vshrl.u32 %v2121, 7
    %v2123 = vsub.s32 0, %v2122
    %v2124 = vrot.slane %v2001, %v2123
    %v2126 = vadd.f32 %v2112, %v2124
    %v2127 = vadd.f32 %v2113, %v2124
    %v2128 = vadd.f32 %v2114, %v2124
    %v2129 = vadd.f32 %v2115, %v2124
    %v2130 = vadd.f32 %v2116, %v2124
    %v2131 = vadd.f32 %v2117, %v2124
    %v2132 = vadd.f32 %v2118, %v2124
    %v2133 = vadd.f32 %v2119, %v2124
    %s2134 = scalar_lea.vmem [#allocation7], 32
    %v2135 = vld [vmem:[%s2134] sm:$0xff]
    %v2136 = vld [vmem:[%s2134 + $0x8] sm:$0xff]
    %v2137 = vld [vmem:[%s2134 + $0x10] sm:$0xff]
    %v2138 = vld [vmem:[%s2134 + $0x18] sm:$0xff]
    %s2139 = scalar_lea.vmem %s19, 1
    %v2140 = vld [vmem:[%s2139] sm:$0x1]
    %v2142 = vlaneseq
    %v2143 = vshrl.u32 %v2142, 7
    %v2144 = vsub.s32 0, %v2143
    %v2145 = vrot.slane %v2140, %v2144
    %v2148 = vsel %vm476, %v2126, 0
    %v2151 = vsel %vm476, %v2127, 0
    %v2154 = vsel %vm476, %v2128, 0
    %v2157 = vsel %vm476, %v2129, 0
    %v2160 = vsel %vm476, %v2130, 0
    %v2163 = vsel %vm476, %v2131, 0
    %v2166 = vsel %vm476, %v2132, 0
    %v2169 = vsel %vm476, %v2133, 0
    %2171 = vmatprep.subr.mxu0 0.0
    %2172 = vmatpush1.msra.mxu0 0.0
    %2173 = vmatprep.subr.mxu0 0.0
    %2174 = vmatpush1.msra.mxu0 0.0
    %2175 = vmatprep.subr.mxu0 0.0
    %2176 = vmatpush1.msra.mxu0 0.0
    %2177 = vmatprep.subr.mxu0 0.0
    %2178 = vmatpush1.msra.mxu0 0.0
    %2179 = vmatprep.subr.mxu0 0.0
    %2180 = vmatpush1.msra.mxu0 0.0
    %2181 = vmatprep.subr.mxu0 0.0
    %2182 = vmatpush1.msra.mxu0 0.0
    %2183 = vmatprep.subr.mxu0 0.0
    %2184 = vmatpush1.msra.mxu0 0.0
    %2185 = vmatprep.subr.mxu0 0.0
    %2186 = vmatpush1.msra.mxu0 0.0
    %2187 = vmatprep.subr.mxu0 0.0
    %2188 = vmatpush1.msra.mxu0 0.0
    %2189 = vmatprep.subr.mxu0 0.0
    %2190 = vmatpush1.msra.mxu0 0.0
    %2191 = vmatprep.subr.mxu0 0.0
    %2192 = vmatpush1.msra.mxu0 0.0
    %2193 = vmatprep.subr.mxu0 0.0
    %2194 = vmatpush1.msra.mxu0 0.0
    %2195 = vmatprep.subr.mxu0 0.0
    %2196 = vmatpush1.msra.mxu0 %v2138
    %2197 = vmatprep.subr.mxu0 0.0
    %2198 = vmatpush1.msra.mxu0 %v2137
    %2199 = vmatprep.subr.mxu0 0.0
    %2200 = vmatpush1.msra.mxu0 %v2136
    %2201 = vmatprep.subr.mxu0 0.0
    %2202 = vmatpush1.msra.mxu0 %v2135
    %2203 = vmatprep.subr.mxu0 0.0
    %2204 = vmatpush2.msra.mxu0 0.0
    %2205 = vmatprep.subr.mxu0 0.0
    %2206 = vmatpush2.msra.mxu0 0.0
    %2207 = vmatprep.subr.mxu0 0.0
    %2208 = vmatpush2.msra.mxu0 0.0
    %2209 = vmatprep.subr.mxu0 0.0
    %2210 = vmatpush2.msra.mxu0 0.0
    %2211 = vmatprep.subr.mxu0 0.0
    %2212 = vmatpush2.msra.mxu0 0.0
    %2213 = vmatprep.subr.mxu0 0.0
    %2214 = vmatpush2.msra.mxu0 0.0
    %2215 = vmatprep.subr.mxu0 0.0
    %2216 = vmatpush2.msra.mxu0 0.0
    %2217 = vmatprep.subr.mxu0 0.0
    %2218 = vmatpush2.msra.mxu0 0.0
    %2219 = vmatprep.subr.mxu0 0.0
    %2220 = vmatpush2.msra.mxu0 0.0
    %2221 = vmatprep.subr.mxu0 0.0
    %2222 = vmatpush2.msra.mxu0 0.0
    %2223 = vmatprep.subr.mxu0 0.0
    %2224 = vmatpush2.msra.mxu0 0.0
    %2225 = vmatprep.subr.mxu0 0.0
    %2226 = vmatpush2.msra.mxu0 0.0
    %2227 = vmatprep.subr.mxu0 0.0
    %2228 = vmatpush2.msra.mxu0 0.0
    %2229 = vmatprep.subr.mxu0 0.0
    %2230 = vmatpush2.msra.mxu0 0.0
    %2231 = vmatprep.subr.mxu0 0.0
    %2232 = vmatpush2.msra.mxu0 0.0
    %2233 = vmatprep.subr.mxu0 0.0
    %2234 = vmatpush2.msra.mxu0 0.0
    %2235 = vmatprep.mubr.f32.mxu0 0.0
    %2236 = vmatmul.mubr.f32.gmra.mxu0 %v2148
    %v2237 = vpop.f32.mrf.mxu0
    %v2238 = vadd.f32 %v2145, %v2237
    %v2239 = vpop.f32.mrf.mxu0
    %2240 = vmatprep.mubr.f32.mxu0 0.0
    %2241 = vmatmul.mubr.f32.gmra.mxu0 %v2151
    %v2242 = vpop.f32.mrf.mxu0
    %v2243 = vadd.f32 %v2145, %v2242
    %v2244 = vpop.f32.mrf.mxu0
    %2245 = vmatprep.mubr.f32.mxu0 0.0
    %2246 = vmatmul.mubr.f32.gmra.mxu0 %v2154
    %v2247 = vpop.f32.mrf.mxu0
    %v2248 = vadd.f32 %v2145, %v2247
    %v2249 = vpop.f32.mrf.mxu0
    %2250 = vmatprep.mubr.f32.mxu0 0.0
    %2251 = vmatmul.mubr.f32.gmra.mxu0 %v2157
    %v2252 = vpop.f32.mrf.mxu0
    %v2253 = vadd.f32 %v2145, %v2252
    %v2254 = vpop.f32.mrf.mxu0
    %2255 = vmatprep.mubr.f32.mxu0 0.0
    %2256 = vmatmul.mubr.f32.gmra.mxu0 %v2160
    %v2257 = vpop.f32.mrf.mxu0
    %v2258 = vadd.f32 %v2145, %v2257
    %v2259 = vpop.f32.mrf.mxu0
    %2260 = vmatprep.mubr.f32.mxu0 0.0
    %2261 = vmatmul.mubr.f32.gmra.mxu0 %v2163
    %v2262 = vpop.f32.mrf.mxu0
    %v2263 = vadd.f32 %v2145, %v2262
    %v2264 = vpop.f32.mrf.mxu0
    %2265 = vmatprep.mubr.f32.mxu0 0.0
    %2266 = vmatmul.mubr.f32.gmra.mxu0 %v2166
    %v2267 = vpop.f32.mrf.mxu0
    %v2268 = vadd.f32 %v2145, %v2267
    %v2269 = vpop.f32.mrf.mxu0
    %2270 = vmatprep.mubr.f32.mxu0 0.0
    %2271 = vmatmul.mubr.f32.gmra.mxu0 %v2169
    %v2272 = vpop.f32.mrf.mxu0
    %v2273 = vadd.f32 %v2145, %v2272
    %v2274 = vpop.f32.mrf.mxu0
    %2275 = vdwg.mxu0
    %s2276 = scalar_lea.vmem [#allocation8], 32
    %v2277 = vld [vmem:[%s2276] sm:$0xff]
    %v2278 = vld [vmem:[%s2276 + $0x8] sm:$0xff]
    %v2279 = vld [vmem:[%s2276 + $0x10] sm:$0xff]
    %v2280 = vld [vmem:[%s2276 + $0x18] sm:$0xff]
    %s2281 = scalar_lea.vmem %s23, 1
    %v2282 = vld [vmem:[%s2281] sm:$0x1]
    %v2284 = vlaneseq
    %v2285 = vshrl.u32 %v2284, 7
    %v2286 = vsub.s32 0, %v2285
    %v2287 = vrot.slane %v2282, %v2286
    %2289 = vmatprep.subr.mxu0 0.0
    %2290 = vmatpush1.msra.mxu0 0.0
    %2291 = vmatprep.subr.mxu0 0.0
    %2292 = vmatpush1.msra.mxu0 0.0
    %2293 = vmatprep.subr.mxu0 0.0
    %2294 = vmatpush1.msra.mxu0 0.0
    %2295 = vmatprep.subr.mxu0 0.0
    %2296 = vmatpush1.msra.mxu0 0.0
    %2297 = vmatprep.subr.mxu0 0.0
    %2298 = vmatpush1.msra.mxu0 0.0
    %2299 = vmatprep.subr.mxu0 0.0
    %2300 = vmatpush1.msra.mxu0 0.0
    %2301 = vmatprep.subr.mxu0 0.0
    %2302 = vmatpush1.msra.mxu0 0.0
    %2303 = vmatprep.subr.mxu0 0.0
    %2304 = vmatpush1.msra.mxu0 0.0
    %2305 = vmatprep.subr.mxu0 0.0
    %2306 = vmatpush1.msra.mxu0 0.0
    %2307 = vmatprep.subr.mxu0 0.0
    %2308 = vmatpush1.msra.mxu0 0.0
    %2309 = vmatprep.subr.mxu0 0.0
    %2310 = vmatpush1.msra.mxu0 0.0
    %2311 = vmatprep.subr.mxu0 0.0
    %2312 = vmatpush1.msra.mxu0 0.0
    %2313 = vmatprep.subr.mxu0 0.0
    %2314 = vmatpush1.msra.mxu0 %v2280
    %2315 = vmatprep.subr.mxu0 0.0
    %2316 = vmatpush1.msra.mxu0 %v2279
    %2317 = vmatprep.subr.mxu0 0.0
    %2318 = vmatpush1.msra.mxu0 %v2278
    %2319 = vmatprep.subr.mxu0 0.0
    %2320 = vmatpush1.msra.mxu0 %v2277
    %2321 = vmatprep.subr.mxu0 0.0
    %2322 = vmatpush2.msra.mxu0 0.0
    %2323 = vmatprep.subr.mxu0 0.0
    %2324 = vmatpush2.msra.mxu0 0.0
    %2325 = vmatprep.subr.mxu0 0.0
    %2326 = vmatpush2.msra.mxu0 0.0
    %2327 = vmatprep.subr.mxu0 0.0
    %2328 = vmatpush2.msra.mxu0 0.0
    %2329 = vmatprep.subr.mxu0 0.0
    %2330 = vmatpush2.msra.mxu0 0.0
    %2331 = vmatprep.subr.mxu0 0.0
    %2332 = vmatpush2.msra.mxu0 0.0
    %2333 = vmatprep.subr.mxu0 0.0
    %2334 = vmatpush2.msra.mxu0 0.0
    %2335 = vmatprep.subr.mxu0 0.0
    %2336 = vmatpush2.msra.mxu0 0.0
    %2337 = vmatprep.subr.mxu0 0.0
    %2338 = vmatpush2.msra.mxu0 0.0
    %2339 = vmatprep.subr.mxu0 0.0
    %2340 = vmatpush2.msra.mxu0 0.0
    %2341 = vmatprep.subr.mxu0 0.0
    %2342 = vmatpush2.msra.mxu0 0.0
    %2343 = vmatprep.subr.mxu0 0.0
    %2344 = vmatpush2.msra.mxu0 0.0
    %2345 = vmatprep.subr.mxu0 0.0
    %2346 = vmatpush2.msra.mxu0 0.0
    %2347 = vmatprep.subr.mxu0 0.0
    %2348 = vmatpush2.msra.mxu0 0.0
    %2349 = vmatprep.subr.mxu0 0.0
    %2350 = vmatpush2.msra.mxu0 0.0
    %2351 = vmatprep.subr.mxu0 0.0
    %2352 = vmatpush2.msra.mxu0 0.0
    %2353 = vmatprep.mubr.f32.mxu0 0.0
    %2354 = vmatmul.mubr.f32.gmra.mxu0 %v2148
    %v2355 = vpop.f32.mrf.mxu0
    %v2356 = vadd.f32 %v2287, %v2355
    %v2357 = vpop.f32.mrf.mxu0
    %2358 = vmatprep.mubr.f32.mxu0 0.0
    %2359 = vmatmul.mubr.f32.gmra.mxu0 %v2151
    %v2360 = vpop.f32.mrf.mxu0
    %v2361 = vadd.f32 %v2287, %v2360
    %v2362 = vpop.f32.mrf.mxu0
    %2363 = vmatprep.mubr.f32.mxu0 0.0
    %2364 = vmatmul.mubr.f32.gmra.mxu0 %v2154
    %v2365 = vpop.f32.mrf.mxu0
    %v2366 = vadd.f32 %v2287, %v2365
    %v2367 = vpop.f32.mrf.mxu0
    %2368 = vmatprep.mubr.f32.mxu0 0.0
    %2369 = vmatmul.mubr.f32.gmra.mxu0 %v2157
    %v2370 = vpop.f32.mrf.mxu0
    %v2371 = vadd.f32 %v2287, %v2370
    %v2372 = vpop.f32.mrf.mxu0
    %2373 = vmatprep.mubr.f32.mxu0 0.0
    %2374 = vmatmul.mubr.f32.gmra.mxu0 %v2160
    %v2375 = vpop.f32.mrf.mxu0
    %v2376 = vadd.f32 %v2287, %v2375
    %v2377 = vpop.f32.mrf.mxu0
    %2378 = vmatprep.mubr.f32.mxu0 0.0
    %2379 = vmatmul.mubr.f32.gmra.mxu0 %v2163
    %v2380 = vpop.f32.mrf.mxu0
    %v2381 = vadd.f32 %v2287, %v2380
    %v2382 = vpop.f32.mrf.mxu0
    %2383 = vmatprep.mubr.f32.mxu0 0.0
    %2384 = vmatmul.mubr.f32.gmra.mxu0 %v2166
    %v2385 = vpop.f32.mrf.mxu0
    %v2386 = vadd.f32 %v2287, %v2385
    %v2387 = vpop.f32.mrf.mxu0
    %2388 = vmatprep.mubr.f32.mxu0 0.0
    %2389 = vmatmul.mubr.f32.gmra.mxu0 %v2169
    %v2390 = vpop.f32.mrf.mxu0
    %v2391 = vadd.f32 %v2287, %v2390
    %v2392 = vpop.f32.mrf.mxu0
    %2393 = vdwg.mxu0
    %s2394 = scalar_lea.vmem %s25, 32
    %v2395 = vld [vmem:[%s2394] sm:$0xff]
    %v2396 = vld [vmem:[%s2394 + $0x8] sm:$0xff]
    %v2397 = vld [vmem:[%s2394 + $0x10] sm:$0xff]
    %v2398 = vld [vmem:[%s2394 + $0x18] sm:$0xff]
    %s2399 = scalar_lea.vmem %s27, 1
    %v2400 = vld [vmem:[%s2399] sm:$0x1]
    %v2402 = vlaneseq
    %v2403 = vshrl.u32 %v2402, 7
    %v2404 = vsub.s32 0, %v2403
    %v2405 = vrot.slane %v2400, %v2404
    %2407 = vmatprep.subr.mxu0 0.0
    %2408 = vmatpush1.msra.mxu0 0.0
    %2409 = vmatprep.subr.mxu0 0.0
    %2410 = vmatpush1.msra.mxu0 0.0
    %2411 = vmatprep.subr.mxu0 0.0
    %2412 = vmatpush1.msra.mxu0 0.0
    %2413 = vmatprep.subr.mxu0 0.0
    %2414 = vmatpush1.msra.mxu0 0.0
    %2415 = vmatprep.subr.mxu0 0.0
    %2416 = vmatpush1.msra.mxu0 0.0
    %2417 = vmatprep.subr.mxu0 0.0
    %2418 = vmatpush1.msra.mxu0 0.0
    %2419 = vmatprep.subr.mxu0 0.0
    %2420 = vmatpush1.msra.mxu0 0.0
    %2421 = vmatprep.subr.mxu0 0.0
    %2422 = vmatpush1.msra.mxu0 0.0
    %2423 = vmatprep.subr.mxu0 0.0
    %2424 = vmatpush1.msra.mxu0 0.0
    %2425 = vmatprep.subr.mxu0 0.0
    %2426 = vmatpush1.msra.mxu0 0.0
    %2427 = vmatprep.subr.mxu0 0.0
    %2428 = vmatpush1.msra.mxu0 0.0
    %2429 = vmatprep.subr.mxu0 0.0
    %2430 = vmatpush1.msra.mxu0 0.0
    %2431 = vmatprep.subr.mxu0 0.0
    %2432 = vmatpush1.msra.mxu0 %v2398
    %2433 = vmatprep.subr.mxu0 0.0
    %2434 = vmatpush1.msra.mxu0 %v2397
    %2435 = vmatprep.subr.mxu0 0.0
    %2436 = vmatpush1.msra.mxu0 %v2396
    %2437 = vmatprep.subr.mxu0 0.0
    %2438 = vmatpush1.msra.mxu0 %v2395
    %2439 = vmatprep.subr.mxu0 0.0
    %2440 = vmatpush2.msra.mxu0 0.0
    %2441 = vmatprep.subr.mxu0 0.0
    %2442 = vmatpush2.msra.mxu0 0.0
    %2443 = vmatprep.subr.mxu0 0.0
    %2444 = vmatpush2.msra.mxu0 0.0
    %2445 = vmatprep.subr.mxu0 0.0
    %2446 = vmatpush2.msra.mxu0 0.0
    %2447 = vmatprep.subr.mxu0 0.0
    %2448 = vmatpush2.msra.mxu0 0.0
    %2449 = vmatprep.subr.mxu0 0.0
    %2450 = vmatpush2.msra.mxu0 0.0
    %2451 = vmatprep.subr.mxu0 0.0
    %2452 = vmatpush2.msra.mxu0 0.0
    %2453 = vmatprep.subr.mxu0 0.0
    %2454 = vmatpush2.msra.mxu0 0.0
    %2455 = vmatprep.subr.mxu0 0.0
    %2456 = vmatpush2.msra.mxu0 0.0
    %2457 = vmatprep.subr.mxu0 0.0
    %2458 = vmatpush2.msra.mxu0 0.0
    %2459 = vmatprep.subr.mxu0 0.0
    %2460 = vmatpush2.msra.mxu0 0.0
    %2461 = vmatprep.subr.mxu0 0.0
    %2462 = vmatpush2.msra.mxu0 0.0
    %2463 = vmatprep.subr.mxu0 0.0
    %2464 = vmatpush2.msra.mxu0 0.0
    %2465 = vmatprep.subr.mxu0 0.0
    %2466 = vmatpush2.msra.mxu0 0.0
    %2467 = vmatprep.subr.mxu0 0.0
    %2468 = vmatpush2.msra.mxu0 0.0
    %2469 = vmatprep.subr.mxu0 0.0
    %2470 = vmatpush2.msra.mxu0 0.0
    %2471 = vmatprep.mubr.f32.mxu0 0.0
    %2472 = vmatmul.mubr.f32.gmra.mxu0 %v2148
    %v2473 = vpop.f32.mrf.mxu0
    %v2474 = vadd.f32 %v2405, %v2473
    %v2475 = vpop.f32.mrf.mxu0
    %2476 = vmatprep.mubr.f32.mxu0 0.0
    %2477 = vmatmul.mubr.f32.gmra.mxu0 %v2151
    %v2478 = vpop.f32.mrf.mxu0
    %v2479 = vadd.f32 %v2405, %v2478
    %v2480 = vpop.f32.mrf.mxu0
    %2481 = vmatprep.mubr.f32.mxu0 0.0
    %2482 = vmatmul.mubr.f32.gmra.mxu0 %v2154
    %v2483 = vpop.f32.mrf.mxu0
    %v2484 = vadd.f32 %v2405, %v2483
    %v2485 = vpop.f32.mrf.mxu0
    %2486 = vmatprep.mubr.f32.mxu0 0.0
    %2487 = vmatmul.mubr.f32.gmra.mxu0 %v2157
    %v2488 = vpop.f32.mrf.mxu0
    %v2489 = vadd.f32 %v2405, %v2488
    %v2490 = vpop.f32.mrf.mxu0
    %2491 = vmatprep.mubr.f32.mxu0 0.0
    %2492 = vmatmul.mubr.f32.gmra.mxu0 %v2160
    %v2493 = vpop.f32.mrf.mxu0
    %v2494 = vadd.f32 %v2405, %v2493
    %v2495 = vpop.f32.mrf.mxu0
    %2496 = vmatprep.mubr.f32.mxu0 0.0
    %2497 = vmatmul.mubr.f32.gmra.mxu0 %v2163
    %v2498 = vpop.f32.mrf.mxu0
    %v2499 = vadd.f32 %v2405, %v2498
    %v2500 = vpop.f32.mrf.mxu0
    %2501 = vmatprep.mubr.f32.mxu0 0.0
    %2502 = vmatmul.mubr.f32.gmra.mxu0 %v2166
    %v2503 = vpop.f32.mrf.mxu0
    %v2504 = vadd.f32 %v2405, %v2503
    %v2505 = vpop.f32.mrf.mxu0
    %2506 = vmatprep.mubr.f32.mxu0 0.0
    %2507 = vmatmul.mubr.f32.gmra.mxu0 %v2169
    %v2508 = vpop.f32.mrf.mxu0
    %v2509 = vadd.f32 %v2405, %v2508
    %v2510 = vpop.f32.mrf.mxu0
    %2511 = vdwg.mxu0
    %v2512 = vmul.f32 %v2356, %v433
    %v2513 = vmul.f32 %v2361, %v434
    %v2514 = vmul.f32 %v2366, %v435
    %v2515 = vmul.f32 %v2371, %v436
    %v2516 = vmul.f32 %v2376, %v437
    %v2517 = vmul.f32 %v2381, %v438
    %v2518 = vmul.f32 %v2386, %v439
    %v2519 = vmul.f32 %v2391, %v440
    %v2520 = vmul.f32 %v2356, %v441
    %v2521 = vmul.f32 %v2361, %v442
    %v2522 = vmul.f32 %v2366, %v443
    %v2523 = vmul.f32 %v2371, %v444
    %v2524 = vmul.f32 %v2376, %v445
    %v2525 = vmul.f32 %v2381, %v446
    %v2526 = vmul.f32 %v2386, %v447
    %v2527 = vmul.f32 %v2391, %v448
    %v2528 = vmul.f32 %v2356, %v449
    %v2529 = vmul.f32 %v2361, %v450
    %v2530 = vmul.f32 %v2366, %v451
    %v2531 = vmul.f32 %v2371, %v452
    %v2532 = vmul.f32 %v2376, %v453
    %v2533 = vmul.f32 %v2381, %v454
    %v2534 = vmul.f32 %v2386, %v455
    %v2535 = vmul.f32 %v2391, %v456
    %v2536 = vmul.f32 %v2356, %v457
    %v2537 = vmul.f32 %v2361, %v458
    %v2538 = vmul.f32 %v2366, %v459
    %v2539 = vmul.f32 %v2371, %v460
    %v2540 = vmul.f32 %v2376, %v461
    %v2541 = vmul.f32 %v2381, %v462
    %v2542 = vmul.f32 %v2386, %v463
    %v2543 = vmul.f32 %v2391, %v464
    %v2544 = vmul.f32 %v2474, %v433
    %v2545 = vmul.f32 %v2479, %v434
    %v2546 = vmul.f32 %v2484, %v435
    %v2547 = vmul.f32 %v2489, %v436
    %v2548 = vmul.f32 %v2494, %v437
    %v2549 = vmul.f32 %v2499, %v438
    %v2550 = vmul.f32 %v2504, %v439
    %v2551 = vmul.f32 %v2509, %v440
    %v2552 = vmul.f32 %v2474, %v441
    %v2553 = vmul.f32 %v2479, %v442
    %v2554 = vmul.f32 %v2484, %v443
    %v2555 = vmul.f32 %v2489, %v444
    %v2556 = vmul.f32 %v2494, %v445
    %v2557 = vmul.f32 %v2499, %v446
    %v2558 = vmul.f32 %v2504, %v447
    %v2559 = vmul.f32 %v2509, %v448
    %v2560 = vmul.f32 %v2474, %v449
    %v2561 = vmul.f32 %v2479, %v450
    %v2562 = vmul.f32 %v2484, %v451
    %v2563 = vmul.f32 %v2489, %v452
    %v2564 = vmul.f32 %v2494, %v453
    %v2565 = vmul.f32 %v2499, %v454
    %v2566 = vmul.f32 %v2504, %v455
    %v2567 = vmul.f32 %v2509, %v456
    %v2568 = vmul.f32 %v2474, %v457
    %v2569 = vmul.f32 %v2479, %v458
    %v2570 = vmul.f32 %v2484, %v459
    %v2571 = vmul.f32 %v2489, %v460
    %v2572 = vmul.f32 %v2494, %v461
    %v2573 = vmul.f32 %v2499, %v462
    %v2574 = vmul.f32 %v2504, %v463
    %v2575 = vmul.f32 %v2509, %v464
    %v2577 = vsel %vm476, %v2238, 0
    %v2580 = vsel %vm476, %v2243, 0
    %v2583 = vsel %vm476, %v2248, 0
    %v2586 = vsel %vm476, %v2253, 0
    %v2589 = vsel %vm476, %v2258, 0
    %v2592 = vsel %vm476, %v2263, 0
    %v2595 = vsel %vm476, %v2268, 0
    %v2598 = vsel %vm476, %v2273, 0
    %v2601 = vsel %vm476, %v2512, 0
    %v2604 = vsel %vm476, %v2513, 0
    %v2607 = vsel %vm476, %v2514, 0
    %v2610 = vsel %vm476, %v2515, 0
    %v2613 = vsel %vm476, %v2516, 0
    %v2616 = vsel %vm476, %v2517, 0
    %v2619 = vsel %vm476, %v2518, 0
    %v2622 = vsel %vm476, %v2519, 0
    %v2625 = vsel %vm476, %v2520, 0
    %v2628 = vsel %vm476, %v2521, 0
    %v2631 = vsel %vm476, %v2522, 0
    %v2634 = vsel %vm476, %v2523, 0
    %v2637 = vsel %vm476, %v2524, 0
    %v2640 = vsel %vm476, %v2525, 0
    %v2643 = vsel %vm476, %v2526, 0
    %v2646 = vsel %vm476, %v2527, 0
    %v2649 = vsel %vm476, %v2528, 0
    %v2652 = vsel %vm476, %v2529, 0
    %v2655 = vsel %vm476, %v2530, 0
    %v2658 = vsel %vm476, %v2531, 0
    %v2661 = vsel %vm476, %v2532, 0
    %v2664 = vsel %vm476, %v2533, 0
    %v2667 = vsel %vm476, %v2534, 0
    %v2670 = vsel %vm476, %v2535, 0
    %v2673 = vsel %vm476, %v2536, 0
    %v2676 = vsel %vm476, %v2537, 0
    %v2679 = vsel %vm476, %v2538, 0
    %v2682 = vsel %vm476, %v2539, 0
    %v2685 = vsel %vm476, %v2540, 0
    %v2688 = vsel %vm476, %v2541, 0
    %v2691 = vsel %vm476, %v2542, 0
    %v2694 = vsel %vm476, %v2543, 0
    %2696 = vmatprep.subr.mxu0 0.0
    %2697 = vmatpush1.xpose.msra.mxu0 %v2646
    %2698 = vmatprep.subr.mxu0 0.0
    %2699 = vmatpush1.xpose.msra.mxu0 %v2643
    %2700 = vmatprep.subr.mxu0 0.0
    %2701 = vmatpush1.xpose.msra.mxu0 %v2640
    %2702 = vmatprep.subr.mxu0 0.0
    %2703 = vmatpush1.xpose.msra.mxu0 %v2637
    %2704 = vmatprep.subr.mxu0 0.0
    %2705 = vmatpush1.xpose.msra.mxu0 %v2634
    %2706 = vmatprep.subr.mxu0 0.0
    %2707 = vmatpush1.xpose.msra.mxu0 %v2631
    %2708 = vmatprep.subr.mxu0 0.0
    %2709 = vmatpush1.xpose.msra.mxu0 %v2628
    %2710 = vmatprep.subr.mxu0 0.0
    %2711 = vmatpush1.xpose.msra.mxu0 %v2625
    %2712 = vmatprep.subr.mxu0 0.0
    %2713 = vmatpush1.xpose.msra.mxu0 %v2622
    %2714 = vmatprep.subr.mxu0 0.0
    %2715 = vmatpush1.xpose.msra.mxu0 %v2619
    %2716 = vmatprep.subr.mxu0 0.0
    %2717 = vmatpush1.xpose.msra.mxu0 %v2616
    %2718 = vmatprep.subr.mxu0 0.0
    %2719 = vmatpush1.xpose.msra.mxu0 %v2613
    %2720 = vmatprep.subr.mxu0 0.0
    %2721 = vmatpush1.xpose.msra.mxu0 %v2610
    %2722 = vmatprep.subr.mxu0 0.0
    %2723 = vmatpush1.xpose.msra.mxu0 %v2607
    %2724 = vmatprep.subr.mxu0 0.0
    %2725 = vmatpush1.xpose.msra.mxu0 %v2604
    %2726 = vmatprep.subr.mxu0 0.0
    %2727 = vmatpush1.xpose.msra.mxu0 %v2601
    %2728 = vmatprep.subr.mxu0 0.0
    %2729 = vmatpush2.xpose.msra.mxu0 %v2694
    %2730 = vmatprep.subr.mxu0 0.0
    %2731 = vmatpush2.xpose.msra.mxu0 %v2691
    %2732 = vmatprep.subr.mxu0 0.0
    %2733 = vmatpush2.xpose.msra.mxu0 %v2688
    %2734 = vmatprep.subr.mxu0 0.0
    %2735 = vmatpush2.xpose.msra.mxu0 %v2685
    %2736 = vmatprep.subr.mxu0 0.0
    %2737 = vmatpush2.xpose.msra.mxu0 %v2682
    %2738 = vmatprep.subr.mxu0 0.0
    %2739 = vmatpush2.xpose.msra.mxu0 %v2679
    %2740 = vmatprep.subr.mxu0 0.0
    %2741 = vmatpush2.xpose.msra.mxu0 %v2676
    %2742 = vmatprep.subr.mxu0 0.0
    %2743 = vmatpush2.xpose.msra.mxu0 %v2673
    %2744 = vmatprep.subr.mxu0 0.0
    %2745 = vmatpush2.xpose.msra.mxu0 %v2670
    %2746 = vmatprep.subr.mxu0 0.0
    %2747 = vmatpush2.xpose.msra.mxu0 %v2667
    %2748 = vmatprep.subr.mxu0 0.0
    %2749 = vmatpush2.xpose.msra.mxu0 %v2664
    %2750 = vmatprep.subr.mxu0 0.0
    %2751 = vmatpush2.xpose.msra.mxu0 %v2661
    %2752 = vmatprep.subr.mxu0 0.0
    %2753 = vmatpush2.xpose.msra.mxu0 %v2658
    %2754 = vmatprep.subr.mxu0 0.0
    %2755 = vmatpush2.xpose.msra.mxu0 %v2655
    %2756 = vmatprep.subr.mxu0 0.0
    %2757 = vmatpush2.xpose.msra.mxu0 %v2652
    %2758 = vmatprep.subr.mxu0 0.0
    %2759 = vmatpush2.xpose.msra.mxu0 %v2649
    %2760 = vmatprep.mubr.f32.mxu0 0.0
    %2761 = vmatmul.mubr.f32.gmra.mxu0 %v2577
    %v2762 = vpop.f32.mrf.mxu0
    %v2763 = vadd.f32 %v417, %v2762
    %v2764 = vpop.f32.mrf.mxu0
    %v2765 = vadd.f32 %v418, %v2764
    %2766 = vmatprep.mubr.f32.mxu0 0.0
    %2767 = vmatmul.mubr.f32.gmra.mxu0 %v2580
    %v2768 = vpop.f32.mrf.mxu0
    %v2769 = vadd.f32 %v419, %v2768
    %v2770 = vpop.f32.mrf.mxu0
    %v2771 = vadd.f32 %v420, %v2770
    %2772 = vmatprep.mubr.f32.mxu0 0.0
    %2773 = vmatmul.mubr.f32.gmra.mxu0 %v2583
    %v2774 = vpop.f32.mrf.mxu0
    %v2775 = vadd.f32 %v421, %v2774
    %v2776 = vpop.f32.mrf.mxu0
    %v2777 = vadd.f32 %v422, %v2776
    %2778 = vmatprep.mubr.f32.mxu0 0.0
    %2779 = vmatmul.mubr.f32.gmra.mxu0 %v2586
    %v2780 = vpop.f32.mrf.mxu0
    %v2781 = vadd.f32 %v423, %v2780
    %v2782 = vpop.f32.mrf.mxu0
    %v2783 = vadd.f32 %v424, %v2782
    %2784 = vmatprep.mubr.f32.mxu0 0.0
    %2785 = vmatmul.mubr.f32.gmra.mxu0 %v2589
    %v2786 = vpop.f32.mrf.mxu0
    %v2787 = vadd.f32 %v425, %v2786
    %v2788 = vpop.f32.mrf.mxu0
    %v2789 = vadd.f32 %v426, %v2788
    %2790 = vmatprep.mubr.f32.mxu0 0.0
    %2791 = vmatmul.mubr.f32.gmra.mxu0 %v2592
    %v2792 = vpop.f32.mrf.mxu0
    %v2793 = vadd.f32 %v427, %v2792
    %v2794 = vpop.f32.mrf.mxu0
    %v2795 = vadd.f32 %v428, %v2794
    %2796 = vmatprep.mubr.f32.mxu0 0.0
    %2797 = vmatmul.mubr.f32.gmra.mxu0 %v2595
    %v2798 = vpop.f32.mrf.mxu0
    %v2799 = vadd.f32 %v429, %v2798
    %v2800 = vpop.f32.mrf.mxu0
    %v2801 = vadd.f32 %v430, %v2800
    %2802 = vmatprep.mubr.f32.mxu0 0.0
    %2803 = vmatmul.mubr.f32.gmra.mxu0 %v2598
    %v2804 = vpop.f32.mrf.mxu0
    %v2805 = vadd.f32 %v431, %v2804
    %v2806 = vpop.f32.mrf.mxu0
    %v2807 = vadd.f32 %v432, %v2806
    %2808 = vdwg.mxu0
    %v2809 = vmax.f32 %v2763, %v2765
    %2810 = vmax.xlane.f32.xlu0 %v2809
    %v2811 = vpop.xlane.xlu0 %2810
    %v2812 = vmax.f32 %v2769, %v2771
    %2813 = vmax.xlane.f32.xlu0 %v2812
    %v2814 = vpop.xlane.xlu0 %2813
    %v2815 = vmax.f32 %v2775, %v2777
    %2816 = vmax.xlane.f32.xlu0 %v2815
    %v2817 = vpop.xlane.xlu0 %2816
    %v2818 = vmax.f32 %v2781, %v2783
    %2819 = vmax.xlane.f32.xlu0 %v2818
    %v2820 = vpop.xlane.xlu0 %2819
    %v2821 = vmax.f32 %v2787, %v2789
    %2822 = vmax.xlane.f32.xlu0 %v2821
    %v2823 = vpop.xlane.xlu0 %2822
    %v2824 = vmax.f32 %v2793, %v2795
    %2825 = vmax.xlane.f32.xlu0 %v2824
    %v2826 = vpop.xlane.xlu0 %2825
    %v2827 = vmax.f32 %v2799, %v2801
    %2828 = vmax.xlane.f32.xlu0 %v2827
    %v2829 = vpop.xlane.xlu0 %2828
    %v2830 = vmax.f32 %v2805, %v2807
    %2831 = vmax.xlane.f32.xlu0 %v2830
    %v2832 = vpop.xlane.xlu0 %2831
    %v2833 = vsub.f32 %v2763, %v2811
    %v2834 = vsub.f32 %v2765, %v2811
    %v2835 = vsub.f32 %v2769, %v2814
    %v2836 = vsub.f32 %v2771, %v2814
    %v2837 = vsub.f32 %v2775, %v2817
    %v2838 = vsub.f32 %v2777, %v2817
    %v2839 = vsub.f32 %v2781, %v2820
    %v2840 = vsub.f32 %v2783, %v2820
    %v2841 = vsub.f32 %v2787, %v2823
    %v2842 = vsub.f32 %v2789, %v2823
    %v2843 = vsub.f32 %v2793, %v2826
    %v2844 = vsub.f32 %v2795, %v2826
    %v2845 = vsub.f32 %v2799, %v2829
    %v2846 = vsub.f32 %v2801, %v2829
    %v2847 = vsub.f32 %v2805, %v2832
    %v2848 = vsub.f32 %v2807, %v2832
    %v2849 = vmul.f32 %v2833, 1.442695
    %v2850 = vpow.pop %v2849
    %v2851 = vmul.f32 %v2834, 1.442695
    %v2852 = vpow.pop %v2851
    %v2853 = vmul.f32 %v2835, 1.442695
    %v2854 = vpow.pop %v2853
    %v2855 = vmul.f32 %v2836, 1.442695
    %v2856 = vpow.pop %v2855
    %v2857 = vmul.f32 %v2837, 1.442695
    %v2858 = vpow.pop %v2857
    %v2859 = vmul.f32 %v2838, 1.442695
    %v2860 = vpow.pop %v2859
    %v2861 = vmul.f32 %v2839, 1.442695
    %v2862 = vpow.pop %v2861
    %v2863 = vmul.f32 %v2840, 1.442695
    %v2864 = vpow.pop %v2863
    %v2865 = vmul.f32 %v2841, 1.442695
    %v2866 = vpow.pop %v2865
    %v2867 = vmul.f32 %v2842, 1.442695
    %v2868 = vpow.pop %v2867
    %v2869 = vmul.f32 %v2843, 1.442695
    %v2870 = vpow.pop %v2869
    %v2871 = vmul.f32 %v2844, 1.442695
    %v2872 = vpow.pop %v2871
    %v2873 = vmul.f32 %v2845, 1.442695
    %v2874 = vpow.pop %v2873
    %v2875 = vmul.f32 %v2846, 1.442695
    %v2876 = vpow.pop %v2875
    %v2877 = vmul.f32 %v2847, 1.442695
    %v2878 = vpow.pop %v2877
    %v2879 = vmul.f32 %v2848, 1.442695
    %v2880 = vpow.pop %v2879
    %2881 = vmatprep.subr.mxu0 0.0
    %2882 = vmatpush1.msra.mxu0 %v2559
    %2883 = vmatprep.subr.mxu0 0.0
    %2884 = vmatpush1.msra.mxu0 %v2558
    %2885 = vmatprep.subr.mxu0 0.0
    %2886 = vmatpush1.msra.mxu0 %v2557
    %2887 = vmatprep.subr.mxu0 0.0
    %2888 = vmatpush1.msra.mxu0 %v2556
    %2889 = vmatprep.subr.mxu0 0.0
    %2890 = vmatpush1.msra.mxu0 %v2555
    %2891 = vmatprep.subr.mxu0 0.0
    %2892 = vmatpush1.msra.mxu0 %v2554
    %2893 = vmatprep.subr.mxu0 0.0
    %2894 = vmatpush1.msra.mxu0 %v2553
    %2895 = vmatprep.subr.mxu0 0.0
    %2896 = vmatpush1.msra.mxu0 %v2552
    %2897 = vmatprep.subr.mxu0 0.0
    %2898 = vmatpush1.msra.mxu0 %v2551
    %2899 = vmatprep.subr.mxu0 0.0
    %2900 = vmatpush1.msra.mxu0 %v2550
    %2901 = vmatprep.subr.mxu0 0.0
    %2902 = vmatpush1.msra.mxu0 %v2549
    %2903 = vmatprep.subr.mxu0 0.0
    %2904 = vmatpush1.msra.mxu0 %v2548
    %2905 = vmatprep.subr.mxu0 0.0
    %2906 = vmatpush1.msra.mxu0 %v2547
    %2907 = vmatprep.subr.mxu0 0.0
    %2908 = vmatpush1.msra.mxu0 %v2546
    %2909 = vmatprep.subr.mxu0 0.0
    %2910 = vmatpush1.msra.mxu0 %v2545
    %2911 = vmatprep.subr.mxu0 0.0
    %2912 = vmatpush1.msra.mxu0 %v2544
    %2913 = vmatprep.subr.mxu0 0.0
    %2914 = vmatpush2.msra.mxu0 %v2575
    %2915 = vmatprep.subr.mxu0 0.0
    %2916 = vmatpush2.msra.mxu0 %v2574
    %2917 = vmatprep.subr.mxu0 0.0
    %2918 = vmatpush2.msra.mxu0 %v2573
    %2919 = vmatprep.subr.mxu0 0.0
    %2920 = vmatpush2.msra.mxu0 %v2572
    %2921 = vmatprep.subr.mxu0 0.0
    %2922 = vmatpush2.msra.mxu0 %v2571
    %2923 = vmatprep.subr.mxu0 0.0
    %2924 = vmatpush2.msra.mxu0 %v2570
    %2925 = vmatprep.subr.mxu0 0.0
    %2926 = vmatpush2.msra.mxu0 %v2569
    %2927 = vmatprep.subr.mxu0 0.0
    %2928 = vmatpush2.msra.mxu0 %v2568
    %2929 = vmatprep.subr.mxu0 0.0
    %2930 = vmatpush2.msra.mxu0 %v2567
    %2931 = vmatprep.subr.mxu0 0.0
    %2932 = vmatpush2.msra.mxu0 %v2566
    %2933 = vmatprep.subr.mxu0 0.0
    %2934 = vmatpush2.msra.mxu0 %v2565
    %2935 = vmatprep.subr.mxu0 0.0
    %2936 = vmatpush2.msra.mxu0 %v2564
    %2937 = vmatprep.subr.mxu0 0.0
    %2938 = vmatpush2.msra.mxu0 %v2563
    %2939 = vmatprep.subr.mxu0 0.0
    %2940 = vmatpush2.msra.mxu0 %v2562
    %2941 = vmatprep.subr.mxu0 0.0
    %2942 = vmatpush2.msra.mxu0 %v2561
    %2943 = vmatprep.subr.mxu0 0.0
    %2944 = vmatpush2.msra.mxu0 %v2560
    %2945 = vmatprep.mubr.f32.mxu0 %v2852
    %2946 = vmatmul.mubr.f32.gmra.mxu0 %v2850
    %v2947 = vpop.f32.mrf.mxu0
    %v2948 = vadd.f32 0.0, %v2947
    %v2949 = vpop.f32.mrf.mxu0
    %2950 = vmatprep.mubr.f32.mxu0 %v2856
    %2951 = vmatmul.mubr.f32.gmra.mxu0 %v2854
    %v2952 = vpop.f32.mrf.mxu0
    %v2953 = vadd.f32 0.0, %v2952
    %v2954 = vpop.f32.mrf.mxu0
    %2955 = vmatprep.mubr.f32.mxu0 %v2860
    %2956 = vmatmul.mubr.f32.gmra.mxu0 %v2858
    %v2957 = vpop.f32.mrf.mxu0
    %v2958 = vadd.f32 0.0, %v2957
    %v2959 = vpop.f32.mrf.mxu0
    %2960 = vmatprep.mubr.f32.mxu0 %v2864
    %2961 = vmatmul.mubr.f32.gmra.mxu0 %v2862
    %v2962 = vpop.f32.mrf.mxu0
    %v2963 = vadd.f32 0.0, %v2962
    %v2964 = vpop.f32.mrf.mxu0
    %2965 = vmatprep.mubr.f32.mxu0 %v2868
    %2966 = vmatmul.mubr.f32.gmra.mxu0 %v2866
    %v2967 = vpop.f32.mrf.mxu0
    %v2968 = vadd.f32 0.0, %v2967
    %v2969 = vpop.f32.mrf.mxu0
    %2970 = vmatprep.mubr.f32.mxu0 %v2872
    %2971 = vmatmul.mubr.f32.gmra.mxu0 %v2870
    %v2972 = vpop.f32.mrf.mxu0
    %v2973 = vadd.f32 0.0, %v2972
    %v2974 = vpop.f32.mrf.mxu0
    %2975 = vmatprep.mubr.f32.mxu0 %v2876
    %2976 = vmatmul.mubr.f32.gmra.mxu0 %v2874
    %v2977 = vpop.f32.mrf.mxu0
    %v2978 = vadd.f32 0.0, %v2977
    %v2979 = vpop.f32.mrf.mxu0
    %2980 = vmatprep.mubr.f32.mxu0 %v2880
    %2981 = vmatmul.mubr.f32.gmra.mxu0 %v2878
    %v2982 = vpop.f32.mrf.mxu0
    %v2983 = vadd.f32 0.0, %v2982
    %v2984 = vpop.f32.mrf.mxu0
    %2985 = vdwg.mxu0
    %2986 = vmatprep.subr.mxu0 0.0
    %2987 = vmatpush1.msra.mxu0 %v448
    %2988 = vmatprep.subr.mxu0 0.0
    %2989 = vmatpush1.msra.mxu0 %v447
    %2990 = vmatprep.subr.mxu0 0.0
    %2991 = vmatpush1.msra.mxu0 %v446
    %2992 = vmatprep.subr.mxu0 0.0
    %2993 = vmatpush1.msra.mxu0 %v445
    %2994 = vmatprep.subr.mxu0 0.0
    %2995 = vmatpush1.msra.mxu0 %v444
    %2996 = vmatprep.subr.mxu0 0.0
    %2997 = vmatpush1.msra.mxu0 %v443
    %2998 = vmatprep.subr.mxu0 0.0
    %2999 = vmatpush1.msra.mxu0 %v442
    %3000 = vmatprep.subr.mxu0 0.0
    %3001 = vmatpush1.msra.mxu0 %v441
    %3002 = vmatprep.subr.mxu0 0.0
    %3003 = vmatpush1.msra.mxu0 %v440
    %3004 = vmatprep.subr.mxu0 0.0
    %3005 = vmatpush1.msra.mxu0 %v439
    %3006 = vmatprep.subr.mxu0 0.0
    %3007 = vmatpush1.msra.mxu0 %v438
    %3008 = vmatprep.subr.mxu0 0.0
    %3009 = vmatpush1.msra.mxu0 %v437
    %3010 = vmatprep.subr.mxu0 0.0
    %3011 = vmatpush1.msra.mxu0 %v436
    %3012 = vmatprep.subr.mxu0 0.0
    %3013 = vmatpush1.msra.mxu0 %v435
    %3014 = vmatprep.subr.mxu0 0.0
    %3015 = vmatpush1.msra.mxu0 %v434
    %3016 = vmatprep.subr.mxu0 0.0
    %3017 = vmatpush1.msra.mxu0 %v433
    %3018 = vmatprep.subr.mxu0 0.0
    %3019 = vmatpush2.msra.mxu0 %v464
    %3020 = vmatprep.subr.mxu0 0.0
    %3021 = vmatpush2.msra.mxu0 %v463
    %3022 = vmatprep.subr.mxu0 0.0
    %3023 = vmatpush2.msra.mxu0 %v462
    %3024 = vmatprep.subr.mxu0 0.0
    %3025 = vmatpush2.msra.mxu0 %v461
    %3026 = vmatprep.subr.mxu0 0.0
    %3027 = vmatpush2.msra.mxu0 %v460
    %3028 = vmatprep.subr.mxu0 0.0
    %3029 = vmatpush2.msra.mxu0 %v459
    %3030 = vmatprep.subr.mxu0 0.0
    %3031 = vmatpush2.msra.mxu0 %v458
    %3032 = vmatprep.subr.mxu0 0.0
    %3033 = vmatpush2.msra.mxu0 %v457
    %3034 = vmatprep.subr.mxu0 0.0
    %3035 = vmatpush2.msra.mxu0 %v456
    %3036 = vmatprep.subr.mxu0 0.0
    %3037 = vmatpush2.msra.mxu0 %v455
    %3038 = vmatprep.subr.mxu0 0.0
    %3039 = vmatpush2.msra.mxu0 %v454
    %3040 = vmatprep.subr.mxu0 0.0
    %3041 = vmatpush2.msra.mxu0 %v453
    %3042 = vmatprep.subr.mxu0 0.0
    %3043 = vmatpush2.msra.mxu0 %v452
    %3044 = vmatprep.subr.mxu0 0.0
    %3045 = vmatpush2.msra.mxu0 %v451
    %3046 = vmatprep.subr.mxu0 0.0
    %3047 = vmatpush2.msra.mxu0 %v450
    %3048 = vmatprep.subr.mxu0 0.0
    %3049 = vmatpush2.msra.mxu0 %v449
    %3050 = vmatprep.mubr.f32.mxu0 %v2852
    %3051 = vmatmul.mubr.f32.gmra.mxu0 %v2850
    %v3052 = vpop.f32.mrf.mxu0
    %v3053 = vadd.f32 0.0, %v3052
    %v3054 = vpop.f32.mrf.mxu0
    %3055 = vmatprep.mubr.f32.mxu0 %v2856
    %3056 = vmatmul.mubr.f32.gmra.mxu0 %v2854
    %v3057 = vpop.f32.mrf.mxu0
    %v3058 = vadd.f32 0.0, %v3057
    %v3059 = vpop.f32.mrf.mxu0
    %3060 = vmatprep.mubr.f32.mxu0 %v2860
    %3061 = vmatmul.mubr.f32.gmra.mxu0 %v2858
    %v3062 = vpop.f32.mrf.mxu0
    %v3063 = vadd.f32 0.0, %v3062
    %v3064 = vpop.f32.mrf.mxu0
    %3065 = vmatprep.mubr.f32.mxu0 %v2864
    %3066 = vmatmul.mubr.f32.gmra.mxu0 %v2862
    %v3067 = vpop.f32.mrf.mxu0
    %v3068 = vadd.f32 0.0, %v3067
    %v3069 = vpop.f32.mrf.mxu0
    %3070 = vmatprep.mubr.f32.mxu0 %v2868
    %3071 = vmatmul.mubr.f32.gmra.mxu0 %v2866
    %v3072 = vpop.f32.mrf.mxu0
    %v3073 = vadd.f32 0.0, %v3072
    %v3074 = vpop.f32.mrf.mxu0
    %3075 = vmatprep.mubr.f32.mxu0 %v2872
    %3076 = vmatmul.mubr.f32.gmra.mxu0 %v2870
    %v3077 = vpop.f32.mrf.mxu0
    %v3078 = vadd.f32 0.0, %v3077
    %v3079 = vpop.f32.mrf.mxu0
    %3080 = vmatprep.mubr.f32.mxu0 %v2876
    %3081 = vmatmul.mubr.f32.gmra.mxu0 %v2874
    %v3082 = vpop.f32.mrf.mxu0
    %v3083 = vadd.f32 0.0, %v3082
    %v3084 = vpop.f32.mrf.mxu0
    %3085 = vmatprep.mubr.f32.mxu0 %v2880
    %3086 = vmatmul.mubr.f32.gmra.mxu0 %v2878
    %v3087 = vpop.f32.mrf.mxu0
    %v3088 = vadd.f32 0.0, %v3087
    %v3089 = vpop.f32.mrf.mxu0
    %3090 = vdwg.mxu0
    %v3091 = vrcp.pop %v3053
    %v3092 = vrcp.pop %v3058
    %v3093 = vrcp.pop %v3063
    %v3094 = vrcp.pop %v3068
    %v3095 = vrcp.pop %v3073
    %v3096 = vrcp.pop %v3078
    %v3097 = vrcp.pop %v3083
    %v3098 = vrcp.pop %v3088
    %v3099 = vmul.f32 %v2948, %v3091
    %v3100 = vmul.f32 %v2953, %v3092
    %v3101 = vmul.f32 %v2958, %v3093
    %v3102 = vmul.f32 %v2963, %v3094
    %v3103 = vmul.f32 %v2968, %v3095
    %v3104 = vmul.f32 %v2973, %v3096
    %v3105 = vmul.f32 %v2978, %v3097
    %v3106 = vmul.f32 %v2983, %v3098
    %s3107 = scalar_lea.vmem %s29, 32
    %v3108 = vld [vmem:[%s3107] sm:$0xff]
    %v3109 = vld [vmem:[%s3107 + $0x8] sm:$0xff]
    %v3110 = vld [vmem:[%s3107 + $0x10] sm:$0xff]
    %v3111 = vld [vmem:[%s3107 + $0x18] sm:$0xff]
    %s3112 = scalar_lea.vmem %s31, 1
    %v3113 = vld [vmem:[%s3112] sm:$0x1]
    %v3115 = vlaneseq
    %v3116 = vshrl.u32 %v3115, 7
    %v3117 = vsub.s32 0, %v3116
    %v3118 = vrot.slane %v3113, %v3117
    %v3121 = vsel %vm476, %v3099, 0
    %v3124 = vsel %vm476, %v3100, 0
    %v3127 = vsel %vm476, %v3101, 0
    %v3130 = vsel %vm476, %v3102, 0
    %v3133 = vsel %vm476, %v3103, 0
    %v3136 = vsel %vm476, %v3104, 0
    %v3139 = vsel %vm476, %v3105, 0
    %v3142 = vsel %vm476, %v3106, 0
    %3144 = vmatprep.subr.mxu0 0.0
    %3145 = vmatpush1.msra.mxu0 0.0
    %3146 = vmatprep.subr.mxu0 0.0
    %3147 = vmatpush1.msra.mxu0 0.0
    %3148 = vmatprep.subr.mxu0 0.0
    %3149 = vmatpush1.msra.mxu0 0.0
    %3150 = vmatprep.subr.mxu0 0.0
    %3151 = vmatpush1.msra.mxu0 0.0
    %3152 = vmatprep.subr.mxu0 0.0
    %3153 = vmatpush1.msra.mxu0 0.0
    %3154 = vmatprep.subr.mxu0 0.0
    %3155 = vmatpush1.msra.mxu0 0.0
    %3156 = vmatprep.subr.mxu0 0.0
    %3157 = vmatpush1.msra.mxu0 0.0
    %3158 = vmatprep.subr.mxu0 0.0
    %3159 = vmatpush1.msra.mxu0 0.0
    %3160 = vmatprep.subr.mxu0 0.0
    %3161 = vmatpush1.msra.mxu0 0.0
    %3162 = vmatprep.subr.mxu0 0.0
    %3163 = vmatpush1.msra.mxu0 0.0
    %3164 = vmatprep.subr.mxu0 0.0
    %3165 = vmatpush1.msra.mxu0 0.0
    %3166 = vmatprep.subr.mxu0 0.0
    %3167 = vmatpush1.msra.mxu0 0.0
    %3168 = vmatprep.subr.mxu0 0.0
    %3169 = vmatpush1.msra.mxu0 %v3111
    %3170 = vmatprep.subr.mxu0 0.0
    %3171 = vmatpush1.msra.mxu0 %v3110
    %3172 = vmatprep.subr.mxu0 0.0
    %3173 = vmatpush1.msra.mxu0 %v3109
    %3174 = vmatprep.subr.mxu0 0.0
    %3175 = vmatpush1.msra.mxu0 %v3108
    %3176 = vmatprep.subr.mxu0 0.0
    %3177 = vmatpush2.msra.mxu0 0.0
    %3178 = vmatprep.subr.mxu0 0.0
    %3179 = vmatpush2.msra.mxu0 0.0
    %3180 = vmatprep.subr.mxu0 0.0
    %3181 = vmatpush2.msra.mxu0 0.0
    %3182 = vmatprep.subr.mxu0 0.0
    %3183 = vmatpush2.msra.mxu0 0.0
    %3184 = vmatprep.subr.mxu0 0.0
    %3185 = vmatpush2.msra.mxu0 0.0
    %3186 = vmatprep.subr.mxu0 0.0
    %3187 = vmatpush2.msra.mxu0 0.0
    %3188 = vmatprep.subr.mxu0 0.0
    %3189 = vmatpush2.msra.mxu0 0.0
    %3190 = vmatprep.subr.mxu0 0.0
    %3191 = vmatpush2.msra.mxu0 0.0
    %3192 = vmatprep.subr.mxu0 0.0
    %3193 = vmatpush2.msra.mxu0 0.0
    %3194 = vmatprep.subr.mxu0 0.0
    %3195 = vmatpush2.msra.mxu0 0.0
    %3196 = vmatprep.subr.mxu0 0.0
    %3197 = vmatpush2.msra.mxu0 0.0
    %3198 = vmatprep.subr.mxu0 0.0
    %3199 = vmatpush2.msra.mxu0 0.0
    %3200 = vmatprep.subr.mxu0 0.0
    %3201 = vmatpush2.msra.mxu0 0.0
    %3202 = vmatprep.subr.mxu0 0.0
    %3203 = vmatpush2.msra.mxu0 0.0
    %3204 = vmatprep.subr.mxu0 0.0
    %3205 = vmatpush2.msra.mxu0 0.0
    %3206 = vmatprep.subr.mxu0 0.0
    %3207 = vmatpush2.msra.mxu0 0.0
    %3208 = vmatprep.mubr.f32.mxu0 0.0
    %3209 = vmatmul.mubr.f32.gmra.mxu0 %v3121
    %v3210 = vpop.f32.mrf.mxu0
    %v3211 = vadd.f32 %v3118, %v3210
    %v3212 = vpop.f32.mrf.mxu0
    %3213 = vmatprep.mubr.f32.mxu0 0.0
    %3214 = vmatmul.mubr.f32.gmra.mxu0 %v3124
    %v3215 = vpop.f32.mrf.mxu0
    %v3216 = vadd.f32 %v3118, %v3215
    %v3217 = vpop.f32.mrf.mxu0
    %3218 = vmatprep.mubr.f32.mxu0 0.0
    %3219 = vmatmul.mubr.f32.gmra.mxu0 %v3127
    %v3220 = vpop.f32.mrf.mxu0
    %v3221 = vadd.f32 %v3118, %v3220
    %v3222 = vpop.f32.mrf.mxu0
    %3223 = vmatprep.mubr.f32.mxu0 0.0
    %3224 = vmatmul.mubr.f32.gmra.mxu0 %v3130
    %v3225 = vpop.f32.mrf.mxu0
    %v3226 = vadd.f32 %v3118, %v3225
    %v3227 = vpop.f32.mrf.mxu0
    %3228 = vmatprep.mubr.f32.mxu0 0.0
    %3229 = vmatmul.mubr.f32.gmra.mxu0 %v3133
    %v3230 = vpop.f32.mrf.mxu0
    %v3231 = vadd.f32 %v3118, %v3230
    %v3232 = vpop.f32.mrf.mxu0
    %3233 = vmatprep.mubr.f32.mxu0 0.0
    %3234 = vmatmul.mubr.f32.gmra.mxu0 %v3136
    %v3235 = vpop.f32.mrf.mxu0
    %v3236 = vadd.f32 %v3118, %v3235
    %v3237 = vpop.f32.mrf.mxu0
    %3238 = vmatprep.mubr.f32.mxu0 0.0
    %3239 = vmatmul.mubr.f32.gmra.mxu0 %v3139
    %v3240 = vpop.f32.mrf.mxu0
    %v3241 = vadd.f32 %v3118, %v3240
    %v3242 = vpop.f32.mrf.mxu0
    %3243 = vmatprep.mubr.f32.mxu0 0.0
    %3244 = vmatmul.mubr.f32.gmra.mxu0 %v3142
    %v3245 = vpop.f32.mrf.mxu0
    %v3246 = vadd.f32 %v3118, %v3245
    %v3247 = vpop.f32.mrf.mxu0
    %3248 = vdwg.mxu0
    %v3249 = vadd.f32 %v2126, %v3211
    %v3250 = vadd.f32 %v2127, %v3216
    %v3251 = vadd.f32 %v2128, %v3221
    %v3252 = vadd.f32 %v2129, %v3226
    %v3253 = vadd.f32 %v2130, %v3231
    %v3254 = vadd.f32 %v2131, %v3236
    %v3255 = vadd.f32 %v2132, %v3241
    %v3256 = vadd.f32 %v2133, %v3246
    %s3257 = scalar_lea.vmem %s33, 1
    %v3258 = vld [vmem:[%s3257] sm:$0x1]
    %s3259 = scalar_lea.vmem %s35, 1
    %v3260 = vld [vmem:[%s3259] sm:$0x1]
    %v3261 = vsel %vm476, %v3249, 0.0
    %3262 = vadd.xlane.f32.xlu0 %v3261
    %v3263 = vpop.xlane.xlu0 %3262
    %v3264 = vsel %vm476, %v3250, 0.0
    %3265 = vadd.xlane.f32.xlu0 %v3264
    %v3266 = vpop.xlane.xlu0 %3265
    %v3267 = vsel %vm476, %v3251, 0.0
    %3268 = vadd.xlane.f32.xlu0 %v3267
    %v3269 = vpop.xlane.xlu0 %3268
    %v3270 = vsel %vm476, %v3252, 0.0
    %3271 = vadd.xlane.f32.xlu0 %v3270
    %v3272 = vpop.xlane.xlu0 %3271
    %v3273 = vsel %vm476, %v3253, 0.0
    %3274 = vadd.xlane.f32.xlu0 %v3273
    %v3275 = vpop.xlane.xlu0 %3274
    %v3276 = vsel %vm476, %v3254, 0.0
    %3277 = vadd.xlane.f32.xlu0 %v3276
    %v3278 = vpop.xlane.xlu0 %3277
    %v3279 = vsel %vm476, %v3255, 0.0
    %3280 = vadd.xlane.f32.xlu0 %v3279
    %v3281 = vpop.xlane.xlu0 %3280
    %v3282 = vsel %vm476, %v3256, 0.0
    %3283 = vadd.xlane.f32.xlu0 %v3282
    %v3284 = vpop.xlane.xlu0 %3283
    %v3285 = vmul.f32 %v3263, %v1607
    %v3286 = vmul.f32 %v3266, %v1607
    %v3287 = vmul.f32 %v3269, %v1607
    %v3288 = vmul.f32 %v3272, %v1607
    %v3289 = vmul.f32 %v3275, %v1607
    %v3290 = vmul.f32 %v3278, %v1607
    %v3291 = vmul.f32 %v3281, %v1607
    %v3292 = vmul.f32 %v3284, %v1607
    %v3293 = vsub.f32 %v3249, %v3285
    %v3294 = vsub.f32 %v3250, %v3286
    %v3295 = vsub.f32 %v3251, %v3287
    %v3296 = vsub.f32 %v3252, %v3288
    %v3297 = vsub.f32 %v3253, %v3289
    %v3298 = vsub.f32 %v3254, %v3290
    %v3299 = vsub.f32 %v3255, %v3291
    %v3300 = vsub.f32 %v3256, %v3292
    %v3301 = vmul.f32 %v3293, %v3293
    %v3302 = vmul.f32 %v3294, %v3294
    %v3303 = vmul.f32 %v3295, %v3295
    %v3304 = vmul.f32 %v3296, %v3296
    %v3305 = vmul.f32 %v3297, %v3297
    %v3306 = vmul.f32 %v3298, %v3298
    %v3307 = vmul.f32 %v3299, %v3299
    %v3308 = vmul.f32 %v3300, %v3300
    %v3309 = vsel %vm476, %v3301, 0.0
    %3310 = vadd.xlane.f32.xlu0 %v3309
    %v3311 = vpop.xlane.xlu0 %3310
    %v3312 = vsel %vm476, %v3302, 0.0
    %3313 = vadd.xlane.f32.xlu0 %v3312
    %v3314 = vpop.xlane.xlu0 %3313
    %v3315 = vsel %vm476, %v3303, 0.0
    %3316 = vadd.xlane.f32.xlu0 %v3315
    %v3317 = vpop.xlane.xlu0 %3316
    %v3318 = vsel %vm476, %v3304, 0.0
    %3319 = vadd.xlane.f32.xlu0 %v3318
    %v3320 = vpop.xlane.xlu0 %3319
    %v3321 = vsel %vm476, %v3305, 0.0
    %3322 = vadd.xlane.f32.xlu0 %v3321
    %v3323 = vpop.xlane.xlu0 %3322
    %v3324 = vsel %vm476, %v3306, 0.0
    %3325 = vadd.xlane.f32.xlu0 %v3324
    %v3326 = vpop.xlane.xlu0 %3325
    %v3327 = vsel %vm476, %v3307, 0.0
    %3328 = vadd.xlane.f32.xlu0 %v3327
    %v3329 = vpop.xlane.xlu0 %3328
    %v3330 = vsel %vm476, %v3308, 0.0
    %3331 = vadd.xlane.f32.xlu0 %v3330
    %v3332 = vpop.xlane.xlu0 %3331
    %v3333 = vmul.f32 %v3311, %v1607
    %v3334 = vmul.f32 %v3314, %v1607
    %v3335 = vmul.f32 %v3317, %v1607
    %v3336 = vmul.f32 %v3320, %v1607
    %v3337 = vmul.f32 %v3323, %v1607
    %v3338 = vmul.f32 %v3326, %v1607
    %v3339 = vmul.f32 %v3329, %v1607
    %v3340 = vmul.f32 %v3332, %v1607
    %v3341 = vadd.f32 %v3333, 1e-05
    %v3342 = vadd.f32 %v3334, 1e-05
    %v3343 = vadd.f32 %v3335, 1e-05
    %v3344 = vadd.f32 %v3336, 1e-05
    %v3345 = vadd.f32 %v3337, 1e-05
    %v3346 = vadd.f32 %v3338, 1e-05
    %v3347 = vadd.f32 %v3339, 1e-05
    %v3348 = vadd.f32 %v3340, 1e-05
    %v3349 = vrsqrt.pop %v3341
    %v3350 = vrsqrt.pop %v3342
    %v3351 = vrsqrt.pop %v3343
    %v3352 = vrsqrt.pop %v3344
    %v3353 = vrsqrt.pop %v3345
    %v3354 = vrsqrt.pop %v3346
    %v3355 = vrsqrt.pop %v3347
    %v3356 = vrsqrt.pop %v3348
    %v3357 = vmul.f32 %v3293, %v3349
    %v3358 = vmul.f32 %v3294, %v3350
    %v3359 = vmul.f32 %v3295, %v3351
    %v3360 = vmul.f32 %v3296, %v3352
    %v3361 = vmul.f32 %v3297, %v3353
    %v3362 = vmul.f32 %v3298, %v3354
    %v3363 = vmul.f32 %v3299, %v3355
    %v3364 = vmul.f32 %v3300, %v3356
    %v3366 = vlaneseq
    %v3367 = vshrl.u32 %v3366, 7
    %v3368 = vsub.s32 0, %v3367
    %v3369 = vrot.slane %v3258, %v3368
    %v3371 = vmul.f32 %v3357, %v3369
    %v3372 = vmul.f32 %v3358, %v3369
    %v3373 = vmul.f32 %v3359, %v3369
    %v3374 = vmul.f32 %v3360, %v3369
    %v3375 = vmul.f32 %v3361, %v3369
    %v3376 = vmul.f32 %v3362, %v3369
    %v3377 = vmul.f32 %v3363, %v3369
    %v3378 = vmul.f32 %v3364, %v3369
    %v3380 = vlaneseq
    %v3381 = vshrl.u32 %v3380, 7
    %v3382 = vsub.s32 0, %v3381
    %v3383 = vrot.slane %v3260, %v3382
    %v3385 = vadd.f32 %v3371, %v3383
    %v3386 = vadd.f32 %v3372, %v3383
    %v3387 = vadd.f32 %v3373, %v3383
    %v3388 = vadd.f32 %v3374, %v3383
    %v3389 = vadd.f32 %v3375, %v3383
    %v3390 = vadd.f32 %v3376, %v3383
    %v3391 = vadd.f32 %v3377, %v3383
    %v3392 = vadd.f32 %v3378, %v3383
    %s3393 = scalar_lea.vmem %s37, 32
    %v3394 = vld [vmem:[%s3393] sm:$0xff]
    %v3395 = vld [vmem:[%s3393 + $0x8] sm:$0xff]
    %v3396 = vld [vmem:[%s3393 + $0x10] sm:$0xff]
    %v3397 = vld [vmem:[%s3393 + $0x18] sm:$0xff]
    %s3398 = scalar_lea.vmem %s39, 1
    %v3399 = vld [vmem:[%s3398] sm:$0x1]
    %v3401 = vlaneseq
    %v3402 = vshrl.u32 %v3401, 7
    %v3403 = vsub.s32 0, %v3402
    %v3404 = vrot.slane %v3399, %v3403
    %v3407 = vsel %vm476, %v3385, 0
    %v3410 = vsel %vm476, %v3386, 0
    %v3413 = vsel %vm476, %v3387, 0
    %v3416 = vsel %vm476, %v3388, 0
    %v3419 = vsel %vm476, %v3389, 0
    %v3422 = vsel %vm476, %v3390, 0
    %v3425 = vsel %vm476, %v3391, 0
    %v3428 = vsel %vm476, %v3392, 0
    %3430 = vmatprep.subr.mxu0 0.0
    %3431 = vmatpush1.msra.mxu0 0.0
    %3432 = vmatprep.subr.mxu0 0.0
    %3433 = vmatpush1.msra.mxu0 0.0
    %3434 = vmatprep.subr.mxu0 0.0
    %3435 = vmatpush1.msra.mxu0 0.0
    %3436 = vmatprep.subr.mxu0 0.0
    %3437 = vmatpush1.msra.mxu0 0.0
    %3438 = vmatprep.subr.mxu0 0.0
    %3439 = vmatpush1.msra.mxu0 0.0
    %3440 = vmatprep.subr.mxu0 0.0
    %3441 = vmatpush1.msra.mxu0 0.0
    %3442 = vmatprep.subr.mxu0 0.0
    %3443 = vmatpush1.msra.mxu0 0.0
    %3444 = vmatprep.subr.mxu0 0.0
    %3445 = vmatpush1.msra.mxu0 0.0
    %3446 = vmatprep.subr.mxu0 0.0
    %3447 = vmatpush1.msra.mxu0 0.0
    %3448 = vmatprep.subr.mxu0 0.0
    %3449 = vmatpush1.msra.mxu0 0.0
    %3450 = vmatprep.subr.mxu0 0.0
    %3451 = vmatpush1.msra.mxu0 0.0
    %3452 = vmatprep.subr.mxu0 0.0
    %3453 = vmatpush1.msra.mxu0 0.0
    %3454 = vmatprep.subr.mxu0 0.0
    %3455 = vmatpush1.msra.mxu0 %v3397
    %3456 = vmatprep.subr.mxu0 0.0
    %3457 = vmatpush1.msra.mxu0 %v3396
    %3458 = vmatprep.subr.mxu0 0.0
    %3459 = vmatpush1.msra.mxu0 %v3395
    %3460 = vmatprep.subr.mxu0 0.0
    %3461 = vmatpush1.msra.mxu0 %v3394
    %3462 = vmatprep.subr.mxu0 0.0
    %3463 = vmatpush2.msra.mxu0 0.0
    %3464 = vmatprep.subr.mxu0 0.0
    %3465 = vmatpush2.msra.mxu0 0.0
    %3466 = vmatprep.subr.mxu0 0.0
    %3467 = vmatpush2.msra.mxu0 0.0
    %3468 = vmatprep.subr.mxu0 0.0
    %3469 = vmatpush2.msra.mxu0 0.0
    %3470 = vmatprep.subr.mxu0 0.0
    %3471 = vmatpush2.msra.mxu0 0.0
    %3472 = vmatprep.subr.mxu0 0.0
    %3473 = vmatpush2.msra.mxu0 0.0
    %3474 = vmatprep.subr.mxu0 0.0
    %3475 = vmatpush2.msra.mxu0 0.0
    %3476 = vmatprep.subr.mxu0 0.0
    %3477 = vmatpush2.msra.mxu0 0.0
    %3478 = vmatprep.subr.mxu0 0.0
    %3479 = vmatpush2.msra.mxu0 0.0
    %3480 = vmatprep.subr.mxu0 0.0
    %3481 = vmatpush2.msra.mxu0 0.0
    %3482 = vmatprep.subr.mxu0 0.0
    %3483 = vmatpush2.msra.mxu0 0.0
    %3484 = vmatprep.subr.mxu0 0.0
    %3485 = vmatpush2.msra.mxu0 0.0
    %3486 = vmatprep.subr.mxu0 0.0
    %3487 = vmatpush2.msra.mxu0 0.0
    %3488 = vmatprep.subr.mxu0 0.0
    %3489 = vmatpush2.msra.mxu0 0.0
    %3490 = vmatprep.subr.mxu0 0.0
    %3491 = vmatpush2.msra.mxu0 0.0
    %3492 = vmatprep.subr.mxu0 0.0
    %3493 = vmatpush2.msra.mxu0 0.0
    %3494 = vmatprep.mubr.f32.mxu0 0.0
    %3495 = vmatmul.mubr.f32.gmra.mxu0 %v3407
    %v3496 = vpop.f32.mrf.mxu0
    %v3497 = vadd.f32 %v3404, %v3496
    %v3498 = vpop.f32.mrf.mxu0
    %3499 = vmatprep.mubr.f32.mxu0 0.0
    %3500 = vmatmul.mubr.f32.gmra.mxu0 %v3410
    %v3501 = vpop.f32.mrf.mxu0
    %v3502 = vadd.f32 %v3404, %v3501
    %v3503 = vpop.f32.mrf.mxu0
    %3504 = vmatprep.mubr.f32.mxu0 0.0
    %3505 = vmatmul.mubr.f32.gmra.mxu0 %v3413
    %v3506 = vpop.f32.mrf.mxu0
    %v3507 = vadd.f32 %v3404, %v3506
    %v3508 = vpop.f32.mrf.mxu0
    %3509 = vmatprep.mubr.f32.mxu0 0.0
    %3510 = vmatmul.mubr.f32.gmra.mxu0 %v3416
    %v3511 = vpop.f32.mrf.mxu0
    %v3512 = vadd.f32 %v3404, %v3511
    %v3513 = vpop.f32.mrf.mxu0
    %3514 = vmatprep.mubr.f32.mxu0 0.0
    %3515 = vmatmul.mubr.f32.gmra.mxu0 %v3419
    %v3516 = vpop.f32.mrf.mxu0
    %v3517 = vadd.f32 %v3404, %v3516
    %v3518 = vpop.f32.mrf.mxu0
    %3519 = vmatprep.mubr.f32.mxu0 0.0
    %3520 = vmatmul.mubr.f32.gmra.mxu0 %v3422
    %v3521 = vpop.f32.mrf.mxu0
    %v3522 = vadd.f32 %v3404, %v3521
    %v3523 = vpop.f32.mrf.mxu0
    %3524 = vmatprep.mubr.f32.mxu0 0.0
    %3525 = vmatmul.mubr.f32.gmra.mxu0 %v3425
    %v3526 = vpop.f32.mrf.mxu0
    %v3527 = vadd.f32 %v3404, %v3526
    %v3528 = vpop.f32.mrf.mxu0
    %3529 = vmatprep.mubr.f32.mxu0 0.0
    %3530 = vmatmul.mubr.f32.gmra.mxu0 %v3428
    %v3531 = vpop.f32.mrf.mxu0
    %v3532 = vadd.f32 %v3404, %v3531
    %v3533 = vpop.f32.mrf.mxu0
    %3534 = vdwg.mxu0
    %v3535 = vmax.f32 %v3497, 0.0
    %v3536 = vmax.f32 %v3502, 0.0
    %v3537 = vmax.f32 %v3507, 0.0
    %v3538 = vmax.f32 %v3512, 0.0
    %v3539 = vmax.f32 %v3517, 0.0
    %v3540 = vmax.f32 %v3522, 0.0
    %v3541 = vmax.f32 %v3527, 0.0
    %v3542 = vmax.f32 %v3532, 0.0
    %s3543 = scalar_lea.vmem %s41, 128
    %v3544 = vld [vmem:[%s3543] sm:$0xff]
    %v3545 = vld [vmem:[%s3543 + $0x8] sm:$0xff]
    %v3546 = vld [vmem:[%s3543 + $0x10] sm:$0xff]
    %v3547 = vld [vmem:[%s3543 + $0x18] sm:$0xff]
    %v3548 = vld [vmem:[%s3543 + $0x20] sm:$0xff]
    %v3549 = vld [vmem:[%s3543 + $0x28] sm:$0xff]
    %v3550 = vld [vmem:[%s3543 + $0x30] sm:$0xff]
    %v3551 = vld [vmem:[%s3543 + $0x38] sm:$0xff]
    %v3552 = vld [vmem:[%s3543 + $0x40] sm:$0xff]
    %v3553 = vld [vmem:[%s3543 + $0x48] sm:$0xff]
    %v3554 = vld [vmem:[%s3543 + $0x50] sm:$0xff]
    %v3555 = vld [vmem:[%s3543 + $0x58] sm:$0xff]
    %v3556 = vld [vmem:[%s3543 + $0x60] sm:$0xff]
    %v3557 = vld [vmem:[%s3543 + $0x68] sm:$0xff]
    %v3558 = vld [vmem:[%s3543 + $0x70] sm:$0xff]
    %v3559 = vld [vmem:[%s3543 + $0x78] sm:$0xff]
    %s3560 = scalar_lea.vmem %s43, 1
    %v3561 = vld [vmem:[%s3560] sm:$0x1]
    %v3563 = vlaneseq
    %v3564 = vshrl.u32 %v3563, 7
    %v3565 = vsub.s32 0, %v3564
    %v3566 = vrot.slane %v3561, %v3565
    %3568 = vmatprep.subr.mxu0 0.0
    %3569 = vmatpush1.msra.mxu0 %v3559
    %3570 = vmatprep.subr.mxu0 0.0
    %3571 = vmatpush1.msra.mxu0 %v3558
    %3572 = vmatprep.subr.mxu0 0.0
    %3573 = vmatpush1.msra.mxu0 %v3557
    %3574 = vmatprep.subr.mxu0 0.0
    %3575 = vmatpush1.msra.mxu0 %v3556
    %3576 = vmatprep.subr.mxu0 0.0
    %3577 = vmatpush1.msra.mxu0 %v3555
    %3578 = vmatprep.subr.mxu0 0.0
    %3579 = vmatpush1.msra.mxu0 %v3554
    %3580 = vmatprep.subr.mxu0 0.0
    %3581 = vmatpush1.msra.mxu0 %v3553
    %3582 = vmatprep.subr.mxu0 0.0
    %3583 = vmatpush1.msra.mxu0 %v3552
    %3584 = vmatprep.subr.mxu0 0.0
    %3585 = vmatpush1.msra.mxu0 %v3551
    %3586 = vmatprep.subr.mxu0 0.0
    %3587 = vmatpush1.msra.mxu0 %v3550
    %3588 = vmatprep.subr.mxu0 0.0
    %3589 = vmatpush1.msra.mxu0 %v3549
    %3590 = vmatprep.subr.mxu0 0.0
    %3591 = vmatpush1.msra.mxu0 %v3548
    %3592 = vmatprep.subr.mxu0 0.0
    %3593 = vmatpush1.msra.mxu0 %v3547
    %3594 = vmatprep.subr.mxu0 0.0
    %3595 = vmatpush1.msra.mxu0 %v3546
    %3596 = vmatprep.subr.mxu0 0.0
    %3597 = vmatpush1.msra.mxu0 %v3545
    %3598 = vmatprep.subr.mxu0 0.0
    %3599 = vmatpush1.msra.mxu0 %v3544
    %3600 = vmatprep.subr.mxu0 0.0
    %3601 = vmatpush2.msra.mxu0 0.0
    %3602 = vmatprep.subr.mxu0 0.0
    %3603 = vmatpush2.msra.mxu0 0.0
    %3604 = vmatprep.subr.mxu0 0.0
    %3605 = vmatpush2.msra.mxu0 0.0
    %3606 = vmatprep.subr.mxu0 0.0
    %3607 = vmatpush2.msra.mxu0 0.0
    %3608 = vmatprep.subr.mxu0 0.0
    %3609 = vmatpush2.msra.mxu0 0.0
    %3610 = vmatprep.subr.mxu0 0.0
    %3611 = vmatpush2.msra.mxu0 0.0
    %3612 = vmatprep.subr.mxu0 0.0
    %3613 = vmatpush2.msra.mxu0 0.0
    %3614 = vmatprep.subr.mxu0 0.0
    %3615 = vmatpush2.msra.mxu0 0.0
    %3616 = vmatprep.subr.mxu0 0.0
    %3617 = vmatpush2.msra.mxu0 0.0
    %3618 = vmatprep.subr.mxu0 0.0
    %3619 = vmatpush2.msra.mxu0 0.0
    %3620 = vmatprep.subr.mxu0 0.0
    %3621 = vmatpush2.msra.mxu0 0.0
    %3622 = vmatprep.subr.mxu0 0.0
    %3623 = vmatpush2.msra.mxu0 0.0
    %3624 = vmatprep.subr.mxu0 0.0
    %3625 = vmatpush2.msra.mxu0 0.0
    %3626 = vmatprep.subr.mxu0 0.0
    %3627 = vmatpush2.msra.mxu0 0.0
    %3628 = vmatprep.subr.mxu0 0.0
    %3629 = vmatpush2.msra.mxu0 0.0
    %3630 = vmatprep.subr.mxu0 0.0
    %3631 = vmatpush2.msra.mxu0 0.0
    %3632 = vmatprep.mubr.f32.mxu0 0.0
    %3633 = vmatmul.mubr.f32.gmra.mxu0 %v3535
    %v3634 = vpop.f32.mrf.mxu0
    %v3635 = vadd.f32 %v3566, %v3634
    %v3636 = vpop.f32.mrf.mxu0
    %3637 = vmatprep.mubr.f32.mxu0 0.0
    %3638 = vmatmul.mubr.f32.gmra.mxu0 %v3536
    %v3639 = vpop.f32.mrf.mxu0
    %v3640 = vadd.f32 %v3566, %v3639
    %v3641 = vpop.f32.mrf.mxu0
    %3642 = vmatprep.mubr.f32.mxu0 0.0
    %3643 = vmatmul.mubr.f32.gmra.mxu0 %v3537
    %v3644 = vpop.f32.mrf.mxu0
    %v3645 = vadd.f32 %v3566, %v3644
    %v3646 = vpop.f32.mrf.mxu0
    %3647 = vmatprep.mubr.f32.mxu0 0.0
    %3648 = vmatmul.mubr.f32.gmra.mxu0 %v3538
    %v3649 = vpop.f32.mrf.mxu0
    %v3650 = vadd.f32 %v3566, %v3649
    %v3651 = vpop.f32.mrf.mxu0
    %3652 = vmatprep.mubr.f32.mxu0 0.0
    %3653 = vmatmul.mubr.f32.gmra.mxu0 %v3539
    %v3654 = vpop.f32.mrf.mxu0
    %v3655 = vadd.f32 %v3566, %v3654
    %v3656 = vpop.f32.mrf.mxu0
    %3657 = vmatprep.mubr.f32.mxu0 0.0
    %3658 = vmatmul.mubr.f32.gmra.mxu0 %v3540
    %v3659 = vpop.f32.mrf.mxu0
    %v3660 = vadd.f32 %v3566, %v3659
    %v3661 = vpop.f32.mrf.mxu0
    %3662 = vmatprep.mubr.f32.mxu0 0.0
    %3663 = vmatmul.mubr.f32.gmra.mxu0 %v3541
    %v3664 = vpop.f32.mrf.mxu0
    %v3665 = vadd.f32 %v3566, %v3664
    %v3666 = vpop.f32.mrf.mxu0
    %3667 = vmatprep.mubr.f32.mxu0 0.0
    %3668 = vmatmul.mubr.f32.gmra.mxu0 %v3542
    %v3669 = vpop.f32.mrf.mxu0
    %v3670 = vadd.f32 %v3566, %v3669
    %v3671 = vpop.f32.mrf.mxu0
    %3672 = vdwg.mxu0
    %v3673 = vadd.f32 %v3385, %v3635
    %v3674 = vadd.f32 %v3386, %v3640
    %v3675 = vadd.f32 %v3387, %v3645
    %v3676 = vadd.f32 %v3388, %v3650
    %v3677 = vadd.f32 %v3389, %v3655
    %v3678 = vadd.f32 %v3390, %v3660
    %v3679 = vadd.f32 %v3391, %v3665
    %v3680 = vadd.f32 %v3392, %v3670
    %s3681 = scalar_lea.vmem %s45, 1
    %v3682 = vld [vmem:[%s3681] sm:$0x1]
    %s3683 = scalar_lea.vmem %s47, 1
    %v3684 = vld [vmem:[%s3683] sm:$0x1]
    %v3685 = vsel %vm476, %v3673, 0.0
    %3686 = vadd.xlane.f32.xlu0 %v3685
    %v3687 = vpop.xlane.xlu0 %3686
    %v3688 = vsel %vm476, %v3674, 0.0
    %3689 = vadd.xlane.f32.xlu0 %v3688
    %v3690 = vpop.xlane.xlu0 %3689
    %v3691 = vsel %vm476, %v3675, 0.0
    %3692 = vadd.xlane.f32.xlu0 %v3691
    %v3693 = vpop.xlane.xlu0 %3692
    %v3694 = vsel %vm476, %v3676, 0.0
    %3695 = vadd.xlane.f32.xlu0 %v3694
    %v3696 = vpop.xlane.xlu0 %3695
    %v3697 = vsel %vm476, %v3677, 0.0
    %3698 = vadd.xlane.f32.xlu0 %v3697
    %v3699 = vpop.xlane.xlu0 %3698
    %v3700 = vsel %vm476, %v3678, 0.0
    %3701 = vadd.xlane.f32.xlu0 %v3700
    %v3702 = vpop.xlane.xlu0 %3701
    %v3703 = vsel %vm476, %v3679, 0.0
    %3704 = vadd.xlane.f32.xlu0 %v3703
    %v3705 = vpop.xlane.xlu0 %3704
    %v3706 = vsel %vm476, %v3680, 0.0
    %3707 = vadd.xlane.f32.xlu0 %v3706
    %v3708 = vpop.xlane.xlu0 %3707
    %v3709 = vmul.f32 %v3687, %v1607
    %v3710 = vmul.f32 %v3690, %v1607
    %v3711 = vmul.f32 %v3693, %v1607
    %v3712 = vmul.f32 %v3696, %v1607
    %v3713 = vmul.f32 %v3699, %v1607
    %v3714 = vmul.f32 %v3702, %v1607
    %v3715 = vmul.f32 %v3705, %v1607
    %v3716 = vmul.f32 %v3708, %v1607
    %v3717 = vsub.f32 %v3673, %v3709
    %v3718 = vsub.f32 %v3674, %v3710
    %v3719 = vsub.f32 %v3675, %v3711
    %v3720 = vsub.f32 %v3676, %v3712
    %v3721 = vsub.f32 %v3677, %v3713
    %v3722 = vsub.f32 %v3678, %v3714
    %v3723 = vsub.f32 %v3679, %v3715
    %v3724 = vsub.f32 %v3680, %v3716
    %v3725 = vmul.f32 %v3717, %v3717
    %v3726 = vmul.f32 %v3718, %v3718
    %v3727 = vmul.f32 %v3719, %v3719
    %v3728 = vmul.f32 %v3720, %v3720
    %v3729 = vmul.f32 %v3721, %v3721
    %v3730 = vmul.f32 %v3722, %v3722
    %v3731 = vmul.f32 %v3723, %v3723
    %v3732 = vmul.f32 %v3724, %v3724
    %v3733 = vsel %vm476, %v3725, 0.0
    %3734 = vadd.xlane.f32.xlu0 %v3733
    %v3735 = vpop.xlane.xlu0 %3734
    %v3736 = vsel %vm476, %v3726, 0.0
    %3737 = vadd.xlane.f32.xlu0 %v3736
    %v3738 = vpop.xlane.xlu0 %3737
    %v3739 = vsel %vm476, %v3727, 0.0
    %3740 = vadd.xlane.f32.xlu0 %v3739
    %v3741 = vpop.xlane.xlu0 %3740
    %v3742 = vsel %vm476, %v3728, 0.0
    %3743 = vadd.xlane.f32.xlu0 %v3742
    %v3744 = vpop.xlane.xlu0 %3743
    %v3745 = vsel %vm476, %v3729, 0.0
    %3746 = vadd.xlane.f32.xlu0 %v3745
    %v3747 = vpop.xlane.xlu0 %3746
    %v3748 = vsel %vm476, %v3730, 0.0
    %3749 = vadd.xlane.f32.xlu0 %v3748
    %v3750 = vpop.xlane.xlu0 %3749
    %v3751 = vsel %vm476, %v3731, 0.0
    %3752 = vadd.xlane.f32.xlu0 %v3751
    %v3753 = vpop.xlane.xlu0 %3752
    %v3754 = vsel %vm476, %v3732, 0.0
    %3755 = vadd.xlane.f32.xlu0 %v3754
    %v3756 = vpop.xlane.xlu0 %3755
    %v3757 = vmul.f32 %v3735, %v1607
    %v3758 = vmul.f32 %v3738, %v1607
    %v3759 = vmul.f32 %v3741, %v1607
    %v3760 = vmul.f32 %v3744, %v1607
    %v3761 = vmul.f32 %v3747, %v1607
    %v3762 = vmul.f32 %v3750, %v1607
    %v3763 = vmul.f32 %v3753, %v1607
    %v3764 = vmul.f32 %v3756, %v1607
    %v3765 = vadd.f32 %v3757, 1e-05
    %v3766 = vadd.f32 %v3758, 1e-05
    %v3767 = vadd.f32 %v3759, 1e-05
    %v3768 = vadd.f32 %v3760, 1e-05
    %v3769 = vadd.f32 %v3761, 1e-05
    %v3770 = vadd.f32 %v3762, 1e-05
    %v3771 = vadd.f32 %v3763, 1e-05
    %v3772 = vadd.f32 %v3764, 1e-05
    %v3773 = vrsqrt.pop %v3765
    %v3774 = vrsqrt.pop %v3766
    %v3775 = vrsqrt.pop %v3767
    %v3776 = vrsqrt.pop %v3768
    %v3777 = vrsqrt.pop %v3769
    %v3778 = vrsqrt.pop %v3770
    %v3779 = vrsqrt.pop %v3771
    %v3780 = vrsqrt.pop %v3772
    %v3781 = vmul.f32 %v3717, %v3773
    %v3782 = vmul.f32 %v3718, %v3774
    %v3783 = vmul.f32 %v3719, %v3775
    %v3784 = vmul.f32 %v3720, %v3776
    %v3785 = vmul.f32 %v3721, %v3777
    %v3786 = vmul.f32 %v3722, %v3778
    %v3787 = vmul.f32 %v3723, %v3779
    %v3788 = vmul.f32 %v3724, %v3780
    %v3790 = vlaneseq
    %v3791 = vshrl.u32 %v3790, 7
    %v3792 = vsub.s32 0, %v3791
    %v3793 = vrot.slane %v3682, %v3792
    %v3795 = vmul.f32 %v3781, %v3793
    %v3796 = vmul.f32 %v3782, %v3793
    %v3797 = vmul.f32 %v3783, %v3793
    %v3798 = vmul.f32 %v3784, %v3793
    %v3799 = vmul.f32 %v3785, %v3793
    %v3800 = vmul.f32 %v3786, %v3793
    %v3801 = vmul.f32 %v3787, %v3793
    %v3802 = vmul.f32 %v3788, %v3793
    %v3804 = vlaneseq
    %v3805 = vshrl.u32 %v3804, 7
    %v3806 = vsub.s32 0, %v3805
    %v3807 = vrot.slane %v3684, %v3806
    %v3809 = vadd.f32 %v3795, %v3807
    %v3810 = vadd.f32 %v3796, %v3807
    %v3811 = vadd.f32 %v3797, %v3807
    %v3812 = vadd.f32 %v3798, %v3807
    %v3813 = vadd.f32 %v3799, %v3807
    %v3814 = vadd.f32 %v3800, %v3807
    %v3815 = vadd.f32 %v3801, %v3807
    %v3816 = vadd.f32 %v3802, %v3807
    %v3817 = vld [vmem:[%s49] sm:$0x1]
    %v3818 = vld [vmem:[%s51] sm:$0x1]
    %v3819 = vsel %vm476, %v3809, 0.0
    %3820 = vadd.xlane.f32.xlu0 %v3819
    %v3821 = vpop.xlane.xlu0 %3820
    %v3822 = vsel %vm476, %v3810, 0.0
    %3823 = vadd.xlane.f32.xlu0 %v3822
    %v3824 = vpop.xlane.xlu0 %3823
    %v3825 = vsel %vm476, %v3811, 0.0
    %3826 = vadd.xlane.f32.xlu0 %v3825
    %v3827 = vpop.xlane.xlu0 %3826
    %v3828 = vsel %vm476, %v3812, 0.0
    %3829 = vadd.xlane.f32.xlu0 %v3828
    %v3830 = vpop.xlane.xlu0 %3829
    %v3831 = vsel %vm476, %v3813, 0.0
    %3832 = vadd.xlane.f32.xlu0 %v3831
    %v3833 = vpop.xlane.xlu0 %3832
    %v3834 = vsel %vm476, %v3814, 0.0
    %3835 = vadd.xlane.f32.xlu0 %v3834
    %v3836 = vpop.xlane.xlu0 %3835
    %v3837 = vsel %vm476, %v3815, 0.0
    %3838 = vadd.xlane.f32.xlu0 %v3837
    %v3839 = vpop.xlane.xlu0 %3838
    %v3840 = vsel %vm476, %v3816, 0.0
    %3841 = vadd.xlane.f32.xlu0 %v3840
    %v3842 = vpop.xlane.xlu0 %3841
    %v3843 = vmul.f32 %v3821, %v1607
    %v3844 = vmul.f32 %v3824, %v1607
    %v3845 = vmul.f32 %v3827, %v1607
    %v3846 = vmul.f32 %v3830, %v1607
    %v3847 = vmul.f32 %v3833, %v1607
    %v3848 = vmul.f32 %v3836, %v1607
    %v3849 = vmul.f32 %v3839, %v1607
    %v3850 = vmul.f32 %v3842, %v1607
    %v3851 = vsub.f32 %v3809, %v3843
    %v3852 = vsub.f32 %v3810, %v3844
    %v3853 = vsub.f32 %v3811, %v3845
    %v3854 = vsub.f32 %v3812, %v3846
    %v3855 = vsub.f32 %v3813, %v3847
    %v3856 = vsub.f32 %v3814, %v3848
    %v3857 = vsub.f32 %v3815, %v3849
    %v3858 = vsub.f32 %v3816, %v3850
    %v3859 = vmul.f32 %v3851, %v3851
    %v3860 = vmul.f32 %v3852, %v3852
    %v3861 = vmul.f32 %v3853, %v3853
    %v3862 = vmul.f32 %v3854, %v3854
    %v3863 = vmul.f32 %v3855, %v3855
    %v3864 = vmul.f32 %v3856, %v3856
    %v3865 = vmul.f32 %v3857, %v3857
    %v3866 = vmul.f32 %v3858, %v3858
    %v3867 = vsel %vm476, %v3859, 0.0
    %3868 = vadd.xlane.f32.xlu0 %v3867
    %v3869 = vpop.xlane.xlu0 %3868
    %v3870 = vsel %vm476, %v3860, 0.0
    %3871 = vadd.xlane.f32.xlu0 %v3870
    %v3872 = vpop.xlane.xlu0 %3871
    %v3873 = vsel %vm476, %v3861, 0.0
    %3874 = vadd.xlane.f32.xlu0 %v3873
    %v3875 = vpop.xlane.xlu0 %3874
    %v3876 = vsel %vm476, %v3862, 0.0
    %3877 = vadd.xlane.f32.xlu0 %v3876
    %v3878 = vpop.xlane.xlu0 %3877
    %v3879 = vsel %vm476, %v3863, 0.0
    %3880 = vadd.xlane.f32.xlu0 %v3879
    %v3881 = vpop.xlane.xlu0 %3880
    %v3882 = vsel %vm476, %v3864, 0.0
    %3883 = vadd.xlane.f32.xlu0 %v3882
    %v3884 = vpop.xlane.xlu0 %3883
    %v3885 = vsel %vm476, %v3865, 0.0
    %3886 = vadd.xlane.f32.xlu0 %v3885
    %v3887 = vpop.xlane.xlu0 %3886
    %v3888 = vsel %vm476, %v3866, 0.0
    %3889 = vadd.xlane.f32.xlu0 %v3888
    %v3890 = vpop.xlane.xlu0 %3889
    %v3891 = vmul.f32 %v3869, %v1607
    %v3892 = vmul.f32 %v3872, %v1607
    %v3893 = vmul.f32 %v3875, %v1607
    %v3894 = vmul.f32 %v3878, %v1607
    %v3895 = vmul.f32 %v3881, %v1607
    %v3896 = vmul.f32 %v3884, %v1607
    %v3897 = vmul.f32 %v3887, %v1607
    %v3898 = vmul.f32 %v3890, %v1607
    %v3899 = vadd.f32 %v3891, 1e-05
    %v3900 = vadd.f32 %v3892, 1e-05
    %v3901 = vadd.f32 %v3893, 1e-05
    %v3902 = vadd.f32 %v3894, 1e-05
    %v3903 = vadd.f32 %v3895, 1e-05
    %v3904 = vadd.f32 %v3896, 1e-05
    %v3905 = vadd.f32 %v3897, 1e-05
    %v3906 = vadd.f32 %v3898, 1e-05
    %v3907 = vrsqrt.pop %v3899
    %v3908 = vrsqrt.pop %v3900
    %v3909 = vrsqrt.pop %v3901
    %v3910 = vrsqrt.pop %v3902
    %v3911 = vrsqrt.pop %v3903
    %v3912 = vrsqrt.pop %v3904
    %v3913 = vrsqrt.pop %v3905
    %v3914 = vrsqrt.pop %v3906
    %v3915 = vmul.f32 %v3851, %v3907
    %v3916 = vmul.f32 %v3852, %v3908
    %v3917 = vmul.f32 %v3853, %v3909
    %v3918 = vmul.f32 %v3854, %v3910
    %v3919 = vmul.f32 %v3855, %v3911
    %v3920 = vmul.f32 %v3856, %v3912
    %v3921 = vmul.f32 %v3857, %v3913
    %v3922 = vmul.f32 %v3858, %v3914
    %v3924 = vlaneseq
    %v3925 = vshrl.u32 %v3924, 7
    %v3926 = vsub.s32 0, %v3925
    %v3927 = vrot.slane %v3817, %v3926
    %v3929 = vmul.f32 %v3915, %v3927
    %v3930 = vmul.f32 %v3916, %v3927
    %v3931 = vmul.f32 %v3917, %v3927
    %v3932 = vmul.f32 %v3918, %v3927
    %v3933 = vmul.f32 %v3919, %v3927
    %v3934 = vmul.f32 %v3920, %v3927
    %v3935 = vmul.f32 %v3921, %v3927
    %v3936 = vmul.f32 %v3922, %v3927
    %v3938 = vlaneseq
    %v3939 = vshrl.u32 %v3938, 7
    %v3940 = vsub.s32 0, %v3939
    %v3941 = vrot.slane %v3818, %v3940
    %v3943 = vadd.f32 %v3929, %v3941
    %v3944 = vadd.f32 %v3930, %v3941
    %v3945 = vadd.f32 %v3931, %v3941
    %v3946 = vadd.f32 %v3932, %v3941
    %v3947 = vadd.f32 %v3933, %v3941
    %v3948 = vadd.f32 %v3934, %v3941
    %v3949 = vadd.f32 %v3935, %v3941
    %v3950 = vadd.f32 %v3936, %v3941
    %3951 = vst.msk [vmem:[#allocation11] sm:$0xff] %vm476, %v3943
    %3952 = vst.msk [vmem:[#allocation11 + $0x8] sm:$0xff] %vm476, %v3944
    %3953 = vst.msk [vmem:[#allocation11 + $0x10] sm:$0xff] %vm476, %v3945
    %3954 = vst.msk [vmem:[#allocation11 + $0x18] sm:$0xff] %vm476, %v3946
    %3955 = vst.msk [vmem:[#allocation11 + $0x20] sm:$0xff] %vm476, %v3947
    %3956 = vst.msk [vmem:[#allocation11 + $0x28] sm:$0xff] %vm476, %v3948
    %3957 = vst.msk [vmem:[#allocation11 + $0x30] sm:$0xff] %vm476, %v3949
    %3958 = vst.msk [vmem:[#allocation11 + $0x38] sm:$0xff] %vm476, %v3950
    %v3959 = vld [vmem:[#allocation2] sm:$0xff]
    %v3960 = vld [vmem:[#allocation2 + $0x8] sm:$0xff]
    %v3961 = vld [vmem:[#allocation2 + $0x10] sm:$0xff]
    %v3962 = vld [vmem:[#allocation2 + $0x18] sm:$0xff]
    %vm3963 = vcmask 523264
    %v3965 = vsel %vm3963, %v3959, 0
    %v3968 = vsel %vm3963, %v3960, 0
    %v3971 = vsel %vm3963, %v3961, 0
    %v3974 = vsel %vm3963, %v3962, 0
    %3976 = vmatprep.subr.mxu0 0.0
    %3977 = vmatpush1.msra.mxu0 0.0
    %3978 = vmatprep.subr.mxu0 0.0
    %3979 = vmatpush1.msra.mxu0 0.0
    %3980 = vmatprep.subr.mxu0 0.0
    %3981 = vmatpush1.msra.mxu0 0.0
    %3982 = vmatprep.subr.mxu0 0.0
    %3983 = vmatpush1.msra.mxu0 0.0
    %3984 = vmatprep.subr.mxu0 0.0
    %3985 = vmatpush1.msra.mxu0 0.0
    %3986 = vmatprep.subr.mxu0 0.0
    %3987 = vmatpush1.msra.mxu0 0.0
    %3988 = vmatprep.subr.mxu0 0.0
    %3989 = vmatpush1.msra.mxu0 0.0
    %3990 = vmatprep.subr.mxu0 0.0
    %3991 = vmatpush1.msra.mxu0 0.0
    %3992 = vmatprep.subr.mxu0 0.0
    %3993 = vmatpush1.msra.mxu0 %v3950
    %3994 = vmatprep.subr.mxu0 0.0
    %3995 = vmatpush1.msra.mxu0 %v3949
    %3996 = vmatprep.subr.mxu0 0.0
    %3997 = vmatpush1.msra.mxu0 %v3948
    %3998 = vmatprep.subr.mxu0 0.0
    %3999 = vmatpush1.msra.mxu0 %v3947
    %4000 = vmatprep.subr.mxu0 0.0
    %4001 = vmatpush1.msra.mxu0 %v3946
    %4002 = vmatprep.subr.mxu0 0.0
    %4003 = vmatpush1.msra.mxu0 %v3945
    %4004 = vmatprep.subr.mxu0 0.0
    %4005 = vmatpush1.msra.mxu0 %v3944
    %4006 = vmatprep.subr.mxu0 0.0
    %4007 = vmatpush1.msra.mxu0 %v3943
    %4008 = vmatprep.subr.mxu0 0.0
    %4009 = vmatpush2.msra.mxu0 0.0
    %4010 = vmatprep.subr.mxu0 0.0
    %4011 = vmatpush2.msra.mxu0 0.0
    %4012 = vmatprep.subr.mxu0 0.0
    %4013 = vmatpush2.msra.mxu0 0.0
    %4014 = vmatprep.subr.mxu0 0.0
    %4015 = vmatpush2.msra.mxu0 0.0
    %4016 = vmatprep.subr.mxu0 0.0
    %4017 = vmatpush2.msra.mxu0 0.0
    %4018 = vmatprep.subr.mxu0 0.0
    %4019 = vmatpush2.msra.mxu0 0.0
    %4020 = vmatprep.subr.mxu0 0.0
    %4021 = vmatpush2.msra.mxu0 0.0
    %4022 = vmatprep.subr.mxu0 0.0
    %4023 = vmatpush2.msra.mxu0 0.0
    %4024 = vmatprep.subr.mxu0 0.0
    %4025 = vmatpush2.msra.mxu0 0.0
    %4026 = vmatprep.subr.mxu0 0.0
    %4027 = vmatpush2.msra.mxu0 0.0
    %4028 = vmatprep.subr.mxu0 0.0
    %4029 = vmatpush2.msra.mxu0 0.0
    %4030 = vmatprep.subr.mxu0 0.0
    %4031 = vmatpush2.msra.mxu0 0.0
    %4032 = vmatprep.subr.mxu0 0.0
    %4033 = vmatpush2.msra.mxu0 0.0
    %4034 = vmatprep.subr.mxu0 0.0
    %4035 = vmatpush2.msra.mxu0 0.0
    %4036 = vmatprep.subr.mxu0 0.0
    %4037 = vmatpush2.msra.mxu0 0.0
    %4038 = vmatprep.subr.mxu0 0.0
    %4039 = vmatpush2.msra.mxu0 0.0
    %4040 = vmatprep.mubr.f32.mxu0 0.0
    %4041 = vmatmul.mubr.f32.gmra.mxu0 %v3965
    %v4042 = vpop.f32.mrf.mxu0
    %v4043 = vadd.f32 0.0, %v4042
    %v4044 = vpop.f32.mrf.mxu0
    %4045 = vmatprep.mubr.f32.mxu0 0.0
    %4046 = vmatmul.mubr.f32.gmra.mxu0 %v3968
    %v4047 = vpop.f32.mrf.mxu0
    %v4048 = vadd.f32 0.0, %v4047
    %v4049 = vpop.f32.mrf.mxu0
    %4050 = vmatprep.mubr.f32.mxu0 0.0
    %4051 = vmatmul.mubr.f32.gmra.mxu0 %v3971
    %v4052 = vpop.f32.mrf.mxu0
    %v4053 = vadd.f32 0.0, %v4052
    %v4054 = vpop.f32.mrf.mxu0
    %4055 = vmatprep.mubr.f32.mxu0 0.0
    %4056 = vmatmul.mubr.f32.gmra.mxu0 %v3974
    %v4057 = vpop.f32.mrf.mxu0
    %v4058 = vadd.f32 0.0, %v4057
    %v4059 = vpop.f32.mrf.mxu0
    %4060 = vdwg.mxu0
    %v4061 = vld [vmem:[%s53] sm:$0xff]
    %v4062 = vld [vmem:[%s53 + $0x8] sm:$0xff]
    %v4063 = vld [vmem:[%s53 + $0x10] sm:$0xff]
    %v4064 = vld [vmem:[%s53 + $0x18] sm:$0xff]
    %v4065 = vld [vmem:[%s55] sm:$0x1]
    %v4067 = vlaneseq
    %v4068 = vshrl.u32 %v4067, 7
    %v4069 = vsub.s32 0, %v4068
    %v4070 = vrot.slane %v4065, %v4069
    %v4073 = vsel %vm476, %v4043, 0
    %v4076 = vsel %vm476, %v4048, 0
    %v4079 = vsel %vm476, %v4053, 0
    %v4082 = vsel %vm476, %v4058, 0
    %4084 = vmatprep.subr.mxu0 0.0
    %4085 = vmatpush1.msra.mxu0 0.0
    %4086 = vmatprep.subr.mxu0 0.0
    %4087 = vmatpush1.msra.mxu0 0.0
    %4088 = vmatprep.subr.mxu0 0.0
    %4089 = vmatpush1.msra.mxu0 0.0
    %4090 = vmatprep.subr.mxu0 0.0
    %4091 = vmatpush1.msra.mxu0 0.0
    %4092 = vmatprep.subr.mxu0 0.0
    %4093 = vmatpush1.msra.mxu0 0.0
    %4094 = vmatprep.subr.mxu0 0.0
    %4095 = vmatpush1.msra.mxu0 0.0
    %4096 = vmatprep.subr.mxu0 0.0
    %4097 = vmatpush1.msra.mxu0 0.0
    %4098 = vmatprep.subr.mxu0 0.0
    %4099 = vmatpush1.msra.mxu0 0.0
    %4100 = vmatprep.subr.mxu0 0.0
    %4101 = vmatpush1.msra.mxu0 0.0
    %4102 = vmatprep.subr.mxu0 0.0
    %4103 = vmatpush1.msra.mxu0 0.0
    %4104 = vmatprep.subr.mxu0 0.0
    %4105 = vmatpush1.msra.mxu0 0.0
    %4106 = vmatprep.subr.mxu0 0.0
    %4107 = vmatpush1.msra.mxu0 0.0
    %4108 = vmatprep.subr.mxu0 0.0
    %4109 = vmatpush1.msra.mxu0 %v4064
    %4110 = vmatprep.subr.mxu0 0.0
    %4111 = vmatpush1.msra.mxu0 %v4063
    %4112 = vmatprep.subr.mxu0 0.0
    %4113 = vmatpush1.msra.mxu0 %v4062
    %4114 = vmatprep.subr.mxu0 0.0
    %4115 = vmatpush1.msra.mxu0 %v4061
    %4116 = vmatprep.subr.mxu0 0.0
    %4117 = vmatpush2.msra.mxu0 0.0
    %4118 = vmatprep.subr.mxu0 0.0
    %4119 = vmatpush2.msra.mxu0 0.0
    %4120 = vmatprep.subr.mxu0 0.0
    %4121 = vmatpush2.msra.mxu0 0.0
    %4122 = vmatprep.subr.mxu0 0.0
    %4123 = vmatpush2.msra.mxu0 0.0
    %4124 = vmatprep.subr.mxu0 0.0
    %4125 = vmatpush2.msra.mxu0 0.0
    %4126 = vmatprep.subr.mxu0 0.0
    %4127 = vmatpush2.msra.mxu0 0.0
    %4128 = vmatprep.subr.mxu0 0.0
    %4129 = vmatpush2.msra.mxu0 0.0
    %4130 = vmatprep.subr.mxu0 0.0
    %4131 = vmatpush2.msra.mxu0 0.0
    %4132 = vmatprep.subr.mxu0 0.0
    %4133 = vmatpush2.msra.mxu0 0.0
    %4134 = vmatprep.subr.mxu0 0.0
    %4135 = vmatpush2.msra.mxu0 0.0
    %4136 = vmatprep.subr.mxu0 0.0
    %4137 = vmatpush2.msra.mxu0 0.0
    %4138 = vmatprep.subr.mxu0 0.0
    %4139 = vmatpush2.msra.mxu0 0.0
    %4140 = vmatprep.subr.mxu0 0.0
    %4141 = vmatpush2.msra.mxu0 0.0
    %4142 = vmatprep.subr.mxu0 0.0
    %4143 = vmatpush2.msra.mxu0 0.0
    %4144 = vmatprep.subr.mxu0 0.0
    %4145 = vmatpush2.msra.mxu0 0.0
    %4146 = vmatprep.subr.mxu0 0.0
    %4147 = vmatpush2.msra.mxu0 0.0
    %4148 = vmatprep.mubr.f32.mxu0 0.0
    %4149 = vmatmul.mubr.f32.gmra.mxu0 %v4073
    %v4150 = vpop.f32.mrf.mxu0
    %v4151 = vadd.f32 %v4070, %v4150
    %v4152 = vpop.f32.mrf.mxu0
    %4153 = vmatprep.mubr.f32.mxu0 0.0
    %4154 = vmatmul.mubr.f32.gmra.mxu0 %v4076
    %v4155 = vpop.f32.mrf.mxu0
    %v4156 = vadd.f32 %v4070, %v4155
    %v4157 = vpop.f32.mrf.mxu0
    %4158 = vmatprep.mubr.f32.mxu0 0.0
    %4159 = vmatmul.mubr.f32.gmra.mxu0 %v4079
    %v4160 = vpop.f32.mrf.mxu0
    %v4161 = vadd.f32 %v4070, %v4160
    %v4162 = vpop.f32.mrf.mxu0
    %4163 = vmatprep.mubr.f32.mxu0 0.0
    %4164 = vmatmul.mubr.f32.gmra.mxu0 %v4082
    %v4165 = vpop.f32.mrf.mxu0
    %v4166 = vadd.f32 %v4070, %v4165
    %v4167 = vpop.f32.mrf.mxu0
    %4168 = vdwg.mxu0
    %v4169 = vmax.f32 %v4151, 0.0
    %v4170 = vmax.f32 %v4156, 0.0
    %v4171 = vmax.f32 %v4161, 0.0
    %v4172 = vmax.f32 %v4166, 0.0
    %v4173 = vld [vmem:[#allocation10] sm:$0xff]
    %v4174 = vld [vmem:[#allocation10 + $0x8] sm:$0xff]
    %v4175 = vld [vmem:[%s59] sm:$0x1]
    %v4177 = vlaneseq
    %v4178 = vshrl.u32 %v4177, 7
    %v4179 = vsub.s32 0, %v4178
    %v4180 = vrot.slane %v4175, %v4179
    %v4183 = vsel %vm215, %v4169, 0
    %v4186 = vsel %vm215, %v4170, 0
    %v4189 = vsel %vm215, %v4171, 0
    %v4192 = vsel %vm215, %v4172, 0
    %4194 = vmatprep.subr.mxu0 0.0
    %4195 = vmatpush1.msra.mxu0 0.0
    %4196 = vmatprep.subr.mxu0 0.0
    %4197 = vmatpush1.msra.mxu0 0.0
    %4198 = vmatprep.subr.mxu0 0.0
    %4199 = vmatpush1.msra.mxu0 0.0
    %4200 = vmatprep.subr.mxu0 0.0
    %4201 = vmatpush1.msra.mxu0 0.0
    %4202 = vmatprep.subr.mxu0 0.0
    %4203 = vmatpush1.msra.mxu0 0.0
    %4204 = vmatprep.subr.mxu0 0.0
    %4205 = vmatpush1.msra.mxu0 0.0
    %4206 = vmatprep.subr.mxu0 0.0
    %4207 = vmatpush1.msra.mxu0 0.0
    %4208 = vmatprep.subr.mxu0 0.0
    %4209 = vmatpush1.msra.mxu0 0.0
    %4210 = vmatprep.subr.mxu0 0.0
    %4211 = vmatpush1.msra.mxu0 0.0
    %4212 = vmatprep.subr.mxu0 0.0
    %4213 = vmatpush1.msra.mxu0 0.0
    %4214 = vmatprep.subr.mxu0 0.0
    %4215 = vmatpush1.msra.mxu0 0.0
    %4216 = vmatprep.subr.mxu0 0.0
    %4217 = vmatpush1.msra.mxu0 0.0
    %4218 = vmatprep.subr.mxu0 0.0
    %4219 = vmatpush1.msra.mxu0 0.0
    %4220 = vmatprep.subr.mxu0 0.0
    %4221 = vmatpush1.msra.mxu0 0.0
    %4222 = vmatprep.subr.mxu0 0.0
    %4223 = vmatpush1.msra.mxu0 %v4174
    %4224 = vmatprep.subr.mxu0 0.0
    %4225 = vmatpush1.msra.mxu0 %v4173
    %4226 = vmatprep.subr.mxu0 0.0
    %4227 = vmatpush2.msra.mxu0 0.0
    %4228 = vmatprep.subr.mxu0 0.0
    %4229 = vmatpush2.msra.mxu0 0.0
    %4230 = vmatprep.subr.mxu0 0.0
    %4231 = vmatpush2.msra.mxu0 0.0
    %4232 = vmatprep.subr.mxu0 0.0
    %4233 = vmatpush2.msra.mxu0 0.0
    %4234 = vmatprep.subr.mxu0 0.0
    %4235 = vmatpush2.msra.mxu0 0.0
    %4236 = vmatprep.subr.mxu0 0.0
    %4237 = vmatpush2.msra.mxu0 0.0
    %4238 = vmatprep.subr.mxu0 0.0
    %4239 = vmatpush2.msra.mxu0 0.0
    %4240 = vmatprep.subr.mxu0 0.0
    %4241 = vmatpush2.msra.mxu0 0.0
    %4242 = vmatprep.subr.mxu0 0.0
    %4243 = vmatpush2.msra.mxu0 0.0
    %4244 = vmatprep.subr.mxu0 0.0
    %4245 = vmatpush2.msra.mxu0 0.0
    %4246 = vmatprep.subr.mxu0 0.0
    %4247 = vmatpush2.msra.mxu0 0.0
    %4248 = vmatprep.subr.mxu0 0.0
    %4249 = vmatpush2.msra.mxu0 0.0
    %4250 = vmatprep.subr.mxu0 0.0
    %4251 = vmatpush2.msra.mxu0 0.0
    %4252 = vmatprep.subr.mxu0 0.0
    %4253 = vmatpush2.msra.mxu0 0.0
    %4254 = vmatprep.subr.mxu0 0.0
    %4255 = vmatpush2.msra.mxu0 0.0
    %4256 = vmatprep.subr.mxu0 0.0
    %4257 = vmatpush2.msra.mxu0 0.0
    %4258 = vmatprep.mubr.f32.mxu0 0.0
    %4259 = vmatmul.mubr.f32.gmra.mxu0 %v4183
    %v4260 = vpop.f32.mrf.mxu0
    %v4261 = vadd.f32 %v4180, %v4260
    %v4262 = vpop.f32.mrf.mxu0
    %4263 = vmatprep.mubr.f32.mxu0 0.0
    %4264 = vmatmul.mubr.f32.gmra.mxu0 %v4186
    %v4265 = vpop.f32.mrf.mxu0
    %v4266 = vadd.f32 %v4180, %v4265
    %v4267 = vpop.f32.mrf.mxu0
    %4268 = vmatprep.mubr.f32.mxu0 0.0
    %4269 = vmatmul.mubr.f32.gmra.mxu0 %v4189
    %v4270 = vpop.f32.mrf.mxu0
    %v4271 = vadd.f32 %v4180, %v4270
    %v4272 = vpop.f32.mrf.mxu0
    %4273 = vmatprep.mubr.f32.mxu0 0.0
    %4274 = vmatmul.mubr.f32.gmra.mxu0 %v4192
    %v4275 = vpop.f32.mrf.mxu0
    %v4276 = vadd.f32 %v4180, %v4275
    %v4277 = vpop.f32.mrf.mxu0
    %4278 = vdwg.mxu0
    %4279 = vst.msk [vmem:[%s63] sm:$0xff] %vm215, %v4261
    %4280 = vst.msk [vmem:[%s63 + $0x8] sm:$0xff] %vm215, %v4266
    %4281 = vst.msk [vmem:[%s63 + $0x10] sm:$0xff] %vm215, %v4271
    %4282 = vst.msk [vmem:[%s63 + $0x18] sm:$0xff] %vm215, %v4276
    // Predicated region
    $region142: #{_lambda_.1} parent=1 // pred_check
      _
    $region143: #{_lambda_.1} parent=1 // pred_check_branch
      %4284 = sbr.rel (0) target = $region145
    $region144: #{_lambda_.1} parent=1 // pred_region
      %s4286 = ssub.s32 1024, 1024
      %4287 = vsyncadd [#allocation4], %s4286
      %s4288 = sshll.u32 [#allocation11], 4
      %s4289 = int_to_ptr.vmem [resolvable:$true] %s4288
      %4294 = dma.vmem_to_hbm [thread:$0]  %s4289, 1024, %s61, [#allocation4], 128, 128, 8
    $region145: #{_lambda_.1} parent=1 // pred_fallthru
      _
    // Predicated region
    $region146: #{_lambda_.1} parent=1 // pred_check
      _
    $region147: #{_lambda_.1} parent=1 // pred_check_branch
      %4296 = sbr.rel (0) target = $region149
    $region148: #{_lambda_.1} parent=1 // pred_region
      _
    $region149: #{_lambda_.1} parent=1 // pred_fallthru
      _
    // Predicated region
    $region150: #{_lambda_.1} parent=1 // pred_check
      _
    $region151: #{_lambda_.1} parent=1 // pred_check_branch
      %4298 = sbr.rel (0) target = $region153
    $region152: #{_lambda_.1} parent=1 // pred_region
      %4299 = dma.done [#allocation4], 1024
    $region153: #{_lambda_.1} parent=1 // pred_fallthru
      _
    // Predicated region
    $region154: #{_lambda_.1} parent=1 // pred_check
      _
    $region155: #{_lambda_.1} parent=1 // pred_check_branch
      %4301 = sbr.rel (0) target = $region157
    $region156: #{_lambda_.1} parent=1 // pred_region
      _
    $region157: #{_lambda_.1} parent=1 // pred_fallthru
      _
    %4302 = vsyncpa [#allocation3], 1
    %4303 = vsyncpa [#allocation6], 1
    %4304 = vsyncpa [#allocation9], 1
    %4305 = vsyncpa [#allocation4], 1

</llo_original>
